<compile_context>
chip_gen: v7x
topology: tpu7x:2x2x1
jax: 0.10.0
libtpu: 0.0.40
codegen_flags: <defaults>
</compile_context>

<pallas_src>
import functools

import jax
import jax.numpy as jnp
from jax.experimental import pallas as pl
from jax.experimental.pallas import tpu as pltpu

# ----------------------------- model constants ------------------------------
HIDDEN = 32        # hidden_size (H)
DEC_OUT = 4        # dec_out_size  (O_dec)  != HIDDEN -> residual_proj path exercised
POST_OUT = 8       # post_out_size (O_post)
NUM_FILTERS = 4    # conv-bank kernel sizes 1..4
BATCH = 2
SEQ = 8
BN_EPS = 1e-5
BANK_OFF = NUM_FILTERS // 2   # left offset of the unified K=NUM_FILTERS im2col window

H = HIDDEN
F = NUM_FILTERS
RESID_PROJ = DEC_OUT != HIDDEN

# --------------------- packed parameter slab layout -------------------------
# narrow slab: 128 lanes
NARROW_COLS = 4 * H                 # 128
C1_R0 = 0                           # conv1 taps   (3*F*H rows, 2H cols)
C2_R0 = C1_R0 + 3 * F * H           # 384  conv2 taps (3*2H rows, H cols)
HW_R0 = C2_R0 + 3 * 2 * H           # 576  highway    (4 layers * H rows, 3H cols)
PR_R0 = HW_R0 + 4 * H               # 704  final proj (2H rows, P cols)
NARROW_ROWS = PR_R0 + 2 * H         # 768

# wide slab: 256 lanes (8H); also holds every bias / gamma / beta as a row
WIDE_COLS = 8 * H                   # 256
BANK_R0 = 0                         # conv bank (+ folded residual proj) (F*O rows)
BANK_W = F * H + (H if RESID_PROJ else 0)   # 160
WIH_R0 = BANK_R0 + F * DEC_OUT      # 16  [GRU W_ih fwd|bwd (6H) | rnn_residual W (2H)]
WHH_R0 = WIH_R0 + H                 # 48  [GRU W_hh fwd (3H) | W_hh bwd (3H)]
VEC_R0 = WHH_R0 + H                 # 80  bias / gamma / beta rows
(V_BANK_B, V_BN0_G, V_BN0_B, V_C1_B, V_BN1_G, V_BN1_B,
 V_C2_B, V_BN2_G, V_BN2_B) = range(9)
V_HW_B0 = 9                         # 4 rows (one per highway layer)
V_BIH = 13                          # [GRU b_ih fwd|bwd (6H) | rnn_residual b (2H)]
V_BHH = 14                          # [GRU b_hh fwd (3H) | b_hh bwd (3H)]
V_PR_B = 15
WIDE_ROWS = VEC_R0 + 16             # 96

VMEM_SPEC = pl.BlockSpec(memory_space=pltpu.MemorySpace.VMEM)


# ------------------------------ fused kernel --------------------------------

def postnet_kernel(cols_ref, wn_ref, ww_ref, out_ref,
                   bank_scr, pool_scr, c1_scr, xp_scr, go_scr, *, n, t):
    NT = n * t

    def vec(row, c0, c1):
        r = VEC_R0 + row
        return ww_ref[r:r + 1, c0:c1]

    def mm(a, b):
        return jnp.dot(a, b, preferred_element_type=jnp.float32)

    def batchnorm(y, g_row, b_row, width):
        # Training-mode BatchNorm1d: batch statistics, biased variance.
        # Two-pass mean/var kept for numerical parity with the reference.
        mean = jnp.mean(y, axis=0, keepdims=True)
        var = jnp.mean(jnp.square(y - mean), axis=0, keepdims=True)
        return ((y - mean) * jax.lax.rsqrt(var + BN_EPS) * vec(g_row, 0, width)
                + vec(b_row, 0, width))

    # zero the guard rows (time -1 / time T) of the conv-input staging buffers
    pool_scr[0:n, :] = jnp.zeros((n, F * H), jnp.float32)
    pool_scr[n + NT:2 * n + NT, :] = jnp.zeros((n, F * H), jnp.float32)
    c1_scr[0:n, :] = jnp.zeros((n, 2 * H), jnp.float32)
    c1_scr[n + NT:2 * n + NT, :] = jnp.zeros((n, 2 * H), jnp.float32)

    # ---- conv bank: all F filters as ONE matmul over the unified im2col
    #      window; the residual input projection is folded in as extra output
    #      columns.  Rows are time-major with T+1 positions per batch element
    #      (matching the reference; BN0 statistics are taken over all of them).
    y0 = (mm(cols_ref[...], ww_ref[BANK_R0:BANK_R0 + F * DEC_OUT, 0:BANK_W])
          + vec(V_BANK_B, 0, BANK_W))
    bank_scr[...] = jnp.maximum(
        batchnorm(y0[:, 0:F * H], V_BN0_G, V_BN0_B, F * H), 0.0)

    # ---- max_pool1d(kernel=2, stride=1) over time: length T+1 -> T,
    #      staged (with guard rows) as the conv1 input ----
    pool_scr[n:n + NT, :] = jnp.maximum(bank_scr[0:NT, :], bank_scr[n:n + NT, :])

    def conv3(src_scr, r0, cin, cout, bias_row):
        # Conv1d(k=3, pad=1) over time as a sum of three tap matmuls; src_scr
        # holds the input with n zero guard rows at both ends, so each tap LHS
        # is a contiguous row slice and the output is formed as ONE value
        # (no read-modify-write accumulation in VMEM).
        w_prev = wn_ref[r0:r0 + cin, 0:cout]
        w_mid = wn_ref[r0 + cin:r0 + 2 * cin, 0:cout]
        w_next = wn_ref[r0 + 2 * cin:r0 + 3 * cin, 0:cout]
        return (mm(src_scr[0:NT, :], w_prev)
                + mm(src_scr[n:n + NT, :], w_mid)
                + mm(src_scr[2 * n:2 * n + NT, :], w_next)
                + vec(bias_row, 0, cout))

    # ---- conv1 (k=3, pad=1) + BN1 + ReLU, staged as the conv2 input ----
    c1_scr[n:n + NT, :] = jnp.maximum(
        batchnorm(conv3(pool_scr, C1_R0, F * H, 2 * H, V_C1_B),
                  V_BN1_G, V_BN1_B, 2 * H), 0.0)

    # ---- conv2 (k=3, pad=1) + BN2 (no ReLU) ----
    residual = batchnorm(conv3(c1_scr, C2_R0, 2 * H, H, V_C2_B),
                         V_BN2_G, V_BN2_B, H)

    # ---- residual connection (+ input projection, already computed by the
    #      folded columns of the bank matmul since O_dec != H) ----
    if RESID_PROJ:
        rnn_in = y0[0:NT, F * H:F * H + H] + residual
    else:
        rnn_in = cols_ref[0:NT, BANK_OFF * DEC_OUT:(BANK_OFF + 1) * DEC_OUT] + residual

    # ---- Highway: 4 layers, one fused [gate|nonlinear|linear] matmul each;
    #      the result stays a value (no scratch round trip) ----
    hw = rnn_in
    for l in range(4):
        pre = (mm(hw, wn_ref[HW_R0 + l * H:HW_R0 + (l + 1) * H, 0:3 * H])
               + vec(V_HW_B0 + l, 0, 3 * H))
        gate = jax.nn.sigmoid(pre[:, 0:H])
        hw = gate * jnp.maximum(pre[:, H:2 * H], 0.0) + (1.0 - gate) * pre[:, 2 * H:3 * H]

    # ---- fused GRU input projection + rnn_residual: ONE (NT, 8H) matmul on hw
    #      (cols [0:6H] = GRU gate pre-acts fwd|bwd, cols [6H:8H] = rnn_residual)
    xp_scr[...] = (mm(hw, ww_ref[WIH_R0:WIH_R0 + H, 0:8 * H])
                   + vec(V_BIH, 0, 8 * H))

    # ---- bidirectional GRU; hidden state carried in registers across the
    #      statically unrolled recurrence (no per-step VMEM round trip) ----
    whh_f = ww_ref[WHH_R0:WHH_R0 + H, 0:3 * H]
    whh_b = ww_ref[WHH_R0:WHH_R0 + H, 3 * H:6 * H]
    bhh_f = vec(V_BHH, 0, 3 * H)
    bhh_b = vec(V_BHH, 3 * H, 6 * H)
    hf = jnp.zeros((n, H), jnp.float32)
    hb = jnp.zeros((n, H), jnp.float32)
    fwd_out = [None] * t
    bwd_out = [None] * t
    for s in range(t):                       # statically unrolled (t is small)
        tb = t - 1 - s                       # backward-direction time index
        if s == 0:                           # h == 0: skip the hidden matmuls
            gf, gb = bhh_f, bhh_b
        else:
            gf = mm(hf, whh_f) + bhh_f
            gb = mm(hb, whh_b) + bhh_b
        xf = xp_scr[s * n:(s + 1) * n, 0:3 * H]
        xb = xp_scr[tb * n:(tb + 1) * n, 3 * H:6 * H]
        rf = jax.nn.sigmoid(xf[:, 0:H] + gf[:, 0:H])
        zf = jax.nn.sigmoid(xf[:, H:2 * H] + gf[:, H:2 * H])
        nf = jnp.tanh(xf[:, 2 * H:3 * H] + rf * gf[:, 2 * H:3 * H])
        hf = (1.0 - zf) * nf + zf * hf
        rb = jax.nn.sigmoid(xb[:, 0:H] + gb[:, 0:H])
        zb = jax.nn.sigmoid(xb[:, H:2 * H] + gb[:, H:2 * H])
        nb = jnp.tanh(xb[:, 2 * H:3 * H] + rb * gb[:, 2 * H:3 * H])
        hb = (1.0 - zb) * nb + zb * hb
        fwd_out[s] = hf
        bwd_out[tb] = hb

    # ---- GRU output: one (n, 2H) store per timestep (off the recurrence),
    #      then rnn-residual add and final projection ----
    for ti in range(t):
        go_scr[ti * n:(ti + 1) * n, :] = jnp.concatenate(
            [fwd_out[ti], bwd_out[ti]], axis=-1)
    rnn_res = xp_scr[0:NT, 6 * H:8 * H]
    out_ref[...] = (mm(go_scr[...] + rnn_res,
                       wn_ref[PR_R0:PR_R0 + 2 * H, 0:POST_OUT])
                    + vec(V_PR_B, 0, POST_OUT))


# ------------------------------- parameters ---------------------------------

def make_params(key):
    """Builds the two packed parameter slabs (layout constants above)."""
    ks = iter(jax.random.split(key, 64))

    def rnd(shape, scale=0.2):
        return scale * jax.random.normal(next(ks), shape, dtype=jnp.float32)

    O, P = DEC_OUT, POST_OUT
    wn = jnp.zeros((NARROW_ROWS, NARROW_COLS), jnp.float32)
    ww = jnp.zeros((WIDE_ROWS, WIDE_COLS), jnp.float32)

    # conv bank: F x Conv1d(O, H, k=i+1, pad=ceil(i/2)) fused into one
    # (F*O, F*H) matmul over the unified K=F im2col window (left off BANK_OFF).
    for i in range(F):
        k, pad = i + 1, (i + 1) // 2                 # pad == ceil(i/2)
        off = BANK_OFF - pad
        assert 0 <= off and off + k <= F
        w = rnd((H, O, k))                           # PyTorch Conv1d layout (out, in, k)
        for j in range(k):
            ww = ww.at[BANK_R0 + (off + j) * O:BANK_R0 + (off + j + 1) * O,
                       i * H:(i + 1) * H].set(w[:, :, j].T)
        ww = ww.at[VEC_R0 + V_BANK_B, i * H:(i + 1) * H].set(rnd((H,)))
    ww = ww.at[VEC_R0 + V_BN0_G, 0:F * H].set(1.0 + rnd((F * H,), 0.1))
    ww = ww.at[VEC_R0 + V_BN0_B, 0:F * H].set(rnd((F * H,), 0.1))

    # residual projection Linear(O, H), folded into the bank matmul as extra
    # output columns driven by the centre-tap input rows.
    if RESID_PROJ:
        ww = ww.at[BANK_R0 + BANK_OFF * O:BANK_R0 + (BANK_OFF + 1) * O,
                   F * H:F * H + H].set(rnd((H, O)).T)
        ww = ww.at[VEC_R0 + V_BANK_B, F * H:F * H + H].set(rnd((H,)))

    # conv1: Conv1d(F*H, 2H, 3, pad=1); taps stacked along rows (3*F*H, 2H)
    w = rnd((2 * H, F * H, 3))
    for j in range(3):
        wn = wn.at[C1_R0 + j * F * H:C1_R0 + (j + 1) * F * H, 0:2 * H].set(w[:, :, j].T)
    ww = ww.at[VEC_R0 + V_C1_B, 0:2 * H].set(rnd((2 * H,)))
    ww = ww.at[VEC_R0 + V_BN1_G, 0:2 * H].set(1.0 + rnd((2 * H,), 0.1))
    ww = ww.at[VEC_R0 + V_BN1_B, 0:2 * H].set(rnd((2 * H,), 0.1))

    # conv2: Conv1d(2H, H, 3, pad=1); taps stacked along rows (3*2H, H)
    w = rnd((H, 2 * H, 3))
    for j in range(3):
        wn = wn.at[C2_R0 + j * 2 * H:C2_R0 + (j + 1) * 2 * H, 0:H].set(w[:, :, j].T)
    ww = ww.at[VEC_R0 + V_C2_B, 0:H].set(rnd((H,)))
    ww = ww.at[VEC_R0 + V_BN2_G, 0:H].set(1.0 + rnd((H,), 0.1))
    ww = ww.at[VEC_R0 + V_BN2_B, 0:H].set(rnd((H,), 0.1))

    # Highway(H, 4): per layer [gate | nonlinear | linear] fused to (H, 3H)
    for l in range(4):
        r0 = HW_R0 + l * H
        for seg in range(3):
            wn = wn.at[r0:r0 + H, seg * H:(seg + 1) * H].set(rnd((H, H)).T)
            ww = ww.at[VEC_R0 + V_HW_B0 + l, seg * H:(seg + 1) * H].set(rnd((H,)))

    # bidirectional GRU(H -> H); PyTorch gate order [r | z | n].  W_ih of both
    # directions fused side by side; W_hh of both directions side by side.
    for d in range(2):
        wih, whh = rnd((3 * H, H)), rnd((3 * H, H))
        bih, bhh = rnd((3 * H,)), rnd((3 * H,))
        ww = ww.at[WIH_R0:WIH_R0 + H, d * 3 * H:(d + 1) * 3 * H].set(wih.T)
        ww = ww.at[WHH_R0:WHH_R0 + H, d * 3 * H:(d + 1) * 3 * H].set(whh.T)
        ww = ww.at[VEC_R0 + V_BIH, d * 3 * H:(d + 1) * 3 * H].set(bih)
        ww = ww.at[VEC_R0 + V_BHH, d * 3 * H:(d + 1) * 3 * H].set(bhh)

    # rnn_residual Linear(H, 2H), fused into the GRU input-projection matmul
    ww = ww.at[WIH_R0:WIH_R0 + H, 6 * H:8 * H].set(rnd((2 * H, H)).T)
    ww = ww.at[VEC_R0 + V_BIH, 6 * H:8 * H].set(rnd((2 * H,)))

    # final projection Linear(2H, P)
    wn = wn.at[PR_R0:PR_R0 + 2 * H, 0:P].set(rnd((P, 2 * H)).T)
    ww = ww.at[VEC_R0 + V_PR_B, 0:P].set(rnd((P,)))

    return {"w_narrow": wn, "w_wide": ww}


# ------------------------------ forward pass --------------------------------

def post_processor_forward(x, params):
    """x: (N, T, O_dec) -> (N, T, O_post).  lengths=None path of PostProcessor."""
    N, T, _ = x.shape
    K = NUM_FILTERS

    # Glue (layout plumbing only): time-major unified im2col for the conv bank.
    # Rows are ordered t*N + n so every time-structured op inside the kernel is
    # a contiguous static row slice.
    xt = jnp.transpose(x, (1, 0, 2))                                 # (T, N, O)
    xt = jnp.pad(xt, ((BANK_OFF, K - BANK_OFF), (0, 0), (0, 0)))     # (T+K, N, O)
    cols = jnp.concatenate([xt[j:j + T + 1] for j in range(K)], axis=-1)
    cols = cols.reshape((T + 1) * N, K * DEC_OUT)                    # ((T+1)*N, K*O)

    kernel = functools.partial(postnet_kernel, n=N, t=T)
    out2d = pl.pallas_call(
        kernel,
        out_shape=jax.ShapeDtypeStruct((N * T, POST_OUT), jnp.float32),
        in_specs=[VMEM_SPEC, VMEM_SPEC, VMEM_SPEC],
        out_specs=VMEM_SPEC,
        scratch_shapes=[
            pltpu.VMEM(((T + 1) * N, F * H), jnp.float32),       # bank (post BN0+ReLU)
            pltpu.VMEM((N * T + 2 * N, F * H), jnp.float32),     # pool + guard rows
            pltpu.VMEM((N * T + 2 * N, 2 * H), jnp.float32),     # conv1 act + guard rows
            pltpu.VMEM((N * T, 8 * H), jnp.float32),             # [GRU gates | rnn_residual]
            pltpu.VMEM((N * T, 2 * H), jnp.float32),             # GRU output
        ],
    )(cols, params["w_narrow"], params["w_wide"])

    # rows are time-major (t*N + n) -> back to (N, T, O_post)
    return jnp.transpose(out2d.reshape(T, N, POST_OUT), (1, 0, 2))


if __name__ == "__main__":
    key = jax.random.PRNGKey(0)
    pkey, xkey = jax.random.split(key)
    params = make_params(pkey)
    x = jax.random.normal(xkey, (BATCH, SEQ, DEC_OUT), dtype=jnp.float32)

    out = jax.jit(post_processor_forward)(x, params)
    out = jax.block_until_ready(out)
    assert out.shape == (BATCH, SEQ, POST_OUT), out.shape
    assert bool(jnp.all(jnp.isfinite(out))), "non-finite output"
    print("KERNEL_OK")
</pallas_src>

<mosaic_0001>
module attributes {stable_mosaic.version = 11 : i64} {
  func.func @postnet_kernel(%arg0: memref<18x16xf32, #tpu.memory_space<vmem>>, %arg1: memref<768x128xf32, #tpu.memory_space<vmem>>, %arg2: memref<96x256xf32, #tpu.memory_space<vmem>>, %arg3: memref<16x8xf32, #tpu.memory_space<vmem>>, %arg4: memref<18x128xf32, #tpu.memory_space<vmem>>, %arg5: memref<20x128xf32, #tpu.memory_space<vmem>>, %arg6: memref<20x64xf32, #tpu.memory_space<vmem>>, %arg7: memref<16x256xf32, #tpu.memory_space<vmem>>, %arg8: memref<16x64xf32, #tpu.memory_space<vmem>>) attributes {dimension_semantics = [], scalar_prefetch = 0 : i64, scratch_operands = 5 : i64, tpu.core_type = #tpu.core_type<tc>} {
    %cst = arith.constant 0.000000e+00 : f32
    %0 = vector.broadcast %cst : f32 to vector<2x128xf32>
    %c0 = arith.constant 0 : index
    %c0_0 = arith.constant 0 : index
    %1 = vector.load %arg5[%c0, %c0_0] : memref<20x128xf32, #tpu.memory_space<vmem>>, vector<2x128xf32>
    tpu.vector_store %arg5[%c0, %c0_0], %0 {strides = array<i32>} : memref<20x128xf32, #tpu.memory_space<vmem>>, vector<2x128xf32>,
    %cst_1 = arith.constant 0.000000e+00 : f32
    %2 = vector.broadcast %cst_1 : f32 to vector<2x128xf32>
    %c18 = arith.constant 18 : index
    %c0_2 = arith.constant 0 : index
    %3 = vector.load %arg5[%c18, %c0_2] : memref<20x128xf32, #tpu.memory_space<vmem>>, vector<2x128xf32>
    tpu.vector_store %arg5[%c18, %c0_2], %2 {strides = array<i32>} : memref<20x128xf32, #tpu.memory_space<vmem>>, vector<2x128xf32>,
    %cst_3 = arith.constant 0.000000e+00 : f32
    %4 = vector.broadcast %cst_3 : f32 to vector<2x64xf32>
    %c0_4 = arith.constant 0 : index
    %c0_5 = arith.constant 0 : index
    %5 = vector.load %arg6[%c0_4, %c0_5] : memref<20x64xf32, #tpu.memory_space<vmem>>, vector<2x64xf32>
    tpu.vector_store %arg6[%c0_4, %c0_5], %4 {strides = array<i32>} : memref<20x64xf32, #tpu.memory_space<vmem>>, vector<2x64xf32>,
    %cst_6 = arith.constant 0.000000e+00 : f32
    %6 = vector.broadcast %cst_6 : f32 to vector<2x64xf32>
    %c18_7 = arith.constant 18 : index
    %c0_8 = arith.constant 0 : index
    %7 = vector.load %arg6[%c18_7, %c0_8] : memref<20x64xf32, #tpu.memory_space<vmem>>, vector<2x64xf32>
    tpu.vector_store %arg6[%c18_7, %c0_8], %6 {strides = array<i32>} : memref<20x64xf32, #tpu.memory_space<vmem>>, vector<2x64xf32>,
    %c0_9 = arith.constant 0 : index
    %c0_10 = arith.constant 0 : index
    %8 = vector.load %arg0[%c0_9, %c0_10] : memref<18x16xf32, #tpu.memory_space<vmem>>, vector<18x16xf32>
    %c0_11 = arith.constant 0 : index
    %c0_12 = arith.constant 0 : index
    %9 = vector.load %arg2[%c0_11, %c0_12] : memref<96x256xf32, #tpu.memory_space<vmem>>, vector<16x160xf32>
    %cst_13 = arith.constant dense<0.000000e+00> : vector<18x160xf32>
    %10 = tpu.matmul %8, %9, %cst_13 {dimension_numbers = #tpu.dot_dimension_numbers<[1], [0], [0], [1], [0, 0, 1, 1], [], []>} : vector<18x16xf32>, vector<16x160xf32>, vector<18x160xf32> -> vector<18x160xf32>
    %c80 = arith.constant 80 : index
    %c0_14 = arith.constant 0 : index
    %11 = vector.load %arg2[%c80, %c0_14] : memref<96x256xf32, #tpu.memory_space<vmem>>, vector<1x160xf32>
    %12 = vector.broadcast %11 : vector<1x160xf32> to vector<18x160xf32>
    %13 = arith.addf %10, %12 : vector<18x160xf32>
    %14 = vector.extract_strided_slice %13 {offsets = [0, 0], sizes = [18, 128], strides = [1, 1]} : vector<18x160xf32> to vector<18x128xf32>
    %cst_15 = arith.constant dense<0.000000e+00> : vector<128xf32>
    %15 = vector.multi_reduction <add>, %14, %cst_15 [0] : vector<18x128xf32> to vector<128xf32>
    %16 = vector.shape_cast %15 : vector<128xf32> to vector<1x128xf32>
    %cst_16 = arith.constant 1.800000e+01 : f32
    %17 = vector.broadcast %cst_16 : f32 to vector<1x128xf32>
    %18 = arith.divf %16, %17 : vector<1x128xf32>
    %19 = vector.broadcast %18 : vector<1x128xf32> to vector<18x128xf32>
    %20 = arith.subf %14, %19 : vector<18x128xf32>
    %21 = arith.mulf %20, %20 : vector<18x128xf32>
    %cst_17 = arith.constant dense<0.000000e+00> : vector<128xf32>
    %22 = vector.multi_reduction <add>, %21, %cst_17 [0] : vector<18x128xf32> to vector<128xf32>
    %23 = vector.shape_cast %22 : vector<128xf32> to vector<1x128xf32>
    %cst_18 = arith.constant 1.800000e+01 : f32
    %24 = vector.broadcast %cst_18 : f32 to vector<1x128xf32>
    %25 = arith.divf %23, %24 : vector<1x128xf32>
    %26 = vector.broadcast %18 : vector<1x128xf32> to vector<18x128xf32>
    %27 = arith.subf %14, %26 : vector<18x128xf32>
    %cst_19 = arith.constant 9.99999974E-6 : f32
    %28 = vector.broadcast %cst_19 : f32 to vector<1x128xf32>
    %29 = arith.addf %25, %28 : vector<1x128xf32>
    %30 = math.rsqrt %29 : vector<1x128xf32>
    %31 = vector.broadcast %30 : vector<1x128xf32> to vector<18x128xf32>
    %32 = arith.mulf %27, %31 : vector<18x128xf32>
    %c81 = arith.constant 81 : index
    %c0_20 = arith.constant 0 : index
    %33 = vector.load %arg2[%c81, %c0_20] : memref<96x256xf32, #tpu.memory_space<vmem>>, vector<1x128xf32>
    %34 = vector.broadcast %33 : vector<1x128xf32> to vector<18x128xf32>
    %35 = arith.mulf %32, %34 : vector<18x128xf32>
    %c82 = arith.constant 82 : index
    %c0_21 = arith.constant 0 : index
    %36 = vector.load %arg2[%c82, %c0_21] : memref<96x256xf32, #tpu.memory_space<vmem>>, vector<1x128xf32>
    %37 = vector.broadcast %36 : vector<1x128xf32> to vector<18x128xf32>
    %38 = arith.addf %35, %37 : vector<18x128xf32>
    %cst_22 = arith.constant 0.000000e+00 : f32
    %39 = vector.broadcast %cst_22 : f32 to vector<18x128xf32>
    %40 = arith.maximumf %38, %39 : vector<18x128xf32>
    %c0_23 = arith.constant 0 : index
    %c0_24 = arith.constant 0 : index
    %41 = vector.load %arg4[%c0_23, %c0_24] : memref<18x128xf32, #tpu.memory_space<vmem>>, vector<18x128xf32>
    tpu.vector_store %arg4[%c0_23, %c0_24], %40 {strides = array<i32>} : memref<18x128xf32, #tpu.memory_space<vmem>>, vector<18x128xf32>,
    %c0_25 = arith.constant 0 : index
    %c0_26 = arith.constant 0 : index
    %42 = vector.load %arg4[%c0_25, %c0_26] : memref<18x128xf32, #tpu.memory_space<vmem>>, vector<16x128xf32>
    %c2 = arith.constant 2 : index
    %c0_27 = arith.constant 0 : index
    %43 = vector.load %arg4[%c2, %c0_27] : memref<18x128xf32, #tpu.memory_space<vmem>>, vector<16x128xf32>
    %44 = arith.maximumf %42, %43 : vector<16x128xf32>
    %c2_28 = arith.constant 2 : index
    %c0_29 = arith.constant 0 : index
    %45 = vector.load %arg5[%c2_28, %c0_29] : memref<20x128xf32, #tpu.memory_space<vmem>>, vector<16x128xf32>
    tpu.vector_store %arg5[%c2_28, %c0_29], %44 {strides = array<i32>} : memref<20x128xf32, #tpu.memory_space<vmem>>, vector<16x128xf32>,
    %c0_30 = arith.constant 0 : index
    %c0_31 = arith.constant 0 : index
    %46 = vector.load %arg1[%c0_30, %c0_31] : memref<768x128xf32, #tpu.memory_space<vmem>>, vector<128x64xf32>
    %c128 = arith.constant 128 : index
    %c0_32 = arith.constant 0 : index
    %47 = vector.load %arg1[%c128, %c0_32] : memref<768x128xf32, #tpu.memory_space<vmem>>, vector<128x64xf32>
    %c256 = arith.constant 256 : index
    %c0_33 = arith.constant 0 : index
    %48 = vector.load %arg1[%c256, %c0_33] : memref<768x128xf32, #tpu.memory_space<vmem>>, vector<128x64xf32>
    %c0_34 = arith.constant 0 : index
    %c0_35 = arith.constant 0 : index
    %49 = vector.load %arg5[%c0_34, %c0_35] : memref<20x128xf32, #tpu.memory_space<vmem>>, vector<16x128xf32>
    %cst_36 = arith.constant dense<0.000000e+00> : vector<16x64xf32>
    %50 = tpu.matmul %49, %46, %cst_36 {dimension_numbers = #tpu.dot_dimension_numbers<[1], [0], [0], [1], [0, 0, 1, 1], [], []>} : vector<16x128xf32>, vector<128x64xf32>, vector<16x64xf32> -> vector<16x64xf32>
    %c2_37 = arith.constant 2 : index
    %c0_38 = arith.constant 0 : index
    %51 = vector.load %arg5[%c2_37, %c0_38] : memref<20x128xf32, #tpu.memory_space<vmem>>, vector<16x128xf32>
    %cst_39 = arith.constant dense<0.000000e+00> : vector<16x64xf32>
    %52 = tpu.matmul %51, %47, %cst_39 {dimension_numbers = #tpu.dot_dimension_numbers<[1], [0], [0], [1], [0, 0, 1, 1], [], []>} : vector<16x128xf32>, vector<128x64xf32>, vector<16x64xf32> -> vector<16x64xf32>
    %53 = arith.addf %50, %52 : vector<16x64xf32>
    %c4 = arith.constant 4 : index
    %c0_40 = arith.constant 0 : index
    %54 = vector.load %arg5[%c4, %c0_40] : memref<20x128xf32, #tpu.memory_space<vmem>>, vector<16x128xf32>
    %cst_41 = arith.constant dense<0.000000e+00> : vector<16x64xf32>
    %55 = tpu.matmul %54, %48, %cst_41 {dimension_numbers = #tpu.dot_dimension_numbers<[1], [0], [0], [1], [0, 0, 1, 1], [], []>} : vector<16x128xf32>, vector<128x64xf32>, vector<16x64xf32> -> vector<16x64xf32>
    %56 = arith.addf %53, %55 : vector<16x64xf32>
    %c83 = arith.constant 83 : index
    %c0_42 = arith.constant 0 : index
    %57 = vector.load %arg2[%c83, %c0_42] : memref<96x256xf32, #tpu.memory_space<vmem>>, vector<1x64xf32>
    %58 = vector.broadcast %57 : vector<1x64xf32> to vector<16x64xf32>
    %59 = arith.addf %56, %58 : vector<16x64xf32>
    %cst_43 = arith.constant dense<0.000000e+00> : vector<64xf32>
    %60 = vector.multi_reduction <add>, %59, %cst_43 [0] : vector<16x64xf32> to vector<64xf32>
    %61 = vector.shape_cast %60 : vector<64xf32> to vector<1x64xf32>
    %cst_44 = arith.constant 1.600000e+01 : f32
    %62 = vector.broadcast %cst_44 : f32 to vector<1x64xf32>
    %63 = arith.divf %61, %62 : vector<1x64xf32>
    %64 = vector.broadcast %63 : vector<1x64xf32> to vector<16x64xf32>
    %65 = arith.subf %59, %64 : vector<16x64xf32>
    %66 = arith.mulf %65, %65 : vector<16x64xf32>
    %cst_45 = arith.constant dense<0.000000e+00> : vector<64xf32>
    %67 = vector.multi_reduction <add>, %66, %cst_45 [0] : vector<16x64xf32> to vector<64xf32>
    %68 = vector.shape_cast %67 : vector<64xf32> to vector<1x64xf32>
    %cst_46 = arith.constant 1.600000e+01 : f32
    %69 = vector.broadcast %cst_46 : f32 to vector<1x64xf32>
    %70 = arith.divf %68, %69 : vector<1x64xf32>
    %71 = vector.broadcast %63 : vector<1x64xf32> to vector<16x64xf32>
    %72 = arith.subf %59, %71 : vector<16x64xf32>
    %cst_47 = arith.constant 9.99999974E-6 : f32
    %73 = vector.broadcast %cst_47 : f32 to vector<1x64xf32>
    %74 = arith.addf %70, %73 : vector<1x64xf32>
    %75 = math.rsqrt %74 : vector<1x64xf32>
    %76 = vector.broadcast %75 : vector<1x64xf32> to vector<16x64xf32>
    %77 = arith.mulf %72, %76 : vector<16x64xf32>
    %c84 = arith.constant 84 : index
    %c0_48 = arith.constant 0 : index
    %78 = vector.load %arg2[%c84, %c0_48] : memref<96x256xf32, #tpu.memory_space<vmem>>, vector<1x64xf32>
    %79 = vector.broadcast %78 : vector<1x64xf32> to vector<16x64xf32>
    %80 = arith.mulf %77, %79 : vector<16x64xf32>
    %c85 = arith.constant 85 : index
    %c0_49 = arith.constant 0 : index
    %81 = vector.load %arg2[%c85, %c0_49] : memref<96x256xf32, #tpu.memory_space<vmem>>, vector<1x64xf32>
    %82 = vector.broadcast %81 : vector<1x64xf32> to vector<16x64xf32>
    %83 = arith.addf %80, %82 : vector<16x64xf32>
    %cst_50 = arith.constant 0.000000e+00 : f32
    %84 = vector.broadcast %cst_50 : f32 to vector<16x64xf32>
    %85 = arith.maximumf %83, %84 : vector<16x64xf32>
    %c2_51 = arith.constant 2 : index
    %c0_52 = arith.constant 0 : index
    %86 = vector.load %arg6[%c2_51, %c0_52] : memref<20x64xf32, #tpu.memory_space<vmem>>, vector<16x64xf32>
    tpu.vector_store %arg6[%c2_51, %c0_52], %85 {strides = array<i32>} : memref<20x64xf32, #tpu.memory_space<vmem>>, vector<16x64xf32>,
    %c384 = arith.constant 384 : index
    %c0_53 = arith.constant 0 : index
    %87 = vector.load %arg1[%c384, %c0_53] : memref<768x128xf32, #tpu.memory_space<vmem>>, vector<64x32xf32>
    %c448 = arith.constant 448 : index
    %c0_54 = arith.constant 0 : index
    %88 = vector.load %arg1[%c448, %c0_54] : memref<768x128xf32, #tpu.memory_space<vmem>>, vector<64x32xf32>
    %c512 = arith.constant 512 : index
    %c0_55 = arith.constant 0 : index
    %89 = vector.load %arg1[%c512, %c0_55] : memref<768x128xf32, #tpu.memory_space<vmem>>, vector<64x32xf32>
    %c0_56 = arith.constant 0 : index
    %c0_57 = arith.constant 0 : index
    %90 = vector.load %arg6[%c0_56, %c0_57] : memref<20x64xf32, #tpu.memory_space<vmem>>, vector<16x64xf32>
    %cst_58 = arith.constant dense<0.000000e+00> : vector<16x32xf32>
    %91 = tpu.matmul %90, %87, %cst_58 {dimension_numbers = #tpu.dot_dimension_numbers<[1], [0], [0], [1], [0, 0, 1, 1], [], []>} : vector<16x64xf32>, vector<64x32xf32>, vector<16x32xf32> -> vector<16x32xf32>
    %c2_59 = arith.constant 2 : index
    %c0_60 = arith.constant 0 : index
    %92 = vector.load %arg6[%c2_59, %c0_60] : memref<20x64xf32, #tpu.memory_space<vmem>>, vector<16x64xf32>
    %cst_61 = arith.constant dense<0.000000e+00> : vector<16x32xf32>
    %93 = tpu.matmul %92, %88, %cst_61 {dimension_numbers = #tpu.dot_dimension_numbers<[1], [0], [0], [1], [0, 0, 1, 1], [], []>} : vector<16x64xf32>, vector<64x32xf32>, vector<16x32xf32> -> vector<16x32xf32>
    %94 = arith.addf %91, %93 : vector<16x32xf32>
    %c4_62 = arith.constant 4 : index
    %c0_63 = arith.constant 0 : index
    %95 = vector.load %arg6[%c4_62, %c0_63] : memref<20x64xf32, #tpu.memory_space<vmem>>, vector<16x64xf32>
    %cst_64 = arith.constant dense<0.000000e+00> : vector<16x32xf32>
    %96 = tpu.matmul %95, %89, %cst_64 {dimension_numbers = #tpu.dot_dimension_numbers<[1], [0], [0], [1], [0, 0, 1, 1], [], []>} : vector<16x64xf32>, vector<64x32xf32>, vector<16x32xf32> -> vector<16x32xf32>
    %97 = arith.addf %94, %96 : vector<16x32xf32>
    %c86 = arith.constant 86 : index
    %c0_65 = arith.constant 0 : index
    %98 = vector.load %arg2[%c86, %c0_65] : memref<96x256xf32, #tpu.memory_space<vmem>>, vector<1x32xf32>
    %99 = vector.broadcast %98 : vector<1x32xf32> to vector<16x32xf32>
    %100 = arith.addf %97, %99 : vector<16x32xf32>
    %cst_66 = arith.constant dense<0.000000e+00> : vector<32xf32>
    %101 = vector.multi_reduction <add>, %100, %cst_66 [0] : vector<16x32xf32> to vector<32xf32>
    %102 = vector.shape_cast %101 : vector<32xf32> to vector<1x32xf32>
    %cst_67 = arith.constant 1.600000e+01 : f32
    %103 = vector.broadcast %cst_67 : f32 to vector<1x32xf32>
    %104 = arith.divf %102, %103 : vector<1x32xf32>
    %105 = vector.broadcast %104 : vector<1x32xf32> to vector<16x32xf32>
    %106 = arith.subf %100, %105 : vector<16x32xf32>
    %107 = arith.mulf %106, %106 : vector<16x32xf32>
    %cst_68 = arith.constant dense<0.000000e+00> : vector<32xf32>
    %108 = vector.multi_reduction <add>, %107, %cst_68 [0] : vector<16x32xf32> to vector<32xf32>
    %109 = vector.shape_cast %108 : vector<32xf32> to vector<1x32xf32>
    %cst_69 = arith.constant 1.600000e+01 : f32
    %110 = vector.broadcast %cst_69 : f32 to vector<1x32xf32>
    %111 = arith.divf %109, %110 : vector<1x32xf32>
    %112 = vector.broadcast %104 : vector<1x32xf32> to vector<16x32xf32>
    %113 = arith.subf %100, %112 : vector<16x32xf32>
    %cst_70 = arith.constant 9.99999974E-6 : f32
    %114 = vector.broadcast %cst_70 : f32 to vector<1x32xf32>
    %115 = arith.addf %111, %114 : vector<1x32xf32>
    %116 = math.rsqrt %115 : vector<1x32xf32>
    %117 = vector.broadcast %116 : vector<1x32xf32> to vector<16x32xf32>
    %118 = arith.mulf %113, %117 : vector<16x32xf32>
    %c87 = arith.constant 87 : index
    %c0_71 = arith.constant 0 : index
    %119 = vector.load %arg2[%c87, %c0_71] : memref<96x256xf32, #tpu.memory_space<vmem>>, vector<1x32xf32>
    %120 = vector.broadcast %119 : vector<1x32xf32> to vector<16x32xf32>
    %121 = arith.mulf %118, %120 : vector<16x32xf32>
    %c88 = arith.constant 88 : index
    %c0_72 = arith.constant 0 : index
    %122 = vector.load %arg2[%c88, %c0_72] : memref<96x256xf32, #tpu.memory_space<vmem>>, vector<1x32xf32>
    %123 = vector.broadcast %122 : vector<1x32xf32> to vector<16x32xf32>
    %124 = arith.addf %121, %123 : vector<16x32xf32>
    %125 = vector.extract_strided_slice %13 {offsets = [0, 128], sizes = [16, 32], strides = [1, 1]} : vector<18x160xf32> to vector<16x32xf32>
    %126 = arith.addf %125, %124 : vector<16x32xf32>
    %c576 = arith.constant 576 : index
    %c0_73 = arith.constant 0 : index
    %127 = vector.load %arg1[%c576, %c0_73] : memref<768x128xf32, #tpu.memory_space<vmem>>, vector<32x96xf32>
    %cst_74 = arith.constant dense<0.000000e+00> : vector<16x96xf32>
    %128 = tpu.matmul %126, %127, %cst_74 {dimension_numbers = #tpu.dot_dimension_numbers<[1], [0], [0], [1], [0, 0, 1, 1], [], []>} : vector<16x32xf32>, vector<32x96xf32>, vector<16x96xf32> -> vector<16x96xf32>
    %c89 = arith.constant 89 : index
    %c0_75 = arith.constant 0 : index
    %129 = vector.load %arg2[%c89, %c0_75] : memref<96x256xf32, #tpu.memory_space<vmem>>, vector<1x96xf32>
    %130 = vector.broadcast %129 : vector<1x96xf32> to vector<16x96xf32>
    %131 = arith.addf %128, %130 : vector<16x96xf32>
    %132 = vector.extract_strided_slice %131 {offsets = [0, 0], sizes = [16, 32], strides = [1, 1]} : vector<16x96xf32> to vector<16x32xf32>
    %133 = arith.negf %132 : vector<16x32xf32>
    %134 = math.exp %133 : vector<16x32xf32>
    %cst_76 = arith.constant 1.000000e+00 : f32
    %135 = vector.broadcast %cst_76 : f32 to vector<16x32xf32>
    %136 = arith.addf %135, %134 : vector<16x32xf32>
    %137 = arith.divf %135, %136 : vector<16x32xf32>
    %138 = vector.extract_strided_slice %131 {offsets = [0, 32], sizes = [16, 32], strides = [1, 1]} : vector<16x96xf32> to vector<16x32xf32>
    %cst_77 = arith.constant 0.000000e+00 : f32
    %139 = vector.broadcast %cst_77 : f32 to vector<16x32xf32>
    %140 = arith.maximumf %138, %139 : vector<16x32xf32>
    %141 = arith.mulf %137, %140 : vector<16x32xf32>
    %cst_78 = arith.constant 1.000000e+00 : f32
    %142 = vector.broadcast %cst_78 : f32 to vector<16x32xf32>
    %143 = arith.subf %142, %137 : vector<16x32xf32>
    %144 = vector.extract_strided_slice %131 {offsets = [0, 64], sizes = [16, 32], strides = [1, 1]} : vector<16x96xf32> to vector<16x32xf32>
    %145 = arith.mulf %143, %144 : vector<16x32xf32>
    %146 = arith.addf %141, %145 : vector<16x32xf32>
    %c608 = arith.constant 608 : index
    %c0_79 = arith.constant 0 : index
    %147 = vector.load %arg1[%c608, %c0_79] : memref<768x128xf32, #tpu.memory_space<vmem>>, vector<32x96xf32>
    %cst_80 = arith.constant dense<0.000000e+00> : vector<16x96xf32>
    %148 = tpu.matmul %146, %147, %cst_80 {dimension_numbers = #tpu.dot_dimension_numbers<[1], [0], [0], [1], [0, 0, 1, 1], [], []>} : vector<16x32xf32>, vector<32x96xf32>, vector<16x96xf32> -> vector<16x96xf32>
    %c90 = arith.constant 90 : index
    %c0_81 = arith.constant 0 : index
    %149 = vector.load %arg2[%c90, %c0_81] : memref<96x256xf32, #tpu.memory_space<vmem>>, vector<1x96xf32>
    %150 = vector.broadcast %149 : vector<1x96xf32> to vector<16x96xf32>
    %151 = arith.addf %148, %150 : vector<16x96xf32>
    %152 = vector.extract_strided_slice %151 {offsets = [0, 0], sizes = [16, 32], strides = [1, 1]} : vector<16x96xf32> to vector<16x32xf32>
    %153 = arith.negf %152 : vector<16x32xf32>
    %154 = math.exp %153 : vector<16x32xf32>
    %cst_82 = arith.constant 1.000000e+00 : f32
    %155 = vector.broadcast %cst_82 : f32 to vector<16x32xf32>
    %156 = arith.addf %155, %154 : vector<16x32xf32>
    %157 = arith.divf %155, %156 : vector<16x32xf32>
    %158 = vector.extract_strided_slice %151 {offsets = [0, 32], sizes = [16, 32], strides = [1, 1]} : vector<16x96xf32> to vector<16x32xf32>
    %cst_83 = arith.constant 0.000000e+00 : f32
    %159 = vector.broadcast %cst_83 : f32 to vector<16x32xf32>
    %160 = arith.maximumf %158, %159 : vector<16x32xf32>
    %161 = arith.mulf %157, %160 : vector<16x32xf32>
    %cst_84 = arith.constant 1.000000e+00 : f32
    %162 = vector.broadcast %cst_84 : f32 to vector<16x32xf32>
    %163 = arith.subf %162, %157 : vector<16x32xf32>
    %164 = vector.extract_strided_slice %151 {offsets = [0, 64], sizes = [16, 32], strides = [1, 1]} : vector<16x96xf32> to vector<16x32xf32>
    %165 = arith.mulf %163, %164 : vector<16x32xf32>
    %166 = arith.addf %161, %165 : vector<16x32xf32>
    %c640 = arith.constant 640 : index
    %c0_85 = arith.constant 0 : index
    %167 = vector.load %arg1[%c640, %c0_85] : memref<768x128xf32, #tpu.memory_space<vmem>>, vector<32x96xf32>
    %cst_86 = arith.constant dense<0.000000e+00> : vector<16x96xf32>
    %168 = tpu.matmul %166, %167, %cst_86 {dimension_numbers = #tpu.dot_dimension_numbers<[1], [0], [0], [1], [0, 0, 1, 1], [], []>} : vector<16x32xf32>, vector<32x96xf32>, vector<16x96xf32> -> vector<16x96xf32>
    %c91 = arith.constant 91 : index
    %c0_87 = arith.constant 0 : index
    %169 = vector.load %arg2[%c91, %c0_87] : memref<96x256xf32, #tpu.memory_space<vmem>>, vector<1x96xf32>
    %170 = vector.broadcast %169 : vector<1x96xf32> to vector<16x96xf32>
    %171 = arith.addf %168, %170 : vector<16x96xf32>
    %172 = vector.extract_strided_slice %171 {offsets = [0, 0], sizes = [16, 32], strides = [1, 1]} : vector<16x96xf32> to vector<16x32xf32>
    %173 = arith.negf %172 : vector<16x32xf32>
    %174 = math.exp %173 : vector<16x32xf32>
    %cst_88 = arith.constant 1.000000e+00 : f32
    %175 = vector.broadcast %cst_88 : f32 to vector<16x32xf32>
    %176 = arith.addf %175, %174 : vector<16x32xf32>
    %177 = arith.divf %175, %176 : vector<16x32xf32>
    %178 = vector.extract_strided_slice %171 {offsets = [0, 32], sizes = [16, 32], strides = [1, 1]} : vector<16x96xf32> to vector<16x32xf32>
    %cst_89 = arith.constant 0.000000e+00 : f32
    %179 = vector.broadcast %cst_89 : f32 to vector<16x32xf32>
    %180 = arith.maximumf %178, %179 : vector<16x32xf32>
    %181 = arith.mulf %177, %180 : vector<16x32xf32>
    %cst_90 = arith.constant 1.000000e+00 : f32
    %182 = vector.broadcast %cst_90 : f32 to vector<16x32xf32>
    %183 = arith.subf %182, %177 : vector<16x32xf32>
    %184 = vector.extract_strided_slice %171 {offsets = [0, 64], sizes = [16, 32], strides = [1, 1]} : vector<16x96xf32> to vector<16x32xf32>
    %185 = arith.mulf %183, %184 : vector<16x32xf32>
    %186 = arith.addf %181, %185 : vector<16x32xf32>
    %c672 = arith.constant 672 : index
    %c0_91 = arith.constant 0 : index
    %187 = vector.load %arg1[%c672, %c0_91] : memref<768x128xf32, #tpu.memory_space<vmem>>, vector<32x96xf32>
    %cst_92 = arith.constant dense<0.000000e+00> : vector<16x96xf32>
    %188 = tpu.matmul %186, %187, %cst_92 {dimension_numbers = #tpu.dot_dimension_numbers<[1], [0], [0], [1], [0, 0, 1, 1], [], []>} : vector<16x32xf32>, vector<32x96xf32>, vector<16x96xf32> -> vector<16x96xf32>
    %c92 = arith.constant 92 : index
    %c0_93 = arith.constant 0 : index
    %189 = vector.load %arg2[%c92, %c0_93] : memref<96x256xf32, #tpu.memory_space<vmem>>, vector<1x96xf32>
    %190 = vector.broadcast %189 : vector<1x96xf32> to vector<16x96xf32>
    %191 = arith.addf %188, %190 : vector<16x96xf32>
    %192 = vector.extract_strided_slice %191 {offsets = [0, 0], sizes = [16, 32], strides = [1, 1]} : vector<16x96xf32> to vector<16x32xf32>
    %193 = arith.negf %192 : vector<16x32xf32>
    %194 = math.exp %193 : vector<16x32xf32>
    %cst_94 = arith.constant 1.000000e+00 : f32
    %195 = vector.broadcast %cst_94 : f32 to vector<16x32xf32>
    %196 = arith.addf %195, %194 : vector<16x32xf32>
    %197 = arith.divf %195, %196 : vector<16x32xf32>
    %198 = vector.extract_strided_slice %191 {offsets = [0, 32], sizes = [16, 32], strides = [1, 1]} : vector<16x96xf32> to vector<16x32xf32>
    %cst_95 = arith.constant 0.000000e+00 : f32
    %199 = vector.broadcast %cst_95 : f32 to vector<16x32xf32>
    %200 = arith.maximumf %198, %199 : vector<16x32xf32>
    %201 = arith.mulf %197, %200 : vector<16x32xf32>
    %cst_96 = arith.constant 1.000000e+00 : f32
    %202 = vector.broadcast %cst_96 : f32 to vector<16x32xf32>
    %203 = arith.subf %202, %197 : vector<16x32xf32>
    %204 = vector.extract_strided_slice %191 {offsets = [0, 64], sizes = [16, 32], strides = [1, 1]} : vector<16x96xf32> to vector<16x32xf32>
    %205 = arith.mulf %203, %204 : vector<16x32xf32>
    %206 = arith.addf %201, %205 : vector<16x32xf32>
    %c16 = arith.constant 16 : index
    %c0_97 = arith.constant 0 : index
    %207 = vector.load %arg2[%c16, %c0_97] : memref<96x256xf32, #tpu.memory_space<vmem>>, vector<32x256xf32>
    %cst_98 = arith.constant dense<0.000000e+00> : vector<16x256xf32>
    %208 = tpu.matmul %206, %207, %cst_98 {dimension_numbers = #tpu.dot_dimension_numbers<[1], [0], [0], [1], [0, 0, 1, 1], [], []>} : vector<16x32xf32>, vector<32x256xf32>, vector<16x256xf32> -> vector<16x256xf32>
    %c93 = arith.constant 93 : index
    %c0_99 = arith.constant 0 : index
    %209 = vector.load %arg2[%c93, %c0_99] : memref<96x256xf32, #tpu.memory_space<vmem>>, vector<1x256xf32>
    %210 = vector.broadcast %209 : vector<1x256xf32> to vector<16x256xf32>
    %211 = arith.addf %208, %210 : vector<16x256xf32>
    %c0_100 = arith.constant 0 : index
    %c0_101 = arith.constant 0 : index
    %212 = vector.load %arg7[%c0_100, %c0_101] : memref<16x256xf32, #tpu.memory_space<vmem>>, vector<16x256xf32>
    tpu.vector_store %arg7[%c0_100, %c0_101], %211 {strides = array<i32>} : memref<16x256xf32, #tpu.memory_space<vmem>>, vector<16x256xf32>,
    %c48 = arith.constant 48 : index
    %c0_102 = arith.constant 0 : index
    %213 = vector.load %arg2[%c48, %c0_102] : memref<96x256xf32, #tpu.memory_space<vmem>>, vector<32x96xf32>
    %c48_103 = arith.constant 48 : index
    %c96 = arith.constant 96 : index
    %214 = vector.load %arg2[%c48_103, %c96] : memref<96x256xf32, #tpu.memory_space<vmem>>, vector<32x96xf32>
    %c94 = arith.constant 94 : index
    %c0_104 = arith.constant 0 : index
    %215 = vector.load %arg2[%c94, %c0_104] : memref<96x256xf32, #tpu.memory_space<vmem>>, vector<1x96xf32>
    %c94_105 = arith.constant 94 : index
    %c96_106 = arith.constant 96 : index
    %216 = vector.load %arg2[%c94_105, %c96_106] : memref<96x256xf32, #tpu.memory_space<vmem>>, vector<1x96xf32>
    %cst_107 = arith.constant 0.000000e+00 : f32
    %217 = vector.broadcast %cst_107 : f32 to vector<2x32xf32>
    %cst_108 = arith.constant 0.000000e+00 : f32
    %218 = vector.broadcast %cst_108 : f32 to vector<2x32xf32>
    %c0_109 = arith.constant 0 : index
    %c0_110 = arith.constant 0 : index
    %219 = vector.load %arg7[%c0_109, %c0_110] : memref<16x256xf32, #tpu.memory_space<vmem>>, vector<2x96xf32>
    %c14 = arith.constant 14 : index
    %c96_111 = arith.constant 96 : index
    %220 = vector.load %arg7[%c14, %c96_111] : memref<16x256xf32, #tpu.memory_space<vmem>>, vector<2x96xf32>
    %221 = vector.extract_strided_slice %219 {offsets = [0, 0], sizes = [2, 32], strides = [1, 1]} : vector<2x96xf32> to vector<2x32xf32>
    %222 = vector.extract_strided_slice %215 {offsets = [0, 0], sizes = [1, 32], strides = [1, 1]} : vector<1x96xf32> to vector<1x32xf32>
    %223 = vector.broadcast %222 : vector<1x32xf32> to vector<2x32xf32>
    %224 = arith.addf %221, %223 : vector<2x32xf32>
    %225 = arith.negf %224 : vector<2x32xf32>
    %226 = math.exp %225 : vector<2x32xf32>
    %cst_112 = arith.constant 1.000000e+00 : f32
    %227 = vector.broadcast %cst_112 : f32 to vector<2x32xf32>
    %228 = arith.addf %227, %226 : vector<2x32xf32>
    %229 = arith.divf %227, %228 : vector<2x32xf32>
    %230 = vector.extract_strided_slice %219 {offsets = [0, 32], sizes = [2, 32], strides = [1, 1]} : vector<2x96xf32> to vector<2x32xf32>
    %231 = vector.extract_strided_slice %215 {offsets = [0, 32], sizes = [1, 32], strides = [1, 1]} : vector<1x96xf32> to vector<1x32xf32>
    %232 = vector.broadcast %231 : vector<1x32xf32> to vector<2x32xf32>
    %233 = arith.addf %230, %232 : vector<2x32xf32>
    %234 = arith.negf %233 : vector<2x32xf32>
    %235 = math.exp %234 : vector<2x32xf32>
    %cst_113 = arith.constant 1.000000e+00 : f32
    %236 = vector.broadcast %cst_113 : f32 to vector<2x32xf32>
    %237 = arith.addf %236, %235 : vector<2x32xf32>
    %238 = arith.divf %236, %237 : vector<2x32xf32>
    %239 = vector.extract_strided_slice %219 {offsets = [0, 64], sizes = [2, 32], strides = [1, 1]} : vector<2x96xf32> to vector<2x32xf32>
    %240 = vector.extract_strided_slice %215 {offsets = [0, 64], sizes = [1, 32], strides = [1, 1]} : vector<1x96xf32> to vector<1x32xf32>
    %241 = vector.broadcast %240 : vector<1x32xf32> to vector<2x32xf32>
    %242 = arith.mulf %229, %241 : vector<2x32xf32>
    %243 = arith.addf %239, %242 : vector<2x32xf32>
    %244 = math.tanh %243 : vector<2x32xf32>
    %cst_114 = arith.constant 1.000000e+00 : f32
    %245 = vector.broadcast %cst_114 : f32 to vector<2x32xf32>
    %246 = arith.subf %245, %238 : vector<2x32xf32>
    %247 = arith.mulf %246, %244 : vector<2x32xf32>
    %248 = arith.mulf %238, %217 : vector<2x32xf32>
    %249 = arith.addf %247, %248 : vector<2x32xf32>
    %250 = vector.extract_strided_slice %220 {offsets = [0, 0], sizes = [2, 32], strides = [1, 1]} : vector<2x96xf32> to vector<2x32xf32>
    %251 = vector.extract_strided_slice %216 {offsets = [0, 0], sizes = [1, 32], strides = [1, 1]} : vector<1x96xf32> to vector<1x32xf32>
    %252 = vector.broadcast %251 : vector<1x32xf32> to vector<2x32xf32>
    %253 = arith.addf %250, %252 : vector<2x32xf32>
    %254 = arith.negf %253 : vector<2x32xf32>
    %255 = math.exp %254 : vector<2x32xf32>
    %cst_115 = arith.constant 1.000000e+00 : f32
    %256 = vector.broadcast %cst_115 : f32 to vector<2x32xf32>
    %257 = arith.addf %256, %255 : vector<2x32xf32>
    %258 = arith.divf %256, %257 : vector<2x32xf32>
    %259 = vector.extract_strided_slice %220 {offsets = [0, 32], sizes = [2, 32], strides = [1, 1]} : vector<2x96xf32> to vector<2x32xf32>
    %260 = vector.extract_strided_slice %216 {offsets = [0, 32], sizes = [1, 32], strides = [1, 1]} : vector<1x96xf32> to vector<1x32xf32>
    %261 = vector.broadcast %260 : vector<1x32xf32> to vector<2x32xf32>
    %262 = arith.addf %259, %261 : vector<2x32xf32>
    %263 = arith.negf %262 : vector<2x32xf32>
    %264 = math.exp %263 : vector<2x32xf32>
    %cst_116 = arith.constant 1.000000e+00 : f32
    %265 = vector.broadcast %cst_116 : f32 to vector<2x32xf32>
    %266 = arith.addf %265, %264 : vector<2x32xf32>
    %267 = arith.divf %265, %266 : vector<2x32xf32>
    %268 = vector.extract_strided_slice %220 {offsets = [0, 64], sizes = [2, 32], strides = [1, 1]} : vector<2x96xf32> to vector<2x32xf32>
    %269 = vector.extract_strided_slice %216 {offsets = [0, 64], sizes = [1, 32], strides = [1, 1]} : vector<1x96xf32> to vector<1x32xf32>
    %270 = vector.broadcast %269 : vector<1x32xf32> to vector<2x32xf32>
    %271 = arith.mulf %258, %270 : vector<2x32xf32>
    %272 = arith.addf %268, %271 : vector<2x32xf32>
    %273 = math.tanh %272 : vector<2x32xf32>
    %cst_117 = arith.constant 1.000000e+00 : f32
    %274 = vector.broadcast %cst_117 : f32 to vector<2x32xf32>
    %275 = arith.subf %274, %267 : vector<2x32xf32>
    %276 = arith.mulf %275, %273 : vector<2x32xf32>
    %277 = arith.mulf %267, %218 : vector<2x32xf32>
    %278 = arith.addf %276, %277 : vector<2x32xf32>
    %cst_118 = arith.constant dense<0.000000e+00> : vector<2x96xf32>
    %279 = tpu.matmul %249, %213, %cst_118 {dimension_numbers = #tpu.dot_dimension_numbers<[1], [0], [0], [1], [0, 0, 1, 1], [], []>} : vector<2x32xf32>, vector<32x96xf32>, vector<2x96xf32> -> vector<2x96xf32>
    %280 = vector.broadcast %215 : vector<1x96xf32> to vector<2x96xf32>
    %281 = arith.addf %279, %280 : vector<2x96xf32>
    %cst_119 = arith.constant dense<0.000000e+00> : vector<2x96xf32>
    %282 = tpu.matmul %278, %214, %cst_119 {dimension_numbers = #tpu.dot_dimension_numbers<[1], [0], [0], [1], [0, 0, 1, 1], [], []>} : vector<2x32xf32>, vector<32x96xf32>, vector<2x96xf32> -> vector<2x96xf32>
    %283 = vector.broadcast %216 : vector<1x96xf32> to vector<2x96xf32>
    %284 = arith.addf %282, %283 : vector<2x96xf32>
    %c2_120 = arith.constant 2 : index
    %c0_121 = arith.constant 0 : index
    %285 = vector.load %arg7[%c2_120, %c0_121] : memref<16x256xf32, #tpu.memory_space<vmem>>, vector<2x96xf32>
    %c12 = arith.constant 12 : index
    %c96_122 = arith.constant 96 : index
    %286 = vector.load %arg7[%c12, %c96_122] : memref<16x256xf32, #tpu.memory_space<vmem>>, vector<2x96xf32>
    %287 = vector.extract_strided_slice %285 {offsets = [0, 0], sizes = [2, 32], strides = [1, 1]} : vector<2x96xf32> to vector<2x32xf32>
    %288 = vector.extract_strided_slice %281 {offsets = [0, 0], sizes = [2, 32], strides = [1, 1]} : vector<2x96xf32> to vector<2x32xf32>
    %289 = arith.addf %287, %288 : vector<2x32xf32>
    %290 = arith.negf %289 : vector<2x32xf32>
    %291 = math.exp %290 : vector<2x32xf32>
    %cst_123 = arith.constant 1.000000e+00 : f32
    %292 = vector.broadcast %cst_123 : f32 to vector<2x32xf32>
    %293 = arith.addf %292, %291 : vector<2x32xf32>
    %294 = arith.divf %292, %293 : vector<2x32xf32>
    %295 = vector.extract_strided_slice %285 {offsets = [0, 32], sizes = [2, 32], strides = [1, 1]} : vector<2x96xf32> to vector<2x32xf32>
    %296 = vector.extract_strided_slice %281 {offsets = [0, 32], sizes = [2, 32], strides = [1, 1]} : vector<2x96xf32> to vector<2x32xf32>
    %297 = arith.addf %295, %296 : vector<2x32xf32>
    %298 = arith.negf %297 : vector<2x32xf32>
    %299 = math.exp %298 : vector<2x32xf32>
    %cst_124 = arith.constant 1.000000e+00 : f32
    %300 = vector.broadcast %cst_124 : f32 to vector<2x32xf32>
    %301 = arith.addf %300, %299 : vector<2x32xf32>
    %302 = arith.divf %300, %301 : vector<2x32xf32>
    %303 = vector.extract_strided_slice %285 {offsets = [0, 64], sizes = [2, 32], strides = [1, 1]} : vector<2x96xf32> to vector<2x32xf32>
    %304 = vector.extract_strided_slice %281 {offsets = [0, 64], sizes = [2, 32], strides = [1, 1]} : vector<2x96xf32> to vector<2x32xf32>
    %305 = arith.mulf %294, %304 : vector<2x32xf32>
    %306 = arith.addf %303, %305 : vector<2x32xf32>
    %307 = math.tanh %306 : vector<2x32xf32>
    %cst_125 = arith.constant 1.000000e+00 : f32
    %308 = vector.broadcast %cst_125 : f32 to vector<2x32xf32>
    %309 = arith.subf %308, %302 : vector<2x32xf32>
    %310 = arith.mulf %309, %307 : vector<2x32xf32>
    %311 = arith.mulf %302, %249 : vector<2x32xf32>
    %312 = arith.addf %310, %311 : vector<2x32xf32>
    %313 = vector.extract_strided_slice %286 {offsets = [0, 0], sizes = [2, 32], strides = [1, 1]} : vector<2x96xf32> to vector<2x32xf32>
    %314 = vector.extract_strided_slice %284 {offsets = [0, 0], sizes = [2, 32], strides = [1, 1]} : vector<2x96xf32> to vector<2x32xf32>
    %315 = arith.addf %313, %314 : vector<2x32xf32>
    %316 = arith.negf %315 : vector<2x32xf32>
    %317 = math.exp %316 : vector<2x32xf32>
    %cst_126 = arith.constant 1.000000e+00 : f32
    %318 = vector.broadcast %cst_126 : f32 to vector<2x32xf32>
    %319 = arith.addf %318, %317 : vector<2x32xf32>
    %320 = arith.divf %318, %319 : vector<2x32xf32>
    %321 = vector.extract_strided_slice %286 {offsets = [0, 32], sizes = [2, 32], strides = [1, 1]} : vector<2x96xf32> to vector<2x32xf32>
    %322 = vector.extract_strided_slice %284 {offsets = [0, 32], sizes = [2, 32], strides = [1, 1]} : vector<2x96xf32> to vector<2x32xf32>
    %323 = arith.addf %321, %322 : vector<2x32xf32>
    %324 = arith.negf %323 : vector<2x32xf32>
    %325 = math.exp %324 : vector<2x32xf32>
    %cst_127 = arith.constant 1.000000e+00 : f32
    %326 = vector.broadcast %cst_127 : f32 to vector<2x32xf32>
    %327 = arith.addf %326, %325 : vector<2x32xf32>
    %328 = arith.divf %326, %327 : vector<2x32xf32>
    %329 = vector.extract_strided_slice %286 {offsets = [0, 64], sizes = [2, 32], strides = [1, 1]} : vector<2x96xf32> to vector<2x32xf32>
    %330 = vector.extract_strided_slice %284 {offsets = [0, 64], sizes = [2, 32], strides = [1, 1]} : vector<2x96xf32> to vector<2x32xf32>
    %331 = arith.mulf %320, %330 : vector<2x32xf32>
    %332 = arith.addf %329, %331 : vector<2x32xf32>
    %333 = math.tanh %332 : vector<2x32xf32>
    %cst_128 = arith.constant 1.000000e+00 : f32
    %334 = vector.broadcast %cst_128 : f32 to vector<2x32xf32>
    %335 = arith.subf %334, %328 : vector<2x32xf32>
    %336 = arith.mulf %335, %333 : vector<2x32xf32>
    %337 = arith.mulf %328, %278 : vector<2x32xf32>
    %338 = arith.addf %336, %337 : vector<2x32xf32>
    %cst_129 = arith.constant dense<0.000000e+00> : vector<2x96xf32>
    %339 = tpu.matmul %312, %213, %cst_129 {dimension_numbers = #tpu.dot_dimension_numbers<[1], [0], [0], [1], [0, 0, 1, 1], [], []>} : vector<2x32xf32>, vector<32x96xf32>, vector<2x96xf32> -> vector<2x96xf32>
    %340 = vector.broadcast %215 : vector<1x96xf32> to vector<2x96xf32>
    %341 = arith.addf %339, %340 : vector<2x96xf32>
    %cst_130 = arith.constant dense<0.000000e+00> : vector<2x96xf32>
    %342 = tpu.matmul %338, %214, %cst_130 {dimension_numbers = #tpu.dot_dimension_numbers<[1], [0], [0], [1], [0, 0, 1, 1], [], []>} : vector<2x32xf32>, vector<32x96xf32>, vector<2x96xf32> -> vector<2x96xf32>
    %343 = vector.broadcast %216 : vector<1x96xf32> to vector<2x96xf32>
    %344 = arith.addf %342, %343 : vector<2x96xf32>
    %c4_131 = arith.constant 4 : index
    %c0_132 = arith.constant 0 : index
    %345 = vector.load %arg7[%c4_131, %c0_132] : memref<16x256xf32, #tpu.memory_space<vmem>>, vector<2x96xf32>
    %c10 = arith.constant 10 : index
    %c96_133 = arith.constant 96 : index
    %346 = vector.load %arg7[%c10, %c96_133] : memref<16x256xf32, #tpu.memory_space<vmem>>, vector<2x96xf32>
    %347 = vector.extract_strided_slice %345 {offsets = [0, 0], sizes = [2, 32], strides = [1, 1]} : vector<2x96xf32> to vector<2x32xf32>
    %348 = vector.extract_strided_slice %341 {offsets = [0, 0], sizes = [2, 32], strides = [1, 1]} : vector<2x96xf32> to vector<2x32xf32>
    %349 = arith.addf %347, %348 : vector<2x32xf32>
    %350 = arith.negf %349 : vector<2x32xf32>
    %351 = math.exp %350 : vector<2x32xf32>
    %cst_134 = arith.constant 1.000000e+00 : f32
    %352 = vector.broadcast %cst_134 : f32 to vector<2x32xf32>
    %353 = arith.addf %352, %351 : vector<2x32xf32>
    %354 = arith.divf %352, %353 : vector<2x32xf32>
    %355 = vector.extract_strided_slice %345 {offsets = [0, 32], sizes = [2, 32], strides = [1, 1]} : vector<2x96xf32> to vector<2x32xf32>
    %356 = vector.extract_strided_slice %341 {offsets = [0, 32], sizes = [2, 32], strides = [1, 1]} : vector<2x96xf32> to vector<2x32xf32>
    %357 = arith.addf %355, %356 : vector<2x32xf32>
    %358 = arith.negf %357 : vector<2x32xf32>
    %359 = math.exp %358 : vector<2x32xf32>
    %cst_135 = arith.constant 1.000000e+00 : f32
    %360 = vector.broadcast %cst_135 : f32 to vector<2x32xf32>
    %361 = arith.addf %360, %359 : vector<2x32xf32>
    %362 = arith.divf %360, %361 : vector<2x32xf32>
    %363 = vector.extract_strided_slice %345 {offsets = [0, 64], sizes = [2, 32], strides = [1, 1]} : vector<2x96xf32> to vector<2x32xf32>
    %364 = vector.extract_strided_slice %341 {offsets = [0, 64], sizes = [2, 32], strides = [1, 1]} : vector<2x96xf32> to vector<2x32xf32>
    %365 = arith.mulf %354, %364 : vector<2x32xf32>
    %366 = arith.addf %363, %365 : vector<2x32xf32>
    %367 = math.tanh %366 : vector<2x32xf32>
    %cst_136 = arith.constant 1.000000e+00 : f32
    %368 = vector.broadcast %cst_136 : f32 to vector<2x32xf32>
    %369 = arith.subf %368, %362 : vector<2x32xf32>
    %370 = arith.mulf %369, %367 : vector<2x32xf32>
    %371 = arith.mulf %362, %312 : vector<2x32xf32>
    %372 = arith.addf %370, %371 : vector<2x32xf32>
    %373 = vector.extract_strided_slice %346 {offsets = [0, 0], sizes = [2, 32], strides = [1, 1]} : vector<2x96xf32> to vector<2x32xf32>
    %374 = vector.extract_strided_slice %344 {offsets = [0, 0], sizes = [2, 32], strides = [1, 1]} : vector<2x96xf32> to vector<2x32xf32>
    %375 = arith.addf %373, %374 : vector<2x32xf32>
    %376 = arith.negf %375 : vector<2x32xf32>
    %377 = math.exp %376 : vector<2x32xf32>
    %cst_137 = arith.constant 1.000000e+00 : f32
    %378 = vector.broadcast %cst_137 : f32 to vector<2x32xf32>
    %379 = arith.addf %378, %377 : vector<2x32xf32>
    %380 = arith.divf %378, %379 : vector<2x32xf32>
    %381 = vector.extract_strided_slice %346 {offsets = [0, 32], sizes = [2, 32], strides = [1, 1]} : vector<2x96xf32> to vector<2x32xf32>
    %382 = vector.extract_strided_slice %344 {offsets = [0, 32], sizes = [2, 32], strides = [1, 1]} : vector<2x96xf32> to vector<2x32xf32>
    %383 = arith.addf %381, %382 : vector<2x32xf32>
    %384 = arith.negf %383 : vector<2x32xf32>
    %385 = math.exp %384 : vector<2x32xf32>
    %cst_138 = arith.constant 1.000000e+00 : f32
    %386 = vector.broadcast %cst_138 : f32 to vector<2x32xf32>
    %387 = arith.addf %386, %385 : vector<2x32xf32>
    %388 = arith.divf %386, %387 : vector<2x32xf32>
    %389 = vector.extract_strided_slice %346 {offsets = [0, 64], sizes = [2, 32], strides = [1, 1]} : vector<2x96xf32> to vector<2x32xf32>
    %390 = vector.extract_strided_slice %344 {offsets = [0, 64], sizes = [2, 32], strides = [1, 1]} : vector<2x96xf32> to vector<2x32xf32>
    %391 = arith.mulf %380, %390 : vector<2x32xf32>
    %392 = arith.addf %389, %391 : vector<2x32xf32>
    %393 = math.tanh %392 : vector<2x32xf32>
    %cst_139 = arith.constant 1.000000e+00 : f32
    %394 = vector.broadcast %cst_139 : f32 to vector<2x32xf32>
    %395 = arith.subf %394, %388 : vector<2x32xf32>
    %396 = arith.mulf %395, %393 : vector<2x32xf32>
    %397 = arith.mulf %388, %338 : vector<2x32xf32>
    %398 = arith.addf %396, %397 : vector<2x32xf32>
    %cst_140 = arith.constant dense<0.000000e+00> : vector<2x96xf32>
    %399 = tpu.matmul %372, %213, %cst_140 {dimension_numbers = #tpu.dot_dimension_numbers<[1], [0], [0], [1], [0, 0, 1, 1], [], []>} : vector<2x32xf32>, vector<32x96xf32>, vector<2x96xf32> -> vector<2x96xf32>
    %400 = vector.broadcast %215 : vector<1x96xf32> to vector<2x96xf32>
    %401 = arith.addf %399, %400 : vector<2x96xf32>
    %cst_141 = arith.constant dense<0.000000e+00> : vector<2x96xf32>
    %402 = tpu.matmul %398, %214, %cst_141 {dimension_numbers = #tpu.dot_dimension_numbers<[1], [0], [0], [1], [0, 0, 1, 1], [], []>} : vector<2x32xf32>, vector<32x96xf32>, vector<2x96xf32> -> vector<2x96xf32>
    %403 = vector.broadcast %216 : vector<1x96xf32> to vector<2x96xf32>
    %404 = arith.addf %402, %403 : vector<2x96xf32>
    %c6 = arith.constant 6 : index
    %c0_142 = arith.constant 0 : index
    %405 = vector.load %arg7[%c6, %c0_142] : memref<16x256xf32, #tpu.memory_space<vmem>>, vector<2x96xf32>
    %c8 = arith.constant 8 : index
    %c96_143 = arith.constant 96 : index
    %406 = vector.load %arg7[%c8, %c96_143] : memref<16x256xf32, #tpu.memory_space<vmem>>, vector<2x96xf32>
    %407 = vector.extract_strided_slice %405 {offsets = [0, 0], sizes = [2, 32], strides = [1, 1]} : vector<2x96xf32> to vector<2x32xf32>
    %408 = vector.extract_strided_slice %401 {offsets = [0, 0], sizes = [2, 32], strides = [1, 1]} : vector<2x96xf32> to vector<2x32xf32>
    %409 = arith.addf %407, %408 : vector<2x32xf32>
    %410 = arith.negf %409 : vector<2x32xf32>
    %411 = math.exp %410 : vector<2x32xf32>
    %cst_144 = arith.constant 1.000000e+00 : f32
    %412 = vector.broadcast %cst_144 : f32 to vector<2x32xf32>
    %413 = arith.addf %412, %411 : vector<2x32xf32>
    %414 = arith.divf %412, %413 : vector<2x32xf32>
    %415 = vector.extract_strided_slice %405 {offsets = [0, 32], sizes = [2, 32], strides = [1, 1]} : vector<2x96xf32> to vector<2x32xf32>
    %416 = vector.extract_strided_slice %401 {offsets = [0, 32], sizes = [2, 32], strides = [1, 1]} : vector<2x96xf32> to vector<2x32xf32>
    %417 = arith.addf %415, %416 : vector<2x32xf32>
    %418 = arith.negf %417 : vector<2x32xf32>
    %419 = math.exp %418 : vector<2x32xf32>
    %cst_145 = arith.constant 1.000000e+00 : f32
    %420 = vector.broadcast %cst_145 : f32 to vector<2x32xf32>
    %421 = arith.addf %420, %419 : vector<2x32xf32>
    %422 = arith.divf %420, %421 : vector<2x32xf32>
    %423 = vector.extract_strided_slice %405 {offsets = [0, 64], sizes = [2, 32], strides = [1, 1]} : vector<2x96xf32> to vector<2x32xf32>
    %424 = vector.extract_strided_slice %401 {offsets = [0, 64], sizes = [2, 32], strides = [1, 1]} : vector<2x96xf32> to vector<2x32xf32>
    %425 = arith.mulf %414, %424 : vector<2x32xf32>
    %426 = arith.addf %423, %425 : vector<2x32xf32>
    %427 = math.tanh %426 : vector<2x32xf32>
    %cst_146 = arith.constant 1.000000e+00 : f32
    %428 = vector.broadcast %cst_146 : f32 to vector<2x32xf32>
    %429 = arith.subf %428, %422 : vector<2x32xf32>
    %430 = arith.mulf %429, %427 : vector<2x32xf32>
    %431 = arith.mulf %422, %372 : vector<2x32xf32>
    %432 = arith.addf %430, %431 : vector<2x32xf32>
    %433 = vector.extract_strided_slice %406 {offsets = [0, 0], sizes = [2, 32], strides = [1, 1]} : vector<2x96xf32> to vector<2x32xf32>
    %434 = vector.extract_strided_slice %404 {offsets = [0, 0], sizes = [2, 32], strides = [1, 1]} : vector<2x96xf32> to vector<2x32xf32>
    %435 = arith.addf %433, %434 : vector<2x32xf32>
    %436 = arith.negf %435 : vector<2x32xf32>
    %437 = math.exp %436 : vector<2x32xf32>
    %cst_147 = arith.constant 1.000000e+00 : f32
    %438 = vector.broadcast %cst_147 : f32 to vector<2x32xf32>
    %439 = arith.addf %438, %437 : vector<2x32xf32>
    %440 = arith.divf %438, %439 : vector<2x32xf32>
    %441 = vector.extract_strided_slice %406 {offsets = [0, 32], sizes = [2, 32], strides = [1, 1]} : vector<2x96xf32> to vector<2x32xf32>
    %442 = vector.extract_strided_slice %404 {offsets = [0, 32], sizes = [2, 32], strides = [1, 1]} : vector<2x96xf32> to vector<2x32xf32>
    %443 = arith.addf %441, %442 : vector<2x32xf32>
    %444 = arith.negf %443 : vector<2x32xf32>
    %445 = math.exp %444 : vector<2x32xf32>
    %cst_148 = arith.constant 1.000000e+00 : f32
    %446 = vector.broadcast %cst_148 : f32 to vector<2x32xf32>
    %447 = arith.addf %446, %445 : vector<2x32xf32>
    %448 = arith.divf %446, %447 : vector<2x32xf32>
    %449 = vector.extract_strided_slice %406 {offsets = [0, 64], sizes = [2, 32], strides = [1, 1]} : vector<2x96xf32> to vector<2x32xf32>
    %450 = vector.extract_strided_slice %404 {offsets = [0, 64], sizes = [2, 32], strides = [1, 1]} : vector<2x96xf32> to vector<2x32xf32>
    %451 = arith.mulf %440, %450 : vector<2x32xf32>
    %452 = arith.addf %449, %451 : vector<2x32xf32>
    %453 = math.tanh %452 : vector<2x32xf32>
    %cst_149 = arith.constant 1.000000e+00 : f32
    %454 = vector.broadcast %cst_149 : f32 to vector<2x32xf32>
    %455 = arith.subf %454, %448 : vector<2x32xf32>
    %456 = arith.mulf %455, %453 : vector<2x32xf32>
    %457 = arith.mulf %448, %398 : vector<2x32xf32>
    %458 = arith.addf %456, %457 : vector<2x32xf32>
    %cst_150 = arith.constant dense<0.000000e+00> : vector<2x96xf32>
    %459 = tpu.matmul %432, %213, %cst_150 {dimension_numbers = #tpu.dot_dimension_numbers<[1], [0], [0], [1], [0, 0, 1, 1], [], []>} : vector<2x32xf32>, vector<32x96xf32>, vector<2x96xf32> -> vector<2x96xf32>
    %460 = vector.broadcast %215 : vector<1x96xf32> to vector<2x96xf32>
    %461 = arith.addf %459, %460 : vector<2x96xf32>
    %cst_151 = arith.constant dense<0.000000e+00> : vector<2x96xf32>
    %462 = tpu.matmul %458, %214, %cst_151 {dimension_numbers = #tpu.dot_dimension_numbers<[1], [0], [0], [1], [0, 0, 1, 1], [], []>} : vector<2x32xf32>, vector<32x96xf32>, vector<2x96xf32> -> vector<2x96xf32>
    %463 = vector.broadcast %216 : vector<1x96xf32> to vector<2x96xf32>
    %464 = arith.addf %462, %463 : vector<2x96xf32>
    %c8_152 = arith.constant 8 : index
    %c0_153 = arith.constant 0 : index
    %465 = vector.load %arg7[%c8_152, %c0_153] : memref<16x256xf32, #tpu.memory_space<vmem>>, vector<2x96xf32>
    %c6_154 = arith.constant 6 : index
    %c96_155 = arith.constant 96 : index
    %466 = vector.load %arg7[%c6_154, %c96_155] : memref<16x256xf32, #tpu.memory_space<vmem>>, vector<2x96xf32>
    %467 = vector.extract_strided_slice %465 {offsets = [0, 0], sizes = [2, 32], strides = [1, 1]} : vector<2x96xf32> to vector<2x32xf32>
    %468 = vector.extract_strided_slice %461 {offsets = [0, 0], sizes = [2, 32], strides = [1, 1]} : vector<2x96xf32> to vector<2x32xf32>
    %469 = arith.addf %467, %468 : vector<2x32xf32>
    %470 = arith.negf %469 : vector<2x32xf32>
    %471 = math.exp %470 : vector<2x32xf32>
    %cst_156 = arith.constant 1.000000e+00 : f32
    %472 = vector.broadcast %cst_156 : f32 to vector<2x32xf32>
    %473 = arith.addf %472, %471 : vector<2x32xf32>
    %474 = arith.divf %472, %473 : vector<2x32xf32>
    %475 = vector.extract_strided_slice %465 {offsets = [0, 32], sizes = [2, 32], strides = [1, 1]} : vector<2x96xf32> to vector<2x32xf32>
    %476 = vector.extract_strided_slice %461 {offsets = [0, 32], sizes = [2, 32], strides = [1, 1]} : vector<2x96xf32> to vector<2x32xf32>
    %477 = arith.addf %475, %476 : vector<2x32xf32>
    %478 = arith.negf %477 : vector<2x32xf32>
    %479 = math.exp %478 : vector<2x32xf32>
    %cst_157 = arith.constant 1.000000e+00 : f32
    %480 = vector.broadcast %cst_157 : f32 to vector<2x32xf32>
    %481 = arith.addf %480, %479 : vector<2x32xf32>
    %482 = arith.divf %480, %481 : vector<2x32xf32>
    %483 = vector.extract_strided_slice %465 {offsets = [0, 64], sizes = [2, 32], strides = [1, 1]} : vector<2x96xf32> to vector<2x32xf32>
    %484 = vector.extract_strided_slice %461 {offsets = [0, 64], sizes = [2, 32], strides = [1, 1]} : vector<2x96xf32> to vector<2x32xf32>
    %485 = arith.mulf %474, %484 : vector<2x32xf32>
    %486 = arith.addf %483, %485 : vector<2x32xf32>
    %487 = math.tanh %486 : vector<2x32xf32>
    %cst_158 = arith.constant 1.000000e+00 : f32
    %488 = vector.broadcast %cst_158 : f32 to vector<2x32xf32>
    %489 = arith.subf %488, %482 : vector<2x32xf32>
    %490 = arith.mulf %489, %487 : vector<2x32xf32>
    %491 = arith.mulf %482, %432 : vector<2x32xf32>
    %492 = arith.addf %490, %491 : vector<2x32xf32>
    %493 = vector.extract_strided_slice %466 {offsets = [0, 0], sizes = [2, 32], strides = [1, 1]} : vector<2x96xf32> to vector<2x32xf32>
    %494 = vector.extract_strided_slice %464 {offsets = [0, 0], sizes = [2, 32], strides = [1, 1]} : vector<2x96xf32> to vector<2x32xf32>
    %495 = arith.addf %493, %494 : vector<2x32xf32>
    %496 = arith.negf %495 : vector<2x32xf32>
    %497 = math.exp %496 : vector<2x32xf32>
    %cst_159 = arith.constant 1.000000e+00 : f32
    %498 = vector.broadcast %cst_159 : f32 to vector<2x32xf32>
    %499 = arith.addf %498, %497 : vector<2x32xf32>
    %500 = arith.divf %498, %499 : vector<2x32xf32>
    %501 = vector.extract_strided_slice %466 {offsets = [0, 32], sizes = [2, 32], strides = [1, 1]} : vector<2x96xf32> to vector<2x32xf32>
    %502 = vector.extract_strided_slice %464 {offsets = [0, 32], sizes = [2, 32], strides = [1, 1]} : vector<2x96xf32> to vector<2x32xf32>
    %503 = arith.addf %501, %502 : vector<2x32xf32>
    %504 = arith.negf %503 : vector<2x32xf32>
    %505 = math.exp %504 : vector<2x32xf32>
    %cst_160 = arith.constant 1.000000e+00 : f32
    %506 = vector.broadcast %cst_160 : f32 to vector<2x32xf32>
    %507 = arith.addf %506, %505 : vector<2x32xf32>
    %508 = arith.divf %506, %507 : vector<2x32xf32>
    %509 = vector.extract_strided_slice %466 {offsets = [0, 64], sizes = [2, 32], strides = [1, 1]} : vector<2x96xf32> to vector<2x32xf32>
    %510 = vector.extract_strided_slice %464 {offsets = [0, 64], sizes = [2, 32], strides = [1, 1]} : vector<2x96xf32> to vector<2x32xf32>
    %511 = arith.mulf %500, %510 : vector<2x32xf32>
    %512 = arith.addf %509, %511 : vector<2x32xf32>
    %513 = math.tanh %512 : vector<2x32xf32>
    %cst_161 = arith.constant 1.000000e+00 : f32
    %514 = vector.broadcast %cst_161 : f32 to vector<2x32xf32>
    %515 = arith.subf %514, %508 : vector<2x32xf32>
    %516 = arith.mulf %515, %513 : vector<2x32xf32>
    %517 = arith.mulf %508, %458 : vector<2x32xf32>
    %518 = arith.addf %516, %517 : vector<2x32xf32>
    %cst_162 = arith.constant dense<0.000000e+00> : vector<2x96xf32>
    %519 = tpu.matmul %492, %213, %cst_162 {dimension_numbers = #tpu.dot_dimension_numbers<[1], [0], [0], [1], [0, 0, 1, 1], [], []>} : vector<2x32xf32>, vector<32x96xf32>, vector<2x96xf32> -> vector<2x96xf32>
    %520 = vector.broadcast %215 : vector<1x96xf32> to vector<2x96xf32>
    %521 = arith.addf %519, %520 : vector<2x96xf32>
    %cst_163 = arith.constant dense<0.000000e+00> : vector<2x96xf32>
    %522 = tpu.matmul %518, %214, %cst_163 {dimension_numbers = #tpu.dot_dimension_numbers<[1], [0], [0], [1], [0, 0, 1, 1], [], []>} : vector<2x32xf32>, vector<32x96xf32>, vector<2x96xf32> -> vector<2x96xf32>
    %523 = vector.broadcast %216 : vector<1x96xf32> to vector<2x96xf32>
    %524 = arith.addf %522, %523 : vector<2x96xf32>
    %c10_164 = arith.constant 10 : index
    %c0_165 = arith.constant 0 : index
    %525 = vector.load %arg7[%c10_164, %c0_165] : memref<16x256xf32, #tpu.memory_space<vmem>>, vector<2x96xf32>
    %c4_166 = arith.constant 4 : index
    %c96_167 = arith.constant 96 : index
    %526 = vector.load %arg7[%c4_166, %c96_167] : memref<16x256xf32, #tpu.memory_space<vmem>>, vector<2x96xf32>
    %527 = vector.extract_strided_slice %525 {offsets = [0, 0], sizes = [2, 32], strides = [1, 1]} : vector<2x96xf32> to vector<2x32xf32>
    %528 = vector.extract_strided_slice %521 {offsets = [0, 0], sizes = [2, 32], strides = [1, 1]} : vector<2x96xf32> to vector<2x32xf32>
    %529 = arith.addf %527, %528 : vector<2x32xf32>
    %530 = arith.negf %529 : vector<2x32xf32>
    %531 = math.exp %530 : vector<2x32xf32>
    %cst_168 = arith.constant 1.000000e+00 : f32
    %532 = vector.broadcast %cst_168 : f32 to vector<2x32xf32>
    %533 = arith.addf %532, %531 : vector<2x32xf32>
    %534 = arith.divf %532, %533 : vector<2x32xf32>
    %535 = vector.extract_strided_slice %525 {offsets = [0, 32], sizes = [2, 32], strides = [1, 1]} : vector<2x96xf32> to vector<2x32xf32>
    %536 = vector.extract_strided_slice %521 {offsets = [0, 32], sizes = [2, 32], strides = [1, 1]} : vector<2x96xf32> to vector<2x32xf32>
    %537 = arith.addf %535, %536 : vector<2x32xf32>
    %538 = arith.negf %537 : vector<2x32xf32>
    %539 = math.exp %538 : vector<2x32xf32>
    %cst_169 = arith.constant 1.000000e+00 : f32
    %540 = vector.broadcast %cst_169 : f32 to vector<2x32xf32>
    %541 = arith.addf %540, %539 : vector<2x32xf32>
    %542 = arith.divf %540, %541 : vector<2x32xf32>
    %543 = vector.extract_strided_slice %525 {offsets = [0, 64], sizes = [2, 32], strides = [1, 1]} : vector<2x96xf32> to vector<2x32xf32>
    %544 = vector.extract_strided_slice %521 {offsets = [0, 64], sizes = [2, 32], strides = [1, 1]} : vector<2x96xf32> to vector<2x32xf32>
    %545 = arith.mulf %534, %544 : vector<2x32xf32>
    %546 = arith.addf %543, %545 : vector<2x32xf32>
    %547 = math.tanh %546 : vector<2x32xf32>
    %cst_170 = arith.constant 1.000000e+00 : f32
    %548 = vector.broadcast %cst_170 : f32 to vector<2x32xf32>
    %549 = arith.subf %548, %542 : vector<2x32xf32>
    %550 = arith.mulf %549, %547 : vector<2x32xf32>
    %551 = arith.mulf %542, %492 : vector<2x32xf32>
    %552 = arith.addf %550, %551 : vector<2x32xf32>
    %553 = vector.extract_strided_slice %526 {offsets = [0, 0], sizes = [2, 32], strides = [1, 1]} : vector<2x96xf32> to vector<2x32xf32>
    %554 = vector.extract_strided_slice %524 {offsets = [0, 0], sizes = [2, 32], strides = [1, 1]} : vector<2x96xf32> to vector<2x32xf32>
    %555 = arith.addf %553, %554 : vector<2x32xf32>
    %556 = arith.negf %555 : vector<2x32xf32>
    %557 = math.exp %556 : vector<2x32xf32>
    %cst_171 = arith.constant 1.000000e+00 : f32
    %558 = vector.broadcast %cst_171 : f32 to vector<2x32xf32>
    %559 = arith.addf %558, %557 : vector<2x32xf32>
    %560 = arith.divf %558, %559 : vector<2x32xf32>
    %561 = vector.extract_strided_slice %526 {offsets = [0, 32], sizes = [2, 32], strides = [1, 1]} : vector<2x96xf32> to vector<2x32xf32>
    %562 = vector.extract_strided_slice %524 {offsets = [0, 32], sizes = [2, 32], strides = [1, 1]} : vector<2x96xf32> to vector<2x32xf32>
    %563 = arith.addf %561, %562 : vector<2x32xf32>
    %564 = arith.negf %563 : vector<2x32xf32>
    %565 = math.exp %564 : vector<2x32xf32>
    %cst_172 = arith.constant 1.000000e+00 : f32
    %566 = vector.broadcast %cst_172 : f32 to vector<2x32xf32>
    %567 = arith.addf %566, %565 : vector<2x32xf32>
    %568 = arith.divf %566, %567 : vector<2x32xf32>
    %569 = vector.extract_strided_slice %526 {offsets = [0, 64], sizes = [2, 32], strides = [1, 1]} : vector<2x96xf32> to vector<2x32xf32>
    %570 = vector.extract_strided_slice %524 {offsets = [0, 64], sizes = [2, 32], strides = [1, 1]} : vector<2x96xf32> to vector<2x32xf32>
    %571 = arith.mulf %560, %570 : vector<2x32xf32>
    %572 = arith.addf %569, %571 : vector<2x32xf32>
    %573 = math.tanh %572 : vector<2x32xf32>
    %cst_173 = arith.constant 1.000000e+00 : f32
    %574 = vector.broadcast %cst_173 : f32 to vector<2x32xf32>
    %575 = arith.subf %574, %568 : vector<2x32xf32>
    %576 = arith.mulf %575, %573 : vector<2x32xf32>
    %577 = arith.mulf %568, %518 : vector<2x32xf32>
    %578 = arith.addf %576, %577 : vector<2x32xf32>
    %cst_174 = arith.constant dense<0.000000e+00> : vector<2x96xf32>
    %579 = tpu.matmul %552, %213, %cst_174 {dimension_numbers = #tpu.dot_dimension_numbers<[1], [0], [0], [1], [0, 0, 1, 1], [], []>} : vector<2x32xf32>, vector<32x96xf32>, vector<2x96xf32> -> vector<2x96xf32>
    %580 = vector.broadcast %215 : vector<1x96xf32> to vector<2x96xf32>
    %581 = arith.addf %579, %580 : vector<2x96xf32>
    %cst_175 = arith.constant dense<0.000000e+00> : vector<2x96xf32>
    %582 = tpu.matmul %578, %214, %cst_175 {dimension_numbers = #tpu.dot_dimension_numbers<[1], [0], [0], [1], [0, 0, 1, 1], [], []>} : vector<2x32xf32>, vector<32x96xf32>, vector<2x96xf32> -> vector<2x96xf32>
    %583 = vector.broadcast %216 : vector<1x96xf32> to vector<2x96xf32>
    %584 = arith.addf %582, %583 : vector<2x96xf32>
    %c12_176 = arith.constant 12 : index
    %c0_177 = arith.constant 0 : index
    %585 = vector.load %arg7[%c12_176, %c0_177] : memref<16x256xf32, #tpu.memory_space<vmem>>, vector<2x96xf32>
    %c2_178 = arith.constant 2 : index
    %c96_179 = arith.constant 96 : index
    %586 = vector.load %arg7[%c2_178, %c96_179] : memref<16x256xf32, #tpu.memory_space<vmem>>, vector<2x96xf32>
    %587 = vector.extract_strided_slice %585 {offsets = [0, 0], sizes = [2, 32], strides = [1, 1]} : vector<2x96xf32> to vector<2x32xf32>
    %588 = vector.extract_strided_slice %581 {offsets = [0, 0], sizes = [2, 32], strides = [1, 1]} : vector<2x96xf32> to vector<2x32xf32>
    %589 = arith.addf %587, %588 : vector<2x32xf32>
    %590 = arith.negf %589 : vector<2x32xf32>
    %591 = math.exp %590 : vector<2x32xf32>
    %cst_180 = arith.constant 1.000000e+00 : f32
    %592 = vector.broadcast %cst_180 : f32 to vector<2x32xf32>
    %593 = arith.addf %592, %591 : vector<2x32xf32>
    %594 = arith.divf %592, %593 : vector<2x32xf32>
    %595 = vector.extract_strided_slice %585 {offsets = [0, 32], sizes = [2, 32], strides = [1, 1]} : vector<2x96xf32> to vector<2x32xf32>
    %596 = vector.extract_strided_slice %581 {offsets = [0, 32], sizes = [2, 32], strides = [1, 1]} : vector<2x96xf32> to vector<2x32xf32>
    %597 = arith.addf %595, %596 : vector<2x32xf32>
    %598 = arith.negf %597 : vector<2x32xf32>
    %599 = math.exp %598 : vector<2x32xf32>
    %cst_181 = arith.constant 1.000000e+00 : f32
    %600 = vector.broadcast %cst_181 : f32 to vector<2x32xf32>
    %601 = arith.addf %600, %599 : vector<2x32xf32>
    %602 = arith.divf %600, %601 : vector<2x32xf32>
    %603 = vector.extract_strided_slice %585 {offsets = [0, 64], sizes = [2, 32], strides = [1, 1]} : vector<2x96xf32> to vector<2x32xf32>
    %604 = vector.extract_strided_slice %581 {offsets = [0, 64], sizes = [2, 32], strides = [1, 1]} : vector<2x96xf32> to vector<2x32xf32>
    %605 = arith.mulf %594, %604 : vector<2x32xf32>
    %606 = arith.addf %603, %605 : vector<2x32xf32>
    %607 = math.tanh %606 : vector<2x32xf32>
    %cst_182 = arith.constant 1.000000e+00 : f32
    %608 = vector.broadcast %cst_182 : f32 to vector<2x32xf32>
    %609 = arith.subf %608, %602 : vector<2x32xf32>
    %610 = arith.mulf %609, %607 : vector<2x32xf32>
    %611 = arith.mulf %602, %552 : vector<2x32xf32>
    %612 = arith.addf %610, %611 : vector<2x32xf32>
    %613 = vector.extract_strided_slice %586 {offsets = [0, 0], sizes = [2, 32], strides = [1, 1]} : vector<2x96xf32> to vector<2x32xf32>
    %614 = vector.extract_strided_slice %584 {offsets = [0, 0], sizes = [2, 32], strides = [1, 1]} : vector<2x96xf32> to vector<2x32xf32>
    %615 = arith.addf %613, %614 : vector<2x32xf32>
    %616 = arith.negf %615 : vector<2x32xf32>
    %617 = math.exp %616 : vector<2x32xf32>
    %cst_183 = arith.constant 1.000000e+00 : f32
    %618 = vector.broadcast %cst_183 : f32 to vector<2x32xf32>
    %619 = arith.addf %618, %617 : vector<2x32xf32>
    %620 = arith.divf %618, %619 : vector<2x32xf32>
    %621 = vector.extract_strided_slice %586 {offsets = [0, 32], sizes = [2, 32], strides = [1, 1]} : vector<2x96xf32> to vector<2x32xf32>
    %622 = vector.extract_strided_slice %584 {offsets = [0, 32], sizes = [2, 32], strides = [1, 1]} : vector<2x96xf32> to vector<2x32xf32>
    %623 = arith.addf %621, %622 : vector<2x32xf32>
    %624 = arith.negf %623 : vector<2x32xf32>
    %625 = math.exp %624 : vector<2x32xf32>
    %cst_184 = arith.constant 1.000000e+00 : f32
    %626 = vector.broadcast %cst_184 : f32 to vector<2x32xf32>
    %627 = arith.addf %626, %625 : vector<2x32xf32>
    %628 = arith.divf %626, %627 : vector<2x32xf32>
    %629 = vector.extract_strided_slice %586 {offsets = [0, 64], sizes = [2, 32], strides = [1, 1]} : vector<2x96xf32> to vector<2x32xf32>
    %630 = vector.extract_strided_slice %584 {offsets = [0, 64], sizes = [2, 32], strides = [1, 1]} : vector<2x96xf32> to vector<2x32xf32>
    %631 = arith.mulf %620, %630 : vector<2x32xf32>
    %632 = arith.addf %629, %631 : vector<2x32xf32>
    %633 = math.tanh %632 : vector<2x32xf32>
    %cst_185 = arith.constant 1.000000e+00 : f32
    %634 = vector.broadcast %cst_185 : f32 to vector<2x32xf32>
    %635 = arith.subf %634, %628 : vector<2x32xf32>
    %636 = arith.mulf %635, %633 : vector<2x32xf32>
    %637 = arith.mulf %628, %578 : vector<2x32xf32>
    %638 = arith.addf %636, %637 : vector<2x32xf32>
    %cst_186 = arith.constant dense<0.000000e+00> : vector<2x96xf32>
    %639 = tpu.matmul %612, %213, %cst_186 {dimension_numbers = #tpu.dot_dimension_numbers<[1], [0], [0], [1], [0, 0, 1, 1], [], []>} : vector<2x32xf32>, vector<32x96xf32>, vector<2x96xf32> -> vector<2x96xf32>
    %640 = vector.broadcast %215 : vector<1x96xf32> to vector<2x96xf32>
    %641 = arith.addf %639, %640 : vector<2x96xf32>
    %cst_187 = arith.constant dense<0.000000e+00> : vector<2x96xf32>
    %642 = tpu.matmul %638, %214, %cst_187 {dimension_numbers = #tpu.dot_dimension_numbers<[1], [0], [0], [1], [0, 0, 1, 1], [], []>} : vector<2x32xf32>, vector<32x96xf32>, vector<2x96xf32> -> vector<2x96xf32>
    %643 = vector.broadcast %216 : vector<1x96xf32> to vector<2x96xf32>
    %644 = arith.addf %642, %643 : vector<2x96xf32>
    %c14_188 = arith.constant 14 : index
    %c0_189 = arith.constant 0 : index
    %645 = vector.load %arg7[%c14_188, %c0_189] : memref<16x256xf32, #tpu.memory_space<vmem>>, vector<2x96xf32>
    %c0_190 = arith.constant 0 : index
    %c96_191 = arith.constant 96 : index
    %646 = vector.load %arg7[%c0_190, %c96_191] : memref<16x256xf32, #tpu.memory_space<vmem>>, vector<2x96xf32>
    %647 = vector.extract_strided_slice %645 {offsets = [0, 0], sizes = [2, 32], strides = [1, 1]} : vector<2x96xf32> to vector<2x32xf32>
    %648 = vector.extract_strided_slice %641 {offsets = [0, 0], sizes = [2, 32], strides = [1, 1]} : vector<2x96xf32> to vector<2x32xf32>
    %649 = arith.addf %647, %648 : vector<2x32xf32>
    %650 = arith.negf %649 : vector<2x32xf32>
    %651 = math.exp %650 : vector<2x32xf32>
    %cst_192 = arith.constant 1.000000e+00 : f32
    %652 = vector.broadcast %cst_192 : f32 to vector<2x32xf32>
    %653 = arith.addf %652, %651 : vector<2x32xf32>
    %654 = arith.divf %652, %653 : vector<2x32xf32>
    %655 = vector.extract_strided_slice %645 {offsets = [0, 32], sizes = [2, 32], strides = [1, 1]} : vector<2x96xf32> to vector<2x32xf32>
    %656 = vector.extract_strided_slice %641 {offsets = [0, 32], sizes = [2, 32], strides = [1, 1]} : vector<2x96xf32> to vector<2x32xf32>
    %657 = arith.addf %655, %656 : vector<2x32xf32>
    %658 = arith.negf %657 : vector<2x32xf32>
    %659 = math.exp %658 : vector<2x32xf32>
    %cst_193 = arith.constant 1.000000e+00 : f32
    %660 = vector.broadcast %cst_193 : f32 to vector<2x32xf32>
    %661 = arith.addf %660, %659 : vector<2x32xf32>
    %662 = arith.divf %660, %661 : vector<2x32xf32>
    %663 = vector.extract_strided_slice %645 {offsets = [0, 64], sizes = [2, 32], strides = [1, 1]} : vector<2x96xf32> to vector<2x32xf32>
    %664 = vector.extract_strided_slice %641 {offsets = [0, 64], sizes = [2, 32], strides = [1, 1]} : vector<2x96xf32> to vector<2x32xf32>
    %665 = arith.mulf %654, %664 : vector<2x32xf32>
    %666 = arith.addf %663, %665 : vector<2x32xf32>
    %667 = math.tanh %666 : vector<2x32xf32>
    %cst_194 = arith.constant 1.000000e+00 : f32
    %668 = vector.broadcast %cst_194 : f32 to vector<2x32xf32>
    %669 = arith.subf %668, %662 : vector<2x32xf32>
    %670 = arith.mulf %669, %667 : vector<2x32xf32>
    %671 = arith.mulf %662, %612 : vector<2x32xf32>
    %672 = arith.addf %670, %671 : vector<2x32xf32>
    %673 = vector.extract_strided_slice %646 {offsets = [0, 0], sizes = [2, 32], strides = [1, 1]} : vector<2x96xf32> to vector<2x32xf32>
    %674 = vector.extract_strided_slice %644 {offsets = [0, 0], sizes = [2, 32], strides = [1, 1]} : vector<2x96xf32> to vector<2x32xf32>
    %675 = arith.addf %673, %674 : vector<2x32xf32>
    %676 = arith.negf %675 : vector<2x32xf32>
    %677 = math.exp %676 : vector<2x32xf32>
    %cst_195 = arith.constant 1.000000e+00 : f32
    %678 = vector.broadcast %cst_195 : f32 to vector<2x32xf32>
    %679 = arith.addf %678, %677 : vector<2x32xf32>
    %680 = arith.divf %678, %679 : vector<2x32xf32>
    %681 = vector.extract_strided_slice %646 {offsets = [0, 32], sizes = [2, 32], strides = [1, 1]} : vector<2x96xf32> to vector<2x32xf32>
    %682 = vector.extract_strided_slice %644 {offsets = [0, 32], sizes = [2, 32], strides = [1, 1]} : vector<2x96xf32> to vector<2x32xf32>
    %683 = arith.addf %681, %682 : vector<2x32xf32>
    %684 = arith.negf %683 : vector<2x32xf32>
    %685 = math.exp %684 : vector<2x32xf32>
    %cst_196 = arith.constant 1.000000e+00 : f32
    %686 = vector.broadcast %cst_196 : f32 to vector<2x32xf32>
    %687 = arith.addf %686, %685 : vector<2x32xf32>
    %688 = arith.divf %686, %687 : vector<2x32xf32>
    %689 = vector.extract_strided_slice %646 {offsets = [0, 64], sizes = [2, 32], strides = [1, 1]} : vector<2x96xf32> to vector<2x32xf32>
    %690 = vector.extract_strided_slice %644 {offsets = [0, 64], sizes = [2, 32], strides = [1, 1]} : vector<2x96xf32> to vector<2x32xf32>
    %691 = arith.mulf %680, %690 : vector<2x32xf32>
    %692 = arith.addf %689, %691 : vector<2x32xf32>
    %693 = math.tanh %692 : vector<2x32xf32>
    %cst_197 = arith.constant 1.000000e+00 : f32
    %694 = vector.broadcast %cst_197 : f32 to vector<2x32xf32>
    %695 = arith.subf %694, %688 : vector<2x32xf32>
    %696 = arith.mulf %695, %693 : vector<2x32xf32>
    %697 = arith.mulf %688, %638 : vector<2x32xf32>
    %698 = arith.addf %696, %697 : vector<2x32xf32>
    %699 = tpu.concatenate %249, %698 in 1 : vector<2x32xf32>, vector<2x32xf32> -> vector<2x64xf32>
    %c0_198 = arith.constant 0 : index
    %c0_199 = arith.constant 0 : index
    %700 = vector.load %arg8[%c0_198, %c0_199] : memref<16x64xf32, #tpu.memory_space<vmem>>, vector<2x64xf32>
    tpu.vector_store %arg8[%c0_198, %c0_199], %699 {strides = array<i32>} : memref<16x64xf32, #tpu.memory_space<vmem>>, vector<2x64xf32>,
    %701 = tpu.concatenate %312, %638 in 1 : vector<2x32xf32>, vector<2x32xf32> -> vector<2x64xf32>
    %c2_200 = arith.constant 2 : index
    %c0_201 = arith.constant 0 : index
    %702 = vector.load %arg8[%c2_200, %c0_201] : memref<16x64xf32, #tpu.memory_space<vmem>>, vector<2x64xf32>
    tpu.vector_store %arg8[%c2_200, %c0_201], %701 {strides = array<i32>} : memref<16x64xf32, #tpu.memory_space<vmem>>, vector<2x64xf32>,
    %703 = tpu.concatenate %372, %578 in 1 : vector<2x32xf32>, vector<2x32xf32> -> vector<2x64xf32>
    %c4_202 = arith.constant 4 : index
    %c0_203 = arith.constant 0 : index
    %704 = vector.load %arg8[%c4_202, %c0_203] : memref<16x64xf32, #tpu.memory_space<vmem>>, vector<2x64xf32>
    tpu.vector_store %arg8[%c4_202, %c0_203], %703 {strides = array<i32>} : memref<16x64xf32, #tpu.memory_space<vmem>>, vector<2x64xf32>,
    %705 = tpu.concatenate %432, %518 in 1 : vector<2x32xf32>, vector<2x32xf32> -> vector<2x64xf32>
    %c6_204 = arith.constant 6 : index
    %c0_205 = arith.constant 0 : index
    %706 = vector.load %arg8[%c6_204, %c0_205] : memref<16x64xf32, #tpu.memory_space<vmem>>, vector<2x64xf32>
    tpu.vector_store %arg8[%c6_204, %c0_205], %705 {strides = array<i32>} : memref<16x64xf32, #tpu.memory_space<vmem>>, vector<2x64xf32>,
    %707 = tpu.concatenate %492, %458 in 1 : vector<2x32xf32>, vector<2x32xf32> -> vector<2x64xf32>
    %c8_206 = arith.constant 8 : index
    %c0_207 = arith.constant 0 : index
    %708 = vector.load %arg8[%c8_206, %c0_207] : memref<16x64xf32, #tpu.memory_space<vmem>>, vector<2x64xf32>
    tpu.vector_store %arg8[%c8_206, %c0_207], %707 {strides = array<i32>} : memref<16x64xf32, #tpu.memory_space<vmem>>, vector<2x64xf32>,
    %709 = tpu.concatenate %552, %398 in 1 : vector<2x32xf32>, vector<2x32xf32> -> vector<2x64xf32>
    %c10_208 = arith.constant 10 : index
    %c0_209 = arith.constant 0 : index
    %710 = vector.load %arg8[%c10_208, %c0_209] : memref<16x64xf32, #tpu.memory_space<vmem>>, vector<2x64xf32>
    tpu.vector_store %arg8[%c10_208, %c0_209], %709 {strides = array<i32>} : memref<16x64xf32, #tpu.memory_space<vmem>>, vector<2x64xf32>,
    %711 = tpu.concatenate %612, %338 in 1 : vector<2x32xf32>, vector<2x32xf32> -> vector<2x64xf32>
    %c12_210 = arith.constant 12 : index
    %c0_211 = arith.constant 0 : index
    %712 = vector.load %arg8[%c12_210, %c0_211] : memref<16x64xf32, #tpu.memory_space<vmem>>, vector<2x64xf32>
    tpu.vector_store %arg8[%c12_210, %c0_211], %711 {strides = array<i32>} : memref<16x64xf32, #tpu.memory_space<vmem>>, vector<2x64xf32>,
    %713 = tpu.concatenate %672, %278 in 1 : vector<2x32xf32>, vector<2x32xf32> -> vector<2x64xf32>
    %c14_212 = arith.constant 14 : index
    %c0_213 = arith.constant 0 : index
    %714 = vector.load %arg8[%c14_212, %c0_213] : memref<16x64xf32, #tpu.memory_space<vmem>>, vector<2x64xf32>
    tpu.vector_store %arg8[%c14_212, %c0_213], %713 {strides = array<i32>} : memref<16x64xf32, #tpu.memory_space<vmem>>, vector<2x64xf32>,
    %c0_214 = arith.constant 0 : index
    %c192 = arith.constant 192 : index
    %715 = vector.load %arg7[%c0_214, %c192] : memref<16x256xf32, #tpu.memory_space<vmem>>, vector<16x64xf32>
    %c0_215 = arith.constant 0 : index
    %c0_216 = arith.constant 0 : index
    %716 = vector.load %arg8[%c0_215, %c0_216] : memref<16x64xf32, #tpu.memory_space<vmem>>, vector<16x64xf32>
    %717 = arith.addf %716, %715 : vector<16x64xf32>
    %c704 = arith.constant 704 : index
    %c0_217 = arith.constant 0 : index
    %718 = vector.load %arg1[%c704, %c0_217] : memref<768x128xf32, #tpu.memory_space<vmem>>, vector<64x8xf32>
    %cst_218 = arith.constant dense<0.000000e+00> : vector<16x8xf32>
    %719 = tpu.matmul %717, %718, %cst_218 {dimension_numbers = #tpu.dot_dimension_numbers<[1], [0], [0], [1], [0, 0, 1, 1], [], []>} : vector<16x64xf32>, vector<64x8xf32>, vector<16x8xf32> -> vector<16x8xf32>
    %c95 = arith.constant 95 : index
    %c0_219 = arith.constant 0 : index
    %720 = vector.load %arg2[%c95, %c0_219] : memref<96x256xf32, #tpu.memory_space<vmem>>, vector<1x8xf32>
    %721 = vector.broadcast %720 : vector<1x8xf32> to vector<16x8xf32>
    %722 = arith.addf %719, %721 : vector<16x8xf32>
    %c0_220 = arith.constant 0 : index
    %c0_221 = arith.constant 0 : index
    %723 = vector.load %arg3[%c0_220, %c0_221] : memref<16x8xf32, #tpu.memory_space<vmem>>, vector<16x8xf32>
    tpu.vector_store %arg3[%c0_220, %c0_221], %722 {strides = array<i32>} : memref<16x8xf32, #tpu.memory_space<vmem>>, vector<16x8xf32>,
    return
  }
}

</mosaic_0001>

<llo_original>
// kernel: post_processor_forward.1
$region0: #{post_processor_forward.1}
  #allocation0 [shape = 'u32[]', space=smem, size = 0x4, offset = 0x4, fixed_abs, tag = 'smem constant byte address 0x4 - core index']
  #allocation1 [shape = 'u32[144,128]{1,0:T(1,128)}', space=vmem, size = 0x12000, scoped, tag = 'internal scratch']
  #allocation2 [shape = 'f32[18,128]{1,0:T(8,128)}', space=vmem, size = 0x3000, scoped, tag = 'scratch operand']
  #allocation3 [shape = 'f32[20,128]{1,0:T(8,128)}', space=vmem, size = 0x3000, scoped, tag = 'scratch operand']
  #allocation4 [shape = 'f32[20,64]{1,0:T(8,128)}', space=vmem, size = 0x3000, scoped, tag = 'scratch operand']
  #allocation5 [shape = 'f32[16,256]{1,0:T(8,128)}', space=vmem, size = 0x4000, scoped, tag = 'scratch operand']
  #allocation6 [shape = 'f32[16,64]{1,0:T(8,128)}', space=vmem, size = 0x2000, scoped, tag = 'scratch operand']
  %s0 = inlined_call_operand.vmem [shape: f32[18,16], index: 0, kind: input, shape index: {}]
  %s1 = inlined_call_operand.hbm [shape: f32[768,128], index: 1, kind: input, shape index: {}]
  %s2 = inlined_call_operand.vmem [shape: f32[96,256], index: 2, kind: input, shape index: {}]
  %s3 = inlined_call_operand.vmem [shape: f32[16,8], index: 3, kind: output, shape index: {}]
  %s4 = sld [smem:[#allocation0]]
  $region26: #{post_processor_forward.1} parent=0
    _
  %s6 = ssub.s32 1, %s4
  %s7 = scalar_select 0, %s6, %s4
  $region1: #{post_processor_forward.1} parent=0
    #allocation7 [shape = 'u8[393216]{0}', space=vmem, size = 0x60000, scoped, tag = 'input window, operand 1, single buffered']
    #allocation8 [shape = 's32[1]{0}', space=sflag, size = 0x4, scoped, tag = 'scoped memory for post_processor_forward.1']
    %8 = vsyncpa [#allocation8], 0
    // Predicated region
    $region2: #{post_processor_forward.1} parent=1 // pred_check
      _
    $region3: #{post_processor_forward.1} parent=1 // pred_check_branch
      %10 = sbr.rel (0) target = $region5
    $region4: #{post_processor_forward.1} parent=1 // pred_region
      _
    $region5: #{post_processor_forward.1} parent=1 // pred_fallthru
      _
    // Predicated region
    $region6: #{post_processor_forward.1} parent=1 // pred_check
      _
    $region7: #{post_processor_forward.1} parent=1 // pred_check_branch
      %12 = sbr.rel (0) target = $region9
    $region8: #{post_processor_forward.1} parent=1 // pred_region
      %s14 = ssub.s32 12288, 12288
      %15 = vsyncadd [#allocation8], %s14
      %s16 = sshll.u32 [#allocation7], 4
      %s17 = int_to_ptr.vmem [resolvable:$true] %s16
      %22 = dma.hbm_to_vmem [thread:$0]  %s1, 12288, %s17, [#allocation8], 128, 128, 8
    $region9: #{post_processor_forward.1} parent=1 // pred_fallthru
      _
    // Predicated region
    $region10: #{post_processor_forward.1} parent=1 // pred_check
      _
    $region11: #{post_processor_forward.1} parent=1 // pred_check_branch
      %24 = sbr.rel (0) target = $region13
    $region12: #{post_processor_forward.1} parent=1 // pred_region
      _
    $region13: #{post_processor_forward.1} parent=1 // pred_fallthru
      _
    // Predicated region
    $region14: #{post_processor_forward.1} parent=1 // pred_check
      _
    $region15: #{post_processor_forward.1} parent=1 // pred_check_branch
      %26 = sbr.rel (0) target = $region17
    $region16: #{post_processor_forward.1} parent=1 // pred_region
      %27 = dma.done [#allocation8], 12288
    $region17: #{post_processor_forward.1} parent=1 // pred_fallthru
      _
    %28 = vst [vmem:[#allocation3] sm:$0x3] 0.0
    %29 = vst [vmem:[#allocation3 + $0x12] sm:$0x3] 0.0
    %vm30 = vcmask 517120
    %31 = vst.msk [vmem:[#allocation4] sm:$0x3] %vm30, 0.0
    %32 = vst.msk [vmem:[#allocation4 + $0x12] sm:$0x3] %vm30, 0.0
    %v33 = vld [vmem:[%s0] sm:$0xff]
    %v34 = vld [vmem:[%s0 + $0x8] sm:$0xff]
    %v35 = vld [vmem:[%s0 + $0x10] sm:$0x3]
    %v36 = vld [vmem:[%s2] sm:$0xff]
    %v37 = vld [vmem:[%s2 + $0x8] sm:$0xff]
    %v38 = vld [vmem:[%s2 + $0x10] sm:$0xff]
    %v39 = vld [vmem:[%s2 + $0x18] sm:$0xff]
    %s40 = scalar_lea.vmem %s2, 160
    %v41 = vld [vmem:[%s40] ss:$8 sm:$0x3]
    %v43 = vlaneseq
    %v44 = vshrl.u32 %v43, 7
    %v45 = vsub.s32 0, %v44
    %v46 = vrot.slane %v41, %v45
    %v47 = vlaneseq
    %v48 = vshrl.u32 %v47, 7
    %v49 = vsub.s32 1, %v48
    %v50 = vrot.slane %v41, %v49
    %vm53 = vcmask 130048
    %v55 = vsel %vm53, %v33, 0
    %v58 = vsel %vm53, %v34, 0
    %v61 = vsel %vm53, %v35, 0
    %63 = vmatprep.subr.mxu0 %v37
    %64 = vmatpush1.msra.mxu0 %v36
    %65 = vmatprep.subr.mxu0 %v39
    %66 = vmatpush1.msra.mxu0 %v38
    %67 = vmatprep.subr.mxu0 0.0
    %68 = vmatpush1.msra.mxu0 0.0
    %69 = vmatprep.subr.mxu0 0.0
    %70 = vmatpush1.msra.mxu0 0.0
    %71 = vmatprep.subr.mxu0 0.0
    %72 = vmatpush1.msra.mxu0 0.0
    %73 = vmatprep.subr.mxu0 0.0
    %74 = vmatpush1.msra.mxu0 0.0
    %75 = vmatprep.subr.mxu0 0.0
    %76 = vmatpush1.msra.mxu0 0.0
    %77 = vmatprep.subr.mxu0 0.0
    %78 = vmatpush1.msra.mxu0 0.0
    %79 = vmatprep.subr.mxu0 0.0
    %80 = vmatpush1.msra.mxu0 0.0
    %81 = vmatprep.subr.mxu0 0.0
    %82 = vmatpush1.msra.mxu0 0.0
    %83 = vmatprep.subr.mxu0 0.0
    %84 = vmatpush1.msra.mxu0 0.0
    %85 = vmatprep.subr.mxu0 0.0
    %86 = vmatpush1.msra.mxu0 0.0
    %87 = vmatprep.subr.mxu0 0.0
    %88 = vmatpush1.msra.mxu0 0.0
    %89 = vmatprep.subr.mxu0 0.0
    %90 = vmatpush1.msra.mxu0 0.0
    %91 = vmatprep.subr.mxu0 0.0
    %92 = vmatpush1.msra.mxu0 0.0
    %93 = vmatprep.subr.mxu0 0.0
    %94 = vmatpush1.msra.mxu0 0.0
    %95 = vmatprep.subr.mxu0 0.0
    %96 = vmatpush1.msra.mxu0 0.0
    %97 = vmatprep.subr.mxu0 0.0
    %98 = vmatpush1.msra.mxu0 0.0
    %99 = vmatprep.subr.mxu0 0.0
    %100 = vmatpush1.msra.mxu0 0.0
    %101 = vmatprep.subr.mxu0 0.0
    %102 = vmatpush1.msra.mxu0 0.0
    %103 = vmatprep.subr.mxu0 0.0
    %104 = vmatpush1.msra.mxu0 0.0
    %105 = vmatprep.subr.mxu0 0.0
    %106 = vmatpush1.msra.mxu0 0.0
    %107 = vmatprep.subr.mxu0 0.0
    %108 = vmatpush1.msra.mxu0 0.0
    %109 = vmatprep.subr.mxu0 0.0
    %110 = vmatpush1.msra.mxu0 0.0
    %111 = vmatprep.subr.mxu0 0.0
    %112 = vmatpush1.msra.mxu0 0.0
    %113 = vmatprep.subr.mxu0 0.0
    %114 = vmatpush1.msra.mxu0 0.0
    %115 = vmatprep.subr.mxu0 0.0
    %116 = vmatpush1.msra.mxu0 0.0
    %117 = vmatprep.subr.mxu0 0.0
    %118 = vmatpush1.msra.mxu0 0.0
    %119 = vmatprep.subr.mxu0 0.0
    %120 = vmatpush1.msra.mxu0 0.0
    %121 = vmatprep.subr.mxu0 0.0
    %122 = vmatpush1.msra.mxu0 0.0
    %123 = vmatprep.subr.mxu0 0.0
    %124 = vmatpush1.msra.mxu0 0.0
    %125 = vmatprep.subr.mxu0 0.0
    %126 = vmatpush1.msra.mxu0 0.0
    %127 = vmatprep.mubr.f32.mxu0 0.0
    %128 = vmatmul.mubr.f32.gmra.mrb[0].mxu0 %v55
    %v129 = vpop.f32.mrb[0].mxu0
    %v130 = vadd.f32 %v46, %v129
    %v131 = vpop.f32.mrb[0].mxu0
    %v132 = vadd.f32 %v50, %v131
    %133 = vmatprep.mubr.f32.mxu0 0.0
    %134 = vmatmul.mubr.f32.gmra.mrb[0].mxu0 %v58
    %v135 = vpop.f32.mrb[0].mxu0
    %v136 = vadd.f32 %v46, %v135
    %v137 = vpop.f32.mrb[0].mxu0
    %v138 = vadd.f32 %v50, %v137
    %139 = vmatprep.mubr.f32.mxu0 0.0
    %140 = vmatmul.mubr.f32.gmra.mrb[0].mxu0 %v61
    %v141 = vpop.f32.mrb[0].mxu0
    %v142 = vadd.f32 %v46, %v141
    %v143 = vpop.f32.mrb[0].mxu0
    %144 = vdwg.mxu0
    %v145 = vadd.f32 %v130, %v136
    %vm146 = vcmask 1041408
    %v147 = vsel %vm146, %v142, 0.0
    %v148 = vadd.f32 %v145, %v147
    %v149 = vrot.slane %v148, 4
    %v150 = vadd.f32 %v148, %v149
    %v151 = vrot.slane %v150, 2
    %v152 = vadd.f32 %v150, %v151
    %v153 = vrot.slane %v152, 1
    %v154 = vadd.f32 %v152, %v153
    %v155 = vrcp.pop 18.0
    %v156 = vmul.f32 %v154, %v155
    %v157 = vsub.f32 %v130, %v156
    %v158 = vsub.f32 %v136, %v156
    %v159 = vsub.f32 %v142, %v156
    %v160 = vmul.f32 %v157, %v157
    %v161 = vmul.f32 %v158, %v158
    %v162 = vmul.f32 %v159, %v159
    %v163 = vadd.f32 %v160, %v161
    %v164 = vsel %vm146, %v162, 0.0
    %v165 = vadd.f32 %v163, %v164
    %v166 = vrot.slane %v165, 4
    %v167 = vadd.f32 %v165, %v166
    %v168 = vrot.slane %v167, 2
    %v169 = vadd.f32 %v167, %v168
    %v170 = vrot.slane %v169, 1
    %v171 = vadd.f32 %v169, %v170
    %v172 = vmul.f32 %v171, %v155
    %v173 = vadd.f32 %v172, 1e-05
    %v174 = vrsqrt.pop %v173
    %v175 = vmul.f32 %v157, %v174
    %v176 = vmul.f32 %v158, %v174
    %v177 = vmul.f32 %v159, %v174
    %v178 = vld [vmem:[%s2 + $0xa1] ss:$0 sm:$0xff]
    %v179 = vmul.f32 %v175, %v178
    %v180 = vmul.f32 %v176, %v178
    %v181 = vmul.f32 %v177, %v178
    %v182 = vld [vmem:[%s2 + $0xa2] ss:$0 sm:$0xff]
    %v183 = vadd.f32 %v179, %v182
    %v184 = vadd.f32 %v180, %v182
    %v185 = vadd.f32 %v181, %v182
    %v186 = vmax.f32 %v183, 0.0
    %v187 = vmax.f32 %v184, 0.0
    %v188 = vmax.f32 %v185, 0.0
    %189 = vst [vmem:[#allocation2] sm:$0xff] %v186
    %190 = vst [vmem:[#allocation2 + $0x8] sm:$0xff] %v187
    %191 = vst [vmem:[#allocation2 + $0x10] sm:$0x3] %v188
    %v192 = vld [vmem:[#allocation2] sm:$0xff]
    %v193 = vld [vmem:[#allocation2 + $0x8] sm:$0xff]
    %v194 = vld [vmem:[#allocation2 + $0x2] sm:$0xff]
    %v195 = vld [vmem:[#allocation2 + $0xa] sm:$0xff]
    %v196 = vmax.f32 %v192, %v194
    %v197 = vmax.f32 %v193, %v195
    %198 = vst [vmem:[#allocation3 + $0x2] sm:$0xff] %v196
    %199 = vst [vmem:[#allocation3 + $0xa] sm:$0xff] %v197
    %v200 = vld [vmem:[#allocation7] sm:$0xff]
    %v201 = vld [vmem:[#allocation7 + $0x8] sm:$0xff]
    %v202 = vld [vmem:[#allocation7 + $0x10] sm:$0xff]
    %v203 = vld [vmem:[#allocation7 + $0x18] sm:$0xff]
    %v204 = vld [vmem:[#allocation7 + $0x20] sm:$0xff]
    %v205 = vld [vmem:[#allocation7 + $0x28] sm:$0xff]
    %v206 = vld [vmem:[#allocation7 + $0x30] sm:$0xff]
    %v207 = vld [vmem:[#allocation7 + $0x38] sm:$0xff]
    %v208 = vld [vmem:[#allocation7 + $0x40] sm:$0xff]
    %v209 = vld [vmem:[#allocation7 + $0x48] sm:$0xff]
    %v210 = vld [vmem:[#allocation7 + $0x50] sm:$0xff]
    %v211 = vld [vmem:[#allocation7 + $0x58] sm:$0xff]
    %v212 = vld [vmem:[#allocation7 + $0x60] sm:$0xff]
    %v213 = vld [vmem:[#allocation7 + $0x68] sm:$0xff]
    %v214 = vld [vmem:[#allocation7 + $0x70] sm:$0xff]
    %v215 = vld [vmem:[#allocation7 + $0x78] sm:$0xff]
    %v216 = vld [vmem:[#allocation7 + $0x80] sm:$0xff]
    %v217 = vld [vmem:[#allocation7 + $0x88] sm:$0xff]
    %v218 = vld [vmem:[#allocation7 + $0x90] sm:$0xff]
    %v219 = vld [vmem:[#allocation7 + $0x98] sm:$0xff]
    %v220 = vld [vmem:[#allocation7 + $0xa0] sm:$0xff]
    %v221 = vld [vmem:[#allocation7 + $0xa8] sm:$0xff]
    %v222 = vld [vmem:[#allocation7 + $0xb0] sm:$0xff]
    %v223 = vld [vmem:[#allocation7 + $0xb8] sm:$0xff]
    %v224 = vld [vmem:[#allocation7 + $0xc0] sm:$0xff]
    %v225 = vld [vmem:[#allocation7 + $0xc8] sm:$0xff]
    %v226 = vld [vmem:[#allocation7 + $0xd0] sm:$0xff]
    %v227 = vld [vmem:[#allocation7 + $0xd8] sm:$0xff]
    %v228 = vld [vmem:[#allocation7 + $0xe0] sm:$0xff]
    %v229 = vld [vmem:[#allocation7 + $0xe8] sm:$0xff]
    %v230 = vld [vmem:[#allocation7 + $0xf0] sm:$0xff]
    %v231 = vld [vmem:[#allocation7 + $0xf8] sm:$0xff]
    %v232 = vld [vmem:[#allocation7 + $0x100] sm:$0xff]
    %v233 = vld [vmem:[#allocation7 + $0x108] sm:$0xff]
    %v234 = vld [vmem:[#allocation7 + $0x110] sm:$0xff]
    %v235 = vld [vmem:[#allocation7 + $0x118] sm:$0xff]
    %v236 = vld [vmem:[#allocation7 + $0x120] sm:$0xff]
    %v237 = vld [vmem:[#allocation7 + $0x128] sm:$0xff]
    %v238 = vld [vmem:[#allocation7 + $0x130] sm:$0xff]
    %v239 = vld [vmem:[#allocation7 + $0x138] sm:$0xff]
    %v240 = vld [vmem:[#allocation7 + $0x140] sm:$0xff]
    %v241 = vld [vmem:[#allocation7 + $0x148] sm:$0xff]
    %v242 = vld [vmem:[#allocation7 + $0x150] sm:$0xff]
    %v243 = vld [vmem:[#allocation7 + $0x158] sm:$0xff]
    %v244 = vld [vmem:[#allocation7 + $0x160] sm:$0xff]
    %v245 = vld [vmem:[#allocation7 + $0x168] sm:$0xff]
    %v246 = vld [vmem:[#allocation7 + $0x170] sm:$0xff]
    %v247 = vld [vmem:[#allocation7 + $0x178] sm:$0xff]
    %v248 = vld [vmem:[#allocation3] sm:$0xff]
    %v249 = vld [vmem:[#allocation3 + $0x8] sm:$0xff]
    %v250 = vld [vmem:[#allocation3 + $0x2] sm:$0xff]
    %v251 = vld [vmem:[#allocation3 + $0xa] sm:$0xff]
    %252 = vmatprep.subr.mxu0 0.0
    %253 = vmatpush1.msra.mxu0 %v216
    %254 = vmatprep.subr.mxu0 0.0
    %255 = vmatpush1.msra.mxu0 %v217
    %256 = vmatprep.subr.mxu0 0.0
    %257 = vmatpush1.msra.mxu0 %v218
    %258 = vmatprep.subr.mxu0 0.0
    %259 = vmatpush1.msra.mxu0 %v219
    %260 = vmatprep.subr.mxu0 0.0
    %261 = vmatpush1.msra.mxu0 %v220
    %262 = vmatprep.subr.mxu0 0.0
    %263 = vmatpush1.msra.mxu0 %v221
    %264 = vmatprep.subr.mxu0 0.0
    %265 = vmatpush1.msra.mxu0 %v222
    %266 = vmatprep.subr.mxu0 0.0
    %267 = vmatpush1.msra.mxu0 %v223
    %268 = vmatprep.subr.mxu0 0.0
    %269 = vmatpush1.msra.mxu0 %v224
    %270 = vmatprep.subr.mxu0 0.0
    %271 = vmatpush1.msra.mxu0 %v225
    %272 = vmatprep.subr.mxu0 0.0
    %273 = vmatpush1.msra.mxu0 %v226
    %274 = vmatprep.subr.mxu0 0.0
    %275 = vmatpush1.msra.mxu0 %v227
    %276 = vmatprep.subr.mxu0 0.0
    %277 = vmatpush1.msra.mxu0 %v228
    %278 = vmatprep.subr.mxu0 0.0
    %279 = vmatpush1.msra.mxu0 %v229
    %280 = vmatprep.subr.mxu0 0.0
    %281 = vmatpush1.msra.mxu0 %v230
    %282 = vmatprep.subr.mxu0 0.0
    %283 = vmatpush1.msra.mxu0 %v231
    %284 = vmatprep.subr.mxu0 0.0
    %285 = vmatpush1.msra.mxu0 0.0
    %286 = vmatprep.subr.mxu0 0.0
    %287 = vmatpush1.msra.mxu0 0.0
    %288 = vmatprep.subr.mxu0 0.0
    %289 = vmatpush1.msra.mxu0 0.0
    %290 = vmatprep.subr.mxu0 0.0
    %291 = vmatpush1.msra.mxu0 0.0
    %292 = vmatprep.subr.mxu0 0.0
    %293 = vmatpush1.msra.mxu0 0.0
    %294 = vmatprep.subr.mxu0 0.0
    %295 = vmatpush1.msra.mxu0 0.0
    %296 = vmatprep.subr.mxu0 0.0
    %297 = vmatpush1.msra.mxu0 0.0
    %298 = vmatprep.subr.mxu0 0.0
    %299 = vmatpush1.msra.mxu0 0.0
    %300 = vmatprep.subr.mxu0 0.0
    %301 = vmatpush1.msra.mxu0 0.0
    %302 = vmatprep.subr.mxu0 0.0
    %303 = vmatpush1.msra.mxu0 0.0
    %304 = vmatprep.subr.mxu0 0.0
    %305 = vmatpush1.msra.mxu0 0.0
    %306 = vmatprep.subr.mxu0 0.0
    %307 = vmatpush1.msra.mxu0 0.0
    %308 = vmatprep.subr.mxu0 0.0
    %309 = vmatpush1.msra.mxu0 0.0
    %310 = vmatprep.subr.mxu0 0.0
    %311 = vmatpush1.msra.mxu0 0.0
    %312 = vmatprep.subr.mxu0 0.0
    %313 = vmatpush1.msra.mxu0 0.0
    %314 = vmatprep.subr.mxu0 0.0
    %315 = vmatpush1.msra.mxu0 0.0
    %316 = vmatprep.mubr.f32.mxu0 0.0
    %317 = vmatmul.mubr.f32.gmra.mrb[0].mxu0 %v250
    %v318 = vpop.f32.mrb[0].mxu0
    %v319 = vadd.f32 0.0, %v318
    %v320 = vpop.f32.mrb[0].mxu0
    %321 = vmatprep.mubr.f32.mxu0 0.0
    %322 = vmatmul.mubr.f32.gmra.mrb[0].mxu0 %v251
    %v323 = vpop.f32.mrb[0].mxu0
    %v324 = vadd.f32 0.0, %v323
    %v325 = vpop.f32.mrb[0].mxu0
    %326 = vdwg.mxu0
    %327 = vmatprep.subr.mxu0 0.0
    %328 = vmatpush1.msra.mxu0 %v200
    %329 = vmatprep.subr.mxu0 0.0
    %330 = vmatpush1.msra.mxu0 %v201
    %331 = vmatprep.subr.mxu0 0.0
    %332 = vmatpush1.msra.mxu0 %v202
    %333 = vmatprep.subr.mxu0 0.0
    %334 = vmatpush1.msra.mxu0 %v203
    %335 = vmatprep.subr.mxu0 0.0
    %336 = vmatpush1.msra.mxu0 %v204
    %337 = vmatprep.subr.mxu0 0.0
    %338 = vmatpush1.msra.mxu0 %v205
    %339 = vmatprep.subr.mxu0 0.0
    %340 = vmatpush1.msra.mxu0 %v206
    %341 = vmatprep.subr.mxu0 0.0
    %342 = vmatpush1.msra.mxu0 %v207
    %343 = vmatprep.subr.mxu0 0.0
    %344 = vmatpush1.msra.mxu0 %v208
    %345 = vmatprep.subr.mxu0 0.0
    %346 = vmatpush1.msra.mxu0 %v209
    %347 = vmatprep.subr.mxu0 0.0
    %348 = vmatpush1.msra.mxu0 %v210
    %349 = vmatprep.subr.mxu0 0.0
    %350 = vmatpush1.msra.mxu0 %v211
    %351 = vmatprep.subr.mxu0 0.0
    %352 = vmatpush1.msra.mxu0 %v212
    %353 = vmatprep.subr.mxu0 0.0
    %354 = vmatpush1.msra.mxu0 %v213
    %355 = vmatprep.subr.mxu0 0.0
    %356 = vmatpush1.msra.mxu0 %v214
    %357 = vmatprep.subr.mxu0 0.0
    %358 = vmatpush1.msra.mxu0 %v215
    %359 = vmatprep.subr.mxu0 0.0
    %360 = vmatpush1.msra.mxu0 0.0
    %361 = vmatprep.subr.mxu0 0.0
    %362 = vmatpush1.msra.mxu0 0.0
    %363 = vmatprep.subr.mxu0 0.0
    %364 = vmatpush1.msra.mxu0 0.0
    %365 = vmatprep.subr.mxu0 0.0
    %366 = vmatpush1.msra.mxu0 0.0
    %367 = vmatprep.subr.mxu0 0.0
    %368 = vmatpush1.msra.mxu0 0.0
    %369 = vmatprep.subr.mxu0 0.0
    %370 = vmatpush1.msra.mxu0 0.0
    %371 = vmatprep.subr.mxu0 0.0
    %372 = vmatpush1.msra.mxu0 0.0
    %373 = vmatprep.subr.mxu0 0.0
    %374 = vmatpush1.msra.mxu0 0.0
    %375 = vmatprep.subr.mxu0 0.0
    %376 = vmatpush1.msra.mxu0 0.0
    %377 = vmatprep.subr.mxu0 0.0
    %378 = vmatpush1.msra.mxu0 0.0
    %379 = vmatprep.subr.mxu0 0.0
    %380 = vmatpush1.msra.mxu0 0.0
    %381 = vmatprep.subr.mxu0 0.0
    %382 = vmatpush1.msra.mxu0 0.0
    %383 = vmatprep.subr.mxu0 0.0
    %384 = vmatpush1.msra.mxu0 0.0
    %385 = vmatprep.subr.mxu0 0.0
    %386 = vmatpush1.msra.mxu0 0.0
    %387 = vmatprep.subr.mxu0 0.0
    %388 = vmatpush1.msra.mxu0 0.0
    %389 = vmatprep.subr.mxu0 0.0
    %390 = vmatpush1.msra.mxu0 0.0
    %391 = vmatprep.mubr.f32.mxu0 0.0
    %392 = vmatmul.mubr.f32.gmra.mrb[0].mxu0 %v248
    %v393 = vpop.f32.mrb[0].mxu0
    %v394 = vadd.f32 %v319, %v393
    %v395 = vpop.f32.mrb[0].mxu0
    %396 = vmatprep.mubr.f32.mxu0 0.0
    %397 = vmatmul.mubr.f32.gmra.mrb[0].mxu0 %v249
    %v398 = vpop.f32.mrb[0].mxu0
    %v399 = vadd.f32 %v324, %v398
    %v400 = vpop.f32.mrb[0].mxu0
    %401 = vdwg.mxu0
    %v402 = vld [vmem:[#allocation3 + $0x4] sm:$0xff]
    %v403 = vld [vmem:[#allocation3 + $0xc] sm:$0xff]
    %404 = vmatprep.subr.mxu0 0.0
    %405 = vmatpush1.msra.mxu0 %v232
    %406 = vmatprep.subr.mxu0 0.0
    %407 = vmatpush1.msra.mxu0 %v233
    %408 = vmatprep.subr.mxu0 0.0
    %409 = vmatpush1.msra.mxu0 %v234
    %410 = vmatprep.subr.mxu0 0.0
    %411 = vmatpush1.msra.mxu0 %v235
    %412 = vmatprep.subr.mxu0 0.0
    %413 = vmatpush1.msra.mxu0 %v236
    %414 = vmatprep.subr.mxu0 0.0
    %415 = vmatpush1.msra.mxu0 %v237
    %416 = vmatprep.subr.mxu0 0.0
    %417 = vmatpush1.msra.mxu0 %v238
    %418 = vmatprep.subr.mxu0 0.0
    %419 = vmatpush1.msra.mxu0 %v239
    %420 = vmatprep.subr.mxu0 0.0
    %421 = vmatpush1.msra.mxu0 %v240
    %422 = vmatprep.subr.mxu0 0.0
    %423 = vmatpush1.msra.mxu0 %v241
    %424 = vmatprep.subr.mxu0 0.0
    %425 = vmatpush1.msra.mxu0 %v242
    %426 = vmatprep.subr.mxu0 0.0
    %427 = vmatpush1.msra.mxu0 %v243
    %428 = vmatprep.subr.mxu0 0.0
    %429 = vmatpush1.msra.mxu0 %v244
    %430 = vmatprep.subr.mxu0 0.0
    %431 = vmatpush1.msra.mxu0 %v245
    %432 = vmatprep.subr.mxu0 0.0
    %433 = vmatpush1.msra.mxu0 %v246
    %434 = vmatprep.subr.mxu0 0.0
    %435 = vmatpush1.msra.mxu0 %v247
    %436 = vmatprep.subr.mxu0 0.0
    %437 = vmatpush1.msra.mxu0 0.0
    %438 = vmatprep.subr.mxu0 0.0
    %439 = vmatpush1.msra.mxu0 0.0
    %440 = vmatprep.subr.mxu0 0.0
    %441 = vmatpush1.msra.mxu0 0.0
    %442 = vmatprep.subr.mxu0 0.0
    %443 = vmatpush1.msra.mxu0 0.0
    %444 = vmatprep.subr.mxu0 0.0
    %445 = vmatpush1.msra.mxu0 0.0
    %446 = vmatprep.subr.mxu0 0.0
    %447 = vmatpush1.msra.mxu0 0.0
    %448 = vmatprep.subr.mxu0 0.0
    %449 = vmatpush1.msra.mxu0 0.0
    %450 = vmatprep.subr.mxu0 0.0
    %451 = vmatpush1.msra.mxu0 0.0
    %452 = vmatprep.subr.mxu0 0.0
    %453 = vmatpush1.msra.mxu0 0.0
    %454 = vmatprep.subr.mxu0 0.0
    %455 = vmatpush1.msra.mxu0 0.0
    %456 = vmatprep.subr.mxu0 0.0
    %457 = vmatpush1.msra.mxu0 0.0
    %458 = vmatprep.subr.mxu0 0.0
    %459 = vmatpush1.msra.mxu0 0.0
    %460 = vmatprep.subr.mxu0 0.0
    %461 = vmatpush1.msra.mxu0 0.0
    %462 = vmatprep.subr.mxu0 0.0
    %463 = vmatpush1.msra.mxu0 0.0
    %464 = vmatprep.subr.mxu0 0.0
    %465 = vmatpush1.msra.mxu0 0.0
    %466 = vmatprep.subr.mxu0 0.0
    %467 = vmatpush1.msra.mxu0 0.0
    %468 = vmatprep.mubr.f32.mxu0 0.0
    %469 = vmatmul.mubr.f32.gmra.mrb[0].mxu0 %v402
    %v470 = vpop.f32.mrb[0].mxu0
    %v471 = vadd.f32 0.0, %v470
    %v472 = vpop.f32.mrb[0].mxu0
    %473 = vmatprep.mubr.f32.mxu0 0.0
    %474 = vmatmul.mubr.f32.gmra.mrb[0].mxu0 %v403
    %v475 = vpop.f32.mrb[0].mxu0
    %v476 = vadd.f32 0.0, %v475
    %v477 = vpop.f32.mrb[0].mxu0
    %478 = vdwg.mxu0
    %v479 = vadd.f32 %v394, %v471
    %v480 = vadd.f32 %v399, %v476
    %v481 = vld [vmem:[%s2 + $0xa3] ss:$0 sm:$0xff]
    %v482 = vadd.f32 %v479, %v481
    %v483 = vadd.f32 %v480, %v481
    %vm484 = vcmask 523264
    %v485 = vsel %vm484, %v482, 0.0
    %v486 = vsel %vm484, %v483, 0.0
    %v487 = vadd.f32 %v485, %v486
    %v488 = vrot.slane %v487, 4
    %v489 = vadd.f32 %v487, %v488
    %v490 = vrot.slane %v489, 2
    %v491 = vadd.f32 %v489, %v490
    %v492 = vrot.slane %v491, 1
    %v493 = vadd.f32 %v491, %v492
    %v494 = vrcp.pop 16.0
    %v495 = vmul.f32 %v493, %v494
    %v496 = vsub.f32 %v482, %v495
    %v497 = vsub.f32 %v483, %v495
    %v498 = vmul.f32 %v496, %v496
    %v499 = vmul.f32 %v497, %v497
    %v500 = vsel %vm484, %v498, 0.0
    %v501 = vsel %vm484, %v499, 0.0
    %v502 = vadd.f32 %v500, %v501
    %v503 = vrot.slane %v502, 4
    %v504 = vadd.f32 %v502, %v503
    %v505 = vrot.slane %v504, 2
    %v506 = vadd.f32 %v504, %v505
    %v507 = vrot.slane %v506, 1
    %v508 = vadd.f32 %v506, %v507
    %v509 = vmul.f32 %v508, %v494
    %v510 = vadd.f32 %v509, 1e-05
    %v511 = vrsqrt.pop %v510
    %v512 = vmul.f32 %v496, %v511
    %v513 = vmul.f32 %v497, %v511
    %v514 = vld [vmem:[%s2 + $0xa4] ss:$0 sm:$0xff]
    %v515 = vmul.f32 %v512, %v514
    %v516 = vmul.f32 %v513, %v514
    %v517 = vld [vmem:[%s2 + $0xa5] ss:$0 sm:$0xff]
    %v518 = vadd.f32 %v515, %v517
    %v519 = vadd.f32 %v516, %v517
    %v520 = vmax.f32 %v518, 0.0
    %v521 = vmax.f32 %v519, 0.0
    %522 = vst.msk [vmem:[#allocation4 + $0x2] sm:$0xff] %vm484, %v520
    %523 = vst.msk [vmem:[#allocation4 + $0xa] sm:$0xff] %vm484, %v521
    %v524 = vld [vmem:[#allocation7 + $0x180] sm:$0xff]
    %v525 = vld [vmem:[#allocation7 + $0x188] sm:$0xff]
    %v526 = vld [vmem:[#allocation7 + $0x190] sm:$0xff]
    %v527 = vld [vmem:[#allocation7 + $0x198] sm:$0xff]
    %v528 = vld [vmem:[#allocation7 + $0x1a0] sm:$0xff]
    %v529 = vld [vmem:[#allocation7 + $0x1a8] sm:$0xff]
    %v530 = vld [vmem:[#allocation7 + $0x1b0] sm:$0xff]
    %v531 = vld [vmem:[#allocation7 + $0x1b8] sm:$0xff]
    %v532 = vld [vmem:[#allocation7 + $0x1c0] sm:$0xff]
    %v533 = vld [vmem:[#allocation7 + $0x1c8] sm:$0xff]
    %v534 = vld [vmem:[#allocation7 + $0x1d0] sm:$0xff]
    %v535 = vld [vmem:[#allocation7 + $0x1d8] sm:$0xff]
    %v536 = vld [vmem:[#allocation7 + $0x1e0] sm:$0xff]
    %v537 = vld [vmem:[#allocation7 + $0x1e8] sm:$0xff]
    %v538 = vld [vmem:[#allocation7 + $0x1f0] sm:$0xff]
    %v539 = vld [vmem:[#allocation7 + $0x1f8] sm:$0xff]
    %v540 = vld [vmem:[#allocation7 + $0x200] sm:$0xff]
    %v541 = vld [vmem:[#allocation7 + $0x208] sm:$0xff]
    %v542 = vld [vmem:[#allocation7 + $0x210] sm:$0xff]
    %v543 = vld [vmem:[#allocation7 + $0x218] sm:$0xff]
    %v544 = vld [vmem:[#allocation7 + $0x220] sm:$0xff]
    %v545 = vld [vmem:[#allocation7 + $0x228] sm:$0xff]
    %v546 = vld [vmem:[#allocation7 + $0x230] sm:$0xff]
    %v547 = vld [vmem:[#allocation7 + $0x238] sm:$0xff]
    %v548 = vld [vmem:[#allocation4] sm:$0xff]
    %v549 = vld [vmem:[#allocation4 + $0x8] sm:$0xff]
    %v550 = vld [vmem:[#allocation4 + $0x2] sm:$0xff]
    %v551 = vld [vmem:[#allocation4 + $0xa] sm:$0xff]
    %v553 = vsel %vm484, %v550, 0
    %v556 = vsel %vm484, %v551, 0
    %558 = vmatprep.subr.mxu0 0.0
    %559 = vmatpush1.msra.mxu0 %v532
    %560 = vmatprep.subr.mxu0 0.0
    %561 = vmatpush1.msra.mxu0 %v533
    %562 = vmatprep.subr.mxu0 0.0
    %563 = vmatpush1.msra.mxu0 %v534
    %564 = vmatprep.subr.mxu0 0.0
    %565 = vmatpush1.msra.mxu0 %v535
    %566 = vmatprep.subr.mxu0 0.0
    %567 = vmatpush1.msra.mxu0 %v536
    %568 = vmatprep.subr.mxu0 0.0
    %569 = vmatpush1.msra.mxu0 %v537
    %570 = vmatprep.subr.mxu0 0.0
    %571 = vmatpush1.msra.mxu0 %v538
    %572 = vmatprep.subr.mxu0 0.0
    %573 = vmatpush1.msra.mxu0 %v539
    %574 = vmatprep.subr.mxu0 0.0
    %575 = vmatpush1.msra.mxu0 0.0
    %576 = vmatprep.subr.mxu0 0.0
    %577 = vmatpush1.msra.mxu0 0.0
    %578 = vmatprep.subr.mxu0 0.0
    %579 = vmatpush1.msra.mxu0 0.0
    %580 = vmatprep.subr.mxu0 0.0
    %581 = vmatpush1.msra.mxu0 0.0
    %582 = vmatprep.subr.mxu0 0.0
    %583 = vmatpush1.msra.mxu0 0.0
    %584 = vmatprep.subr.mxu0 0.0
    %585 = vmatpush1.msra.mxu0 0.0
    %586 = vmatprep.subr.mxu0 0.0
    %587 = vmatpush1.msra.mxu0 0.0
    %588 = vmatprep.subr.mxu0 0.0
    %589 = vmatpush1.msra.mxu0 0.0
    %590 = vmatprep.subr.mxu0 0.0
    %591 = vmatpush1.msra.mxu0 0.0
    %592 = vmatprep.subr.mxu0 0.0
    %593 = vmatpush1.msra.mxu0 0.0
    %594 = vmatprep.subr.mxu0 0.0
    %595 = vmatpush1.msra.mxu0 0.0
    %596 = vmatprep.subr.mxu0 0.0
    %597 = vmatpush1.msra.mxu0 0.0
    %598 = vmatprep.subr.mxu0 0.0
    %599 = vmatpush1.msra.mxu0 0.0
    %600 = vmatprep.subr.mxu0 0.0
    %601 = vmatpush1.msra.mxu0 0.0
    %602 = vmatprep.subr.mxu0 0.0
    %603 = vmatpush1.msra.mxu0 0.0
    %604 = vmatprep.subr.mxu0 0.0
    %605 = vmatpush1.msra.mxu0 0.0
    %606 = vmatprep.subr.mxu0 0.0
    %607 = vmatpush1.msra.mxu0 0.0
    %608 = vmatprep.subr.mxu0 0.0
    %609 = vmatpush1.msra.mxu0 0.0
    %610 = vmatprep.subr.mxu0 0.0
    %611 = vmatpush1.msra.mxu0 0.0
    %612 = vmatprep.subr.mxu0 0.0
    %613 = vmatpush1.msra.mxu0 0.0
    %614 = vmatprep.subr.mxu0 0.0
    %615 = vmatpush1.msra.mxu0 0.0
    %616 = vmatprep.subr.mxu0 0.0
    %617 = vmatpush1.msra.mxu0 0.0
    %618 = vmatprep.subr.mxu0 0.0
    %619 = vmatpush1.msra.mxu0 0.0
    %620 = vmatprep.subr.mxu0 0.0
    %621 = vmatpush1.msra.mxu0 0.0
    %622 = vmatprep.mubr.f32.mxu0 0.0
    %623 = vmatmul.mubr.f32.gmra.mrb[0].mxu0 %v553
    %v624 = vpop.f32.mrb[0].mxu0
    %v625 = vadd.f32 0.0, %v624
    %v626 = vpop.f32.mrb[0].mxu0
    %627 = vmatprep.mubr.f32.mxu0 0.0
    %628 = vmatmul.mubr.f32.gmra.mrb[0].mxu0 %v556
    %v629 = vpop.f32.mrb[0].mxu0
    %v630 = vadd.f32 0.0, %v629
    %v631 = vpop.f32.mrb[0].mxu0
    %632 = vdwg.mxu0
    %v634 = vsel %vm484, %v548, 0
    %v637 = vsel %vm484, %v549, 0
    %639 = vmatprep.subr.mxu0 0.0
    %640 = vmatpush1.msra.mxu0 %v524
    %641 = vmatprep.subr.mxu0 0.0
    %642 = vmatpush1.msra.mxu0 %v525
    %643 = vmatprep.subr.mxu0 0.0
    %644 = vmatpush1.msra.mxu0 %v526
    %645 = vmatprep.subr.mxu0 0.0
    %646 = vmatpush1.msra.mxu0 %v527
    %647 = vmatprep.subr.mxu0 0.0
    %648 = vmatpush1.msra.mxu0 %v528
    %649 = vmatprep.subr.mxu0 0.0
    %650 = vmatpush1.msra.mxu0 %v529
    %651 = vmatprep.subr.mxu0 0.0
    %652 = vmatpush1.msra.mxu0 %v530
    %653 = vmatprep.subr.mxu0 0.0
    %654 = vmatpush1.msra.mxu0 %v531
    %655 = vmatprep.subr.mxu0 0.0
    %656 = vmatpush1.msra.mxu0 0.0
    %657 = vmatprep.subr.mxu0 0.0
    %658 = vmatpush1.msra.mxu0 0.0
    %659 = vmatprep.subr.mxu0 0.0
    %660 = vmatpush1.msra.mxu0 0.0
    %661 = vmatprep.subr.mxu0 0.0
    %662 = vmatpush1.msra.mxu0 0.0
    %663 = vmatprep.subr.mxu0 0.0
    %664 = vmatpush1.msra.mxu0 0.0
    %665 = vmatprep.subr.mxu0 0.0
    %666 = vmatpush1.msra.mxu0 0.0
    %667 = vmatprep.subr.mxu0 0.0
    %668 = vmatpush1.msra.mxu0 0.0
    %669 = vmatprep.subr.mxu0 0.0
    %670 = vmatpush1.msra.mxu0 0.0
    %671 = vmatprep.subr.mxu0 0.0
    %672 = vmatpush1.msra.mxu0 0.0
    %673 = vmatprep.subr.mxu0 0.0
    %674 = vmatpush1.msra.mxu0 0.0
    %675 = vmatprep.subr.mxu0 0.0
    %676 = vmatpush1.msra.mxu0 0.0
    %677 = vmatprep.subr.mxu0 0.0
    %678 = vmatpush1.msra.mxu0 0.0
    %679 = vmatprep.subr.mxu0 0.0
    %680 = vmatpush1.msra.mxu0 0.0
    %681 = vmatprep.subr.mxu0 0.0
    %682 = vmatpush1.msra.mxu0 0.0
    %683 = vmatprep.subr.mxu0 0.0
    %684 = vmatpush1.msra.mxu0 0.0
    %685 = vmatprep.subr.mxu0 0.0
    %686 = vmatpush1.msra.mxu0 0.0
    %687 = vmatprep.subr.mxu0 0.0
    %688 = vmatpush1.msra.mxu0 0.0
    %689 = vmatprep.subr.mxu0 0.0
    %690 = vmatpush1.msra.mxu0 0.0
    %691 = vmatprep.subr.mxu0 0.0
    %692 = vmatpush1.msra.mxu0 0.0
    %693 = vmatprep.subr.mxu0 0.0
    %694 = vmatpush1.msra.mxu0 0.0
    %695 = vmatprep.subr.mxu0 0.0
    %696 = vmatpush1.msra.mxu0 0.0
    %697 = vmatprep.subr.mxu0 0.0
    %698 = vmatpush1.msra.mxu0 0.0
    %699 = vmatprep.subr.mxu0 0.0
    %700 = vmatpush1.msra.mxu0 0.0
    %701 = vmatprep.subr.mxu0 0.0
    %702 = vmatpush1.msra.mxu0 0.0
    %703 = vmatprep.mubr.f32.mxu0 0.0
    %704 = vmatmul.mubr.f32.gmra.mrb[0].mxu0 %v634
    %v705 = vpop.f32.mrb[0].mxu0
    %v706 = vadd.f32 %v625, %v705
    %v707 = vpop.f32.mrb[0].mxu0
    %708 = vmatprep.mubr.f32.mxu0 0.0
    %709 = vmatmul.mubr.f32.gmra.mrb[0].mxu0 %v637
    %v710 = vpop.f32.mrb[0].mxu0
    %v711 = vadd.f32 %v630, %v710
    %v712 = vpop.f32.mrb[0].mxu0
    %713 = vdwg.mxu0
    %v714 = vld [vmem:[#allocation4 + $0x4] sm:$0xff]
    %v715 = vld [vmem:[#allocation4 + $0xc] sm:$0xff]
    %v717 = vsel %vm484, %v714, 0
    %v720 = vsel %vm484, %v715, 0
    %722 = vmatprep.subr.mxu0 0.0
    %723 = vmatpush1.msra.mxu0 %v540
    %724 = vmatprep.subr.mxu0 0.0
    %725 = vmatpush1.msra.mxu0 %v541
    %726 = vmatprep.subr.mxu0 0.0
    %727 = vmatpush1.msra.mxu0 %v542
    %728 = vmatprep.subr.mxu0 0.0
    %729 = vmatpush1.msra.mxu0 %v543
    %730 = vmatprep.subr.mxu0 0.0
    %731 = vmatpush1.msra.mxu0 %v544
    %732 = vmatprep.subr.mxu0 0.0
    %733 = vmatpush1.msra.mxu0 %v545
    %734 = vmatprep.subr.mxu0 0.0
    %735 = vmatpush1.msra.mxu0 %v546
    %736 = vmatprep.subr.mxu0 0.0
    %737 = vmatpush1.msra.mxu0 %v547
    %738 = vmatprep.subr.mxu0 0.0
    %739 = vmatpush1.msra.mxu0 0.0
    %740 = vmatprep.subr.mxu0 0.0
    %741 = vmatpush1.msra.mxu0 0.0
    %742 = vmatprep.subr.mxu0 0.0
    %743 = vmatpush1.msra.mxu0 0.0
    %744 = vmatprep.subr.mxu0 0.0
    %745 = vmatpush1.msra.mxu0 0.0
    %746 = vmatprep.subr.mxu0 0.0
    %747 = vmatpush1.msra.mxu0 0.0
    %748 = vmatprep.subr.mxu0 0.0
    %749 = vmatpush1.msra.mxu0 0.0
    %750 = vmatprep.subr.mxu0 0.0
    %751 = vmatpush1.msra.mxu0 0.0
    %752 = vmatprep.subr.mxu0 0.0
    %753 = vmatpush1.msra.mxu0 0.0
    %754 = vmatprep.subr.mxu0 0.0
    %755 = vmatpush1.msra.mxu0 0.0
    %756 = vmatprep.subr.mxu0 0.0
    %757 = vmatpush1.msra.mxu0 0.0
    %758 = vmatprep.subr.mxu0 0.0
    %759 = vmatpush1.msra.mxu0 0.0
    %760 = vmatprep.subr.mxu0 0.0
    %761 = vmatpush1.msra.mxu0 0.0
    %762 = vmatprep.subr.mxu0 0.0
    %763 = vmatpush1.msra.mxu0 0.0
    %764 = vmatprep.subr.mxu0 0.0
    %765 = vmatpush1.msra.mxu0 0.0
    %766 = vmatprep.subr.mxu0 0.0
    %767 = vmatpush1.msra.mxu0 0.0
    %768 = vmatprep.subr.mxu0 0.0
    %769 = vmatpush1.msra.mxu0 0.0
    %770 = vmatprep.subr.mxu0 0.0
    %771 = vmatpush1.msra.mxu0 0.0
    %772 = vmatprep.subr.mxu0 0.0
    %773 = vmatpush1.msra.mxu0 0.0
    %774 = vmatprep.subr.mxu0 0.0
    %775 = vmatpush1.msra.mxu0 0.0
    %776 = vmatprep.subr.mxu0 0.0
    %777 = vmatpush1.msra.mxu0 0.0
    %778 = vmatprep.subr.mxu0 0.0
    %779 = vmatpush1.msra.mxu0 0.0
    %780 = vmatprep.subr.mxu0 0.0
    %781 = vmatpush1.msra.mxu0 0.0
    %782 = vmatprep.subr.mxu0 0.0
    %783 = vmatpush1.msra.mxu0 0.0
    %784 = vmatprep.subr.mxu0 0.0
    %785 = vmatpush1.msra.mxu0 0.0
    %786 = vmatprep.mubr.f32.mxu0 0.0
    %787 = vmatmul.mubr.f32.gmra.mrb[0].mxu0 %v717
    %v788 = vpop.f32.mrb[0].mxu0
    %v789 = vadd.f32 0.0, %v788
    %v790 = vpop.f32.mrb[0].mxu0
    %791 = vmatprep.mubr.f32.mxu0 0.0
    %792 = vmatmul.mubr.f32.gmra.mrb[0].mxu0 %v720
    %v793 = vpop.f32.mrb[0].mxu0
    %v794 = vadd.f32 0.0, %v793
    %v795 = vpop.f32.mrb[0].mxu0
    %796 = vdwg.mxu0
    %v797 = vadd.f32 %v706, %v789
    %v798 = vadd.f32 %v711, %v794
    %v799 = vld [vmem:[%s2 + $0xa6] ss:$0 sm:$0xff]
    %v800 = vadd.f32 %v797, %v799
    %v801 = vadd.f32 %v798, %v799
    %vm802 = vcmask 261120
    %v803 = vsel %vm802, %v800, 0.0
    %v804 = vsel %vm802, %v801, 0.0
    %v805 = vadd.f32 %v803, %v804
    %v806 = vrot.slane %v805, 4
    %v807 = vadd.f32 %v805, %v806
    %v808 = vrot.slane %v807, 2
    %v809 = vadd.f32 %v807, %v808
    %v810 = vrot.slane %v809, 1
    %v811 = vadd.f32 %v809, %v810
    %v812 = vmul.f32 %v811, %v494
    %v813 = vsub.f32 %v800, %v812
    %v814 = vsub.f32 %v801, %v812
    %v815 = vmul.f32 %v813, %v813
    %v816 = vmul.f32 %v814, %v814
    %v817 = vsel %vm802, %v815, 0.0
    %v818 = vsel %vm802, %v816, 0.0
    %v819 = vadd.f32 %v817, %v818
    %v820 = vrot.slane %v819, 4
    %v821 = vadd.f32 %v819, %v820
    %v822 = vrot.slane %v821, 2
    %v823 = vadd.f32 %v821, %v822
    %v824 = vrot.slane %v823, 1
    %v825 = vadd.f32 %v823, %v824
    %v826 = vmul.f32 %v825, %v494
    %v827 = vadd.f32 %v826, 1e-05
    %v828 = vrsqrt.pop %v827
    %v829 = vmul.f32 %v813, %v828
    %v830 = vmul.f32 %v814, %v828
    %v831 = vld [vmem:[%s2 + $0xa7] ss:$0 sm:$0xff]
    %v832 = vmul.f32 %v829, %v831
    %v833 = vmul.f32 %v830, %v831
    %v834 = vld [vmem:[%s2 + $0xb0] ss:$0 sm:$0xff]
    %v835 = vadd.f32 %v832, %v834
    %v836 = vadd.f32 %v833, %v834
    %v837 = vadd.f32 %v132, %v835
    %v838 = vadd.f32 %v138, %v836
    %v839 = vld [vmem:[#allocation7 + $0x240] sm:$0xff]
    %v840 = vld [vmem:[#allocation7 + $0x248] sm:$0xff]
    %v841 = vld [vmem:[#allocation7 + $0x250] sm:$0xff]
    %v842 = vld [vmem:[#allocation7 + $0x258] sm:$0xff]
    %v843 = vld [vmem:[%s2 + $0xb1] ss:$0 sm:$0xff]
    %v845 = vsel %vm802, %v837, 0
    %v848 = vsel %vm802, %v838, 0
    %850 = vmatprep.subr.mxu0 0.0
    %851 = vmatpush1.msra.mxu0 %v839
    %852 = vmatprep.subr.mxu0 0.0
    %853 = vmatpush1.msra.mxu0 %v840
    %854 = vmatprep.subr.mxu0 0.0
    %855 = vmatpush1.msra.mxu0 %v841
    %856 = vmatprep.subr.mxu0 0.0
    %857 = vmatpush1.msra.mxu0 %v842
    %858 = vmatprep.subr.mxu0 0.0
    %859 = vmatpush1.msra.mxu0 0.0
    %860 = vmatprep.subr.mxu0 0.0
    %861 = vmatpush1.msra.mxu0 0.0
    %862 = vmatprep.subr.mxu0 0.0
    %863 = vmatpush1.msra.mxu0 0.0
    %864 = vmatprep.subr.mxu0 0.0
    %865 = vmatpush1.msra.mxu0 0.0
    %866 = vmatprep.subr.mxu0 0.0
    %867 = vmatpush1.msra.mxu0 0.0
    %868 = vmatprep.subr.mxu0 0.0
    %869 = vmatpush1.msra.mxu0 0.0
    %870 = vmatprep.subr.mxu0 0.0
    %871 = vmatpush1.msra.mxu0 0.0
    %872 = vmatprep.subr.mxu0 0.0
    %873 = vmatpush1.msra.mxu0 0.0
    %874 = vmatprep.subr.mxu0 0.0
    %875 = vmatpush1.msra.mxu0 0.0
    %876 = vmatprep.subr.mxu0 0.0
    %877 = vmatpush1.msra.mxu0 0.0
    %878 = vmatprep.subr.mxu0 0.0
    %879 = vmatpush1.msra.mxu0 0.0
    %880 = vmatprep.subr.mxu0 0.0
    %881 = vmatpush1.msra.mxu0 0.0
    %882 = vmatprep.subr.mxu0 0.0
    %883 = vmatpush1.msra.mxu0 0.0
    %884 = vmatprep.subr.mxu0 0.0
    %885 = vmatpush1.msra.mxu0 0.0
    %886 = vmatprep.subr.mxu0 0.0
    %887 = vmatpush1.msra.mxu0 0.0
    %888 = vmatprep.subr.mxu0 0.0
    %889 = vmatpush1.msra.mxu0 0.0
    %890 = vmatprep.subr.mxu0 0.0
    %891 = vmatpush1.msra.mxu0 0.0
    %892 = vmatprep.subr.mxu0 0.0
    %893 = vmatpush1.msra.mxu0 0.0
    %894 = vmatprep.subr.mxu0 0.0
    %895 = vmatpush1.msra.mxu0 0.0
    %896 = vmatprep.subr.mxu0 0.0
    %897 = vmatpush1.msra.mxu0 0.0
    %898 = vmatprep.subr.mxu0 0.0
    %899 = vmatpush1.msra.mxu0 0.0
    %900 = vmatprep.subr.mxu0 0.0
    %901 = vmatpush1.msra.mxu0 0.0
    %902 = vmatprep.subr.mxu0 0.0
    %903 = vmatpush1.msra.mxu0 0.0
    %904 = vmatprep.subr.mxu0 0.0
    %905 = vmatpush1.msra.mxu0 0.0
    %906 = vmatprep.subr.mxu0 0.0
    %907 = vmatpush1.msra.mxu0 0.0
    %908 = vmatprep.subr.mxu0 0.0
    %909 = vmatpush1.msra.mxu0 0.0
    %910 = vmatprep.subr.mxu0 0.0
    %911 = vmatpush1.msra.mxu0 0.0
    %912 = vmatprep.subr.mxu0 0.0
    %913 = vmatpush1.msra.mxu0 0.0
    %914 = vmatprep.mubr.f32.mxu0 0.0
    %915 = vmatmul.mubr.f32.gmra.mrb[0].mxu0 %v845
    %v916 = vpop.f32.mrb[0].mxu0
    %v917 = vadd.f32 %v843, %v916
    %v918 = vpop.f32.mrb[0].mxu0
    %919 = vmatprep.mubr.f32.mxu0 0.0
    %920 = vmatmul.mubr.f32.gmra.mrb[0].mxu0 %v848
    %v921 = vpop.f32.mrb[0].mxu0
    %v922 = vadd.f32 %v843, %v921
    %v923 = vpop.f32.mrb[0].mxu0
    %924 = vdwg.mxu0
    %v925 = vxor.u32 %v917, 2147483648
    %v926 = vxor.u32 %v922, 2147483648
    %v927 = vmul.f32 %v925, 1.442695
    %v928 = vpow.pop %v927
    %v929 = vmul.f32 %v926, 1.442695
    %v930 = vpow.pop %v929
    %v931 = vadd.f32 %v928, 1.0
    %v932 = vadd.f32 %v930, 1.0
    %v933 = vrcp.pop %v931
    %v934 = vmul.f32 1.0, %v933
    %v935 = vrcp.pop %v932
    %v936 = vmul.f32 1.0, %v935
    %v937 = vmax.f32 %v917, 0.0
    %v938 = vmax.f32 %v922, 0.0
    %941 = vrot.lane.b32.xlu0 %v937, 96
    %v942 = vpop.permute.xlu0 %941
    %943 = vrot.lane.b32.xlu0 %v938, 96
    %v944 = vpop.permute.xlu0 %943
    %v947 = vmul.f32 %v934, %v942
    %v948 = vmul.f32 %v936, %v944
    %v949 = vsub.f32 1.0, %v934
    %v950 = vsub.f32 1.0, %v936
    %953 = vrot.lane.b32.xlu0 %v917, 64
    %v954 = vpop.permute.xlu0 %953
    %955 = vrot.lane.b32.xlu0 %v922, 64
    %v956 = vpop.permute.xlu0 %955
    %v959 = vmul.f32 %v949, %v954
    %v960 = vmul.f32 %v950, %v956
    %v961 = vadd.f32 %v947, %v959
    %v962 = vadd.f32 %v948, %v960
    %v963 = vld [vmem:[#allocation7 + $0x260] sm:$0xff]
    %v964 = vld [vmem:[#allocation7 + $0x268] sm:$0xff]
    %v965 = vld [vmem:[#allocation7 + $0x270] sm:$0xff]
    %v966 = vld [vmem:[#allocation7 + $0x278] sm:$0xff]
    %v967 = vld [vmem:[%s2 + $0xb2] ss:$0 sm:$0xff]
    %v969 = vsel %vm802, %v961, 0
    %v972 = vsel %vm802, %v962, 0
    %974 = vmatprep.subr.mxu0 0.0
    %975 = vmatpush1.msra.mxu0 %v963
    %976 = vmatprep.subr.mxu0 0.0
    %977 = vmatpush1.msra.mxu0 %v964
    %978 = vmatprep.subr.mxu0 0.0
    %979 = vmatpush1.msra.mxu0 %v965
    %980 = vmatprep.subr.mxu0 0.0
    %981 = vmatpush1.msra.mxu0 %v966
    %982 = vmatprep.subr.mxu0 0.0
    %983 = vmatpush1.msra.mxu0 0.0
    %984 = vmatprep.subr.mxu0 0.0
    %985 = vmatpush1.msra.mxu0 0.0
    %986 = vmatprep.subr.mxu0 0.0
    %987 = vmatpush1.msra.mxu0 0.0
    %988 = vmatprep.subr.mxu0 0.0
    %989 = vmatpush1.msra.mxu0 0.0
    %990 = vmatprep.subr.mxu0 0.0
    %991 = vmatpush1.msra.mxu0 0.0
    %992 = vmatprep.subr.mxu0 0.0
    %993 = vmatpush1.msra.mxu0 0.0
    %994 = vmatprep.subr.mxu0 0.0
    %995 = vmatpush1.msra.mxu0 0.0
    %996 = vmatprep.subr.mxu0 0.0
    %997 = vmatpush1.msra.mxu0 0.0
    %998 = vmatprep.subr.mxu0 0.0
    %999 = vmatpush1.msra.mxu0 0.0
    %1000 = vmatprep.subr.mxu0 0.0
    %1001 = vmatpush1.msra.mxu0 0.0
    %1002 = vmatprep.subr.mxu0 0.0
    %1003 = vmatpush1.msra.mxu0 0.0
    %1004 = vmatprep.subr.mxu0 0.0
    %1005 = vmatpush1.msra.mxu0 0.0
    %1006 = vmatprep.subr.mxu0 0.0
    %1007 = vmatpush1.msra.mxu0 0.0
    %1008 = vmatprep.subr.mxu0 0.0
    %1009 = vmatpush1.msra.mxu0 0.0
    %1010 = vmatprep.subr.mxu0 0.0
    %1011 = vmatpush1.msra.mxu0 0.0
    %1012 = vmatprep.subr.mxu0 0.0
    %1013 = vmatpush1.msra.mxu0 0.0
    %1014 = vmatprep.subr.mxu0 0.0
    %1015 = vmatpush1.msra.mxu0 0.0
    %1016 = vmatprep.subr.mxu0 0.0
    %1017 = vmatpush1.msra.mxu0 0.0
    %1018 = vmatprep.subr.mxu0 0.0
    %1019 = vmatpush1.msra.mxu0 0.0
    %1020 = vmatprep.subr.mxu0 0.0
    %1021 = vmatpush1.msra.mxu0 0.0
    %1022 = vmatprep.subr.mxu0 0.0
    %1023 = vmatpush1.msra.mxu0 0.0
    %1024 = vmatprep.subr.mxu0 0.0
    %1025 = vmatpush1.msra.mxu0 0.0
    %1026 = vmatprep.subr.mxu0 0.0
    %1027 = vmatpush1.msra.mxu0 0.0
    %1028 = vmatprep.subr.mxu0 0.0
    %1029 = vmatpush1.msra.mxu0 0.0
    %1030 = vmatprep.subr.mxu0 0.0
    %1031 = vmatpush1.msra.mxu0 0.0
    %1032 = vmatprep.subr.mxu0 0.0
    %1033 = vmatpush1.msra.mxu0 0.0
    %1034 = vmatprep.subr.mxu0 0.0
    %1035 = vmatpush1.msra.mxu0 0.0
    %1036 = vmatprep.subr.mxu0 0.0
    %1037 = vmatpush1.msra.mxu0 0.0
    %1038 = vmatprep.mubr.f32.mxu0 0.0
    %1039 = vmatmul.mubr.f32.gmra.mrb[0].mxu0 %v969
    %v1040 = vpop.f32.mrb[0].mxu0
    %v1041 = vadd.f32 %v967, %v1040
    %v1042 = vpop.f32.mrb[0].mxu0
    %1043 = vmatprep.mubr.f32.mxu0 0.0
    %1044 = vmatmul.mubr.f32.gmra.mrb[0].mxu0 %v972
    %v1045 = vpop.f32.mrb[0].mxu0
    %v1046 = vadd.f32 %v967, %v1045
    %v1047 = vpop.f32.mrb[0].mxu0
    %1048 = vdwg.mxu0
    %v1049 = vxor.u32 %v1041, 2147483648
    %v1050 = vxor.u32 %v1046, 2147483648
    %v1051 = vmul.f32 %v1049, 1.442695
    %v1052 = vpow.pop %v1051
    %v1053 = vmul.f32 %v1050, 1.442695
    %v1054 = vpow.pop %v1053
    %v1055 = vadd.f32 %v1052, 1.0
    %v1056 = vadd.f32 %v1054, 1.0
    %v1057 = vrcp.pop %v1055
    %v1058 = vmul.f32 1.0, %v1057
    %v1059 = vrcp.pop %v1056
    %v1060 = vmul.f32 1.0, %v1059
    %v1061 = vmax.f32 %v1041, 0.0
    %v1062 = vmax.f32 %v1046, 0.0
    %1065 = vrot.lane.b32.xlu0 %v1061, 96
    %v1066 = vpop.permute.xlu0 %1065
    %1067 = vrot.lane.b32.xlu0 %v1062, 96
    %v1068 = vpop.permute.xlu0 %1067
    %v1071 = vmul.f32 %v1058, %v1066
    %v1072 = vmul.f32 %v1060, %v1068
    %v1073 = vsub.f32 1.0, %v1058
    %v1074 = vsub.f32 1.0, %v1060
    %1077 = vrot.lane.b32.xlu0 %v1041, 64
    %v1078 = vpop.permute.xlu0 %1077
    %1079 = vrot.lane.b32.xlu0 %v1046, 64
    %v1080 = vpop.permute.xlu0 %1079
    %v1083 = vmul.f32 %v1073, %v1078
    %v1084 = vmul.f32 %v1074, %v1080
    %v1085 = vadd.f32 %v1071, %v1083
    %v1086 = vadd.f32 %v1072, %v1084
    %v1087 = vld [vmem:[#allocation7 + $0x280] sm:$0xff]
    %v1088 = vld [vmem:[#allocation7 + $0x288] sm:$0xff]
    %v1089 = vld [vmem:[#allocation7 + $0x290] sm:$0xff]
    %v1090 = vld [vmem:[#allocation7 + $0x298] sm:$0xff]
    %v1091 = vld [vmem:[%s2 + $0xb3] ss:$0 sm:$0xff]
    %v1093 = vsel %vm802, %v1085, 0
    %v1096 = vsel %vm802, %v1086, 0
    %1098 = vmatprep.subr.mxu0 0.0
    %1099 = vmatpush1.msra.mxu0 %v1087
    %1100 = vmatprep.subr.mxu0 0.0
    %1101 = vmatpush1.msra.mxu0 %v1088
    %1102 = vmatprep.subr.mxu0 0.0
    %1103 = vmatpush1.msra.mxu0 %v1089
    %1104 = vmatprep.subr.mxu0 0.0
    %1105 = vmatpush1.msra.mxu0 %v1090
    %1106 = vmatprep.subr.mxu0 0.0
    %1107 = vmatpush1.msra.mxu0 0.0
    %1108 = vmatprep.subr.mxu0 0.0
    %1109 = vmatpush1.msra.mxu0 0.0
    %1110 = vmatprep.subr.mxu0 0.0
    %1111 = vmatpush1.msra.mxu0 0.0
    %1112 = vmatprep.subr.mxu0 0.0
    %1113 = vmatpush1.msra.mxu0 0.0
    %1114 = vmatprep.subr.mxu0 0.0
    %1115 = vmatpush1.msra.mxu0 0.0
    %1116 = vmatprep.subr.mxu0 0.0
    %1117 = vmatpush1.msra.mxu0 0.0
    %1118 = vmatprep.subr.mxu0 0.0
    %1119 = vmatpush1.msra.mxu0 0.0
    %1120 = vmatprep.subr.mxu0 0.0
    %1121 = vmatpush1.msra.mxu0 0.0
    %1122 = vmatprep.subr.mxu0 0.0
    %1123 = vmatpush1.msra.mxu0 0.0
    %1124 = vmatprep.subr.mxu0 0.0
    %1125 = vmatpush1.msra.mxu0 0.0
    %1126 = vmatprep.subr.mxu0 0.0
    %1127 = vmatpush1.msra.mxu0 0.0
    %1128 = vmatprep.subr.mxu0 0.0
    %1129 = vmatpush1.msra.mxu0 0.0
    %1130 = vmatprep.subr.mxu0 0.0
    %1131 = vmatpush1.msra.mxu0 0.0
    %1132 = vmatprep.subr.mxu0 0.0
    %1133 = vmatpush1.msra.mxu0 0.0
    %1134 = vmatprep.subr.mxu0 0.0
    %1135 = vmatpush1.msra.mxu0 0.0
    %1136 = vmatprep.subr.mxu0 0.0
    %1137 = vmatpush1.msra.mxu0 0.0
    %1138 = vmatprep.subr.mxu0 0.0
    %1139 = vmatpush1.msra.mxu0 0.0
    %1140 = vmatprep.subr.mxu0 0.0
    %1141 = vmatpush1.msra.mxu0 0.0
    %1142 = vmatprep.subr.mxu0 0.0
    %1143 = vmatpush1.msra.mxu0 0.0
    %1144 = vmatprep.subr.mxu0 0.0
    %1145 = vmatpush1.msra.mxu0 0.0
    %1146 = vmatprep.subr.mxu0 0.0
    %1147 = vmatpush1.msra.mxu0 0.0
    %1148 = vmatprep.subr.mxu0 0.0
    %1149 = vmatpush1.msra.mxu0 0.0
    %1150 = vmatprep.subr.mxu0 0.0
    %1151 = vmatpush1.msra.mxu0 0.0
    %1152 = vmatprep.subr.mxu0 0.0
    %1153 = vmatpush1.msra.mxu0 0.0
    %1154 = vmatprep.subr.mxu0 0.0
    %1155 = vmatpush1.msra.mxu0 0.0
    %1156 = vmatprep.subr.mxu0 0.0
    %1157 = vmatpush1.msra.mxu0 0.0
    %1158 = vmatprep.subr.mxu0 0.0
    %1159 = vmatpush1.msra.mxu0 0.0
    %1160 = vmatprep.subr.mxu0 0.0
    %1161 = vmatpush1.msra.mxu0 0.0
    %1162 = vmatprep.mubr.f32.mxu0 0.0
    %1163 = vmatmul.mubr.f32.gmra.mrb[0].mxu0 %v1093
    %v1164 = vpop.f32.mrb[0].mxu0
    %v1165 = vadd.f32 %v1091, %v1164
    %v1166 = vpop.f32.mrb[0].mxu0
    %1167 = vmatprep.mubr.f32.mxu0 0.0
    %1168 = vmatmul.mubr.f32.gmra.mrb[0].mxu0 %v1096
    %v1169 = vpop.f32.mrb[0].mxu0
    %v1170 = vadd.f32 %v1091, %v1169
    %v1171 = vpop.f32.mrb[0].mxu0
    %1172 = vdwg.mxu0
    %v1173 = vxor.u32 %v1165, 2147483648
    %v1174 = vxor.u32 %v1170, 2147483648
    %v1175 = vmul.f32 %v1173, 1.442695
    %v1176 = vpow.pop %v1175
    %v1177 = vmul.f32 %v1174, 1.442695
    %v1178 = vpow.pop %v1177
    %v1179 = vadd.f32 %v1176, 1.0
    %v1180 = vadd.f32 %v1178, 1.0
    %v1181 = vrcp.pop %v1179
    %v1182 = vmul.f32 1.0, %v1181
    %v1183 = vrcp.pop %v1180
    %v1184 = vmul.f32 1.0, %v1183
    %v1185 = vmax.f32 %v1165, 0.0
    %v1186 = vmax.f32 %v1170, 0.0
    %1189 = vrot.lane.b32.xlu0 %v1185, 96
    %v1190 = vpop.permute.xlu0 %1189
    %1191 = vrot.lane.b32.xlu0 %v1186, 96
    %v1192 = vpop.permute.xlu0 %1191
    %v1195 = vmul.f32 %v1182, %v1190
    %v1196 = vmul.f32 %v1184, %v1192
    %v1197 = vsub.f32 1.0, %v1182
    %v1198 = vsub.f32 1.0, %v1184
    %1201 = vrot.lane.b32.xlu0 %v1165, 64
    %v1202 = vpop.permute.xlu0 %1201
    %1203 = vrot.lane.b32.xlu0 %v1170, 64
    %v1204 = vpop.permute.xlu0 %1203
    %v1207 = vmul.f32 %v1197, %v1202
    %v1208 = vmul.f32 %v1198, %v1204
    %v1209 = vadd.f32 %v1195, %v1207
    %v1210 = vadd.f32 %v1196, %v1208
    %v1211 = vld [vmem:[#allocation7 + $0x2a0] sm:$0xff]
    %v1212 = vld [vmem:[#allocation7 + $0x2a8] sm:$0xff]
    %v1213 = vld [vmem:[#allocation7 + $0x2b0] sm:$0xff]
    %v1214 = vld [vmem:[#allocation7 + $0x2b8] sm:$0xff]
    %v1215 = vld [vmem:[%s2 + $0xb4] ss:$0 sm:$0xff]
    %v1217 = vsel %vm802, %v1209, 0
    %v1220 = vsel %vm802, %v1210, 0
    %1222 = vmatprep.subr.mxu0 0.0
    %1223 = vmatpush1.msra.mxu0 %v1211
    %1224 = vmatprep.subr.mxu0 0.0
    %1225 = vmatpush1.msra.mxu0 %v1212
    %1226 = vmatprep.subr.mxu0 0.0
    %1227 = vmatpush1.msra.mxu0 %v1213
    %1228 = vmatprep.subr.mxu0 0.0
    %1229 = vmatpush1.msra.mxu0 %v1214
    %1230 = vmatprep.subr.mxu0 0.0
    %1231 = vmatpush1.msra.mxu0 0.0
    %1232 = vmatprep.subr.mxu0 0.0
    %1233 = vmatpush1.msra.mxu0 0.0
    %1234 = vmatprep.subr.mxu0 0.0
    %1235 = vmatpush1.msra.mxu0 0.0
    %1236 = vmatprep.subr.mxu0 0.0
    %1237 = vmatpush1.msra.mxu0 0.0
    %1238 = vmatprep.subr.mxu0 0.0
    %1239 = vmatpush1.msra.mxu0 0.0
    %1240 = vmatprep.subr.mxu0 0.0
    %1241 = vmatpush1.msra.mxu0 0.0
    %1242 = vmatprep.subr.mxu0 0.0
    %1243 = vmatpush1.msra.mxu0 0.0
    %1244 = vmatprep.subr.mxu0 0.0
    %1245 = vmatpush1.msra.mxu0 0.0
    %1246 = vmatprep.subr.mxu0 0.0
    %1247 = vmatpush1.msra.mxu0 0.0
    %1248 = vmatprep.subr.mxu0 0.0
    %1249 = vmatpush1.msra.mxu0 0.0
    %1250 = vmatprep.subr.mxu0 0.0
    %1251 = vmatpush1.msra.mxu0 0.0
    %1252 = vmatprep.subr.mxu0 0.0
    %1253 = vmatpush1.msra.mxu0 0.0
    %1254 = vmatprep.subr.mxu0 0.0
    %1255 = vmatpush1.msra.mxu0 0.0
    %1256 = vmatprep.subr.mxu0 0.0
    %1257 = vmatpush1.msra.mxu0 0.0
    %1258 = vmatprep.subr.mxu0 0.0
    %1259 = vmatpush1.msra.mxu0 0.0
    %1260 = vmatprep.subr.mxu0 0.0
    %1261 = vmatpush1.msra.mxu0 0.0
    %1262 = vmatprep.subr.mxu0 0.0
    %1263 = vmatpush1.msra.mxu0 0.0
    %1264 = vmatprep.subr.mxu0 0.0
    %1265 = vmatpush1.msra.mxu0 0.0
    %1266 = vmatprep.subr.mxu0 0.0
    %1267 = vmatpush1.msra.mxu0 0.0
    %1268 = vmatprep.subr.mxu0 0.0
    %1269 = vmatpush1.msra.mxu0 0.0
    %1270 = vmatprep.subr.mxu0 0.0
    %1271 = vmatpush1.msra.mxu0 0.0
    %1272 = vmatprep.subr.mxu0 0.0
    %1273 = vmatpush1.msra.mxu0 0.0
    %1274 = vmatprep.subr.mxu0 0.0
    %1275 = vmatpush1.msra.mxu0 0.0
    %1276 = vmatprep.subr.mxu0 0.0
    %1277 = vmatpush1.msra.mxu0 0.0
    %1278 = vmatprep.subr.mxu0 0.0
    %1279 = vmatpush1.msra.mxu0 0.0
    %1280 = vmatprep.subr.mxu0 0.0
    %1281 = vmatpush1.msra.mxu0 0.0
    %1282 = vmatprep.subr.mxu0 0.0
    %1283 = vmatpush1.msra.mxu0 0.0
    %1284 = vmatprep.subr.mxu0 0.0
    %1285 = vmatpush1.msra.mxu0 0.0
    %1286 = vmatprep.mubr.f32.mxu0 0.0
    %1287 = vmatmul.mubr.f32.gmra.mrb[0].mxu0 %v1217
    %v1288 = vpop.f32.mrb[0].mxu0
    %v1289 = vadd.f32 %v1215, %v1288
    %v1290 = vpop.f32.mrb[0].mxu0
    %1291 = vmatprep.mubr.f32.mxu0 0.0
    %1292 = vmatmul.mubr.f32.gmra.mrb[0].mxu0 %v1220
    %v1293 = vpop.f32.mrb[0].mxu0
    %v1294 = vadd.f32 %v1215, %v1293
    %v1295 = vpop.f32.mrb[0].mxu0
    %1296 = vdwg.mxu0
    %v1297 = vxor.u32 %v1289, 2147483648
    %v1298 = vxor.u32 %v1294, 2147483648
    %v1299 = vmul.f32 %v1297, 1.442695
    %v1300 = vpow.pop %v1299
    %v1301 = vmul.f32 %v1298, 1.442695
    %v1302 = vpow.pop %v1301
    %v1303 = vadd.f32 %v1300, 1.0
    %v1304 = vadd.f32 %v1302, 1.0
    %v1305 = vrcp.pop %v1303
    %v1306 = vmul.f32 1.0, %v1305
    %v1307 = vrcp.pop %v1304
    %v1308 = vmul.f32 1.0, %v1307
    %v1309 = vmax.f32 %v1289, 0.0
    %v1310 = vmax.f32 %v1294, 0.0
    %1313 = vrot.lane.b32.xlu0 %v1309, 96
    %v1314 = vpop.permute.xlu0 %1313
    %1315 = vrot.lane.b32.xlu0 %v1310, 96
    %v1316 = vpop.permute.xlu0 %1315
    %v1319 = vmul.f32 %v1306, %v1314
    %v1320 = vmul.f32 %v1308, %v1316
    %v1321 = vsub.f32 1.0, %v1306
    %v1322 = vsub.f32 1.0, %v1308
    %1325 = vrot.lane.b32.xlu0 %v1289, 64
    %v1326 = vpop.permute.xlu0 %1325
    %1327 = vrot.lane.b32.xlu0 %v1294, 64
    %v1328 = vpop.permute.xlu0 %1327
    %v1331 = vmul.f32 %v1321, %v1326
    %v1332 = vmul.f32 %v1322, %v1328
    %v1333 = vadd.f32 %v1319, %v1331
    %v1334 = vadd.f32 %v1320, %v1332
    %v1335 = vld [vmem:[%s2 + $0x20] sm:$0xff]
    %v1336 = vld [vmem:[%s2 + $0x28] sm:$0xff]
    %v1337 = vld [vmem:[%s2 + $0x30] sm:$0xff]
    %v1338 = vld [vmem:[%s2 + $0x38] sm:$0xff]
    %v1339 = vld [vmem:[%s2 + $0x40] sm:$0xff]
    %v1340 = vld [vmem:[%s2 + $0x48] sm:$0xff]
    %v1341 = vld [vmem:[%s2 + $0x50] sm:$0xff]
    %v1342 = vld [vmem:[%s2 + $0x58] sm:$0xff]
    %s1343 = scalar_lea.vmem %s2, 181
    %v1344 = vld [vmem:[%s1343] ss:$8 sm:$0x3]
    %v1346 = vlaneseq
    %v1347 = vshrl.u32 %v1346, 7
    %v1348 = vsub.s32 0, %v1347
    %v1349 = vrot.slane %v1344, %v1348
    %v1350 = vlaneseq
    %v1351 = vshrl.u32 %v1350, 7
    %v1352 = vsub.s32 1, %v1351
    %v1353 = vrot.slane %v1344, %v1352
    %v1357 = vsel %vm802, %v1333, 0
    %v1360 = vsel %vm802, %v1334, 0
    %1362 = vmatprep.subr.mxu0 %v1336
    %1363 = vmatpush1.msra.mxu0 %v1335
    %1364 = vmatprep.subr.mxu0 %v1338
    %1365 = vmatpush1.msra.mxu0 %v1337
    %1366 = vmatprep.subr.mxu0 %v1340
    %1367 = vmatpush1.msra.mxu0 %v1339
    %1368 = vmatprep.subr.mxu0 %v1342
    %1369 = vmatpush1.msra.mxu0 %v1341
    %1370 = vmatprep.subr.mxu0 0.0
    %1371 = vmatpush1.msra.mxu0 0.0
    %1372 = vmatprep.subr.mxu0 0.0
    %1373 = vmatpush1.msra.mxu0 0.0
    %1374 = vmatprep.subr.mxu0 0.0
    %1375 = vmatpush1.msra.mxu0 0.0
    %1376 = vmatprep.subr.mxu0 0.0
    %1377 = vmatpush1.msra.mxu0 0.0
    %1378 = vmatprep.subr.mxu0 0.0
    %1379 = vmatpush1.msra.mxu0 0.0
    %1380 = vmatprep.subr.mxu0 0.0
    %1381 = vmatpush1.msra.mxu0 0.0
    %1382 = vmatprep.subr.mxu0 0.0
    %1383 = vmatpush1.msra.mxu0 0.0
    %1384 = vmatprep.subr.mxu0 0.0
    %1385 = vmatpush1.msra.mxu0 0.0
    %1386 = vmatprep.subr.mxu0 0.0
    %1387 = vmatpush1.msra.mxu0 0.0
    %1388 = vmatprep.subr.mxu0 0.0
    %1389 = vmatpush1.msra.mxu0 0.0
    %1390 = vmatprep.subr.mxu0 0.0
    %1391 = vmatpush1.msra.mxu0 0.0
    %1392 = vmatprep.subr.mxu0 0.0
    %1393 = vmatpush1.msra.mxu0 0.0
    %1394 = vmatprep.subr.mxu0 0.0
    %1395 = vmatpush1.msra.mxu0 0.0
    %1396 = vmatprep.subr.mxu0 0.0
    %1397 = vmatpush1.msra.mxu0 0.0
    %1398 = vmatprep.subr.mxu0 0.0
    %1399 = vmatpush1.msra.mxu0 0.0
    %1400 = vmatprep.subr.mxu0 0.0
    %1401 = vmatpush1.msra.mxu0 0.0
    %1402 = vmatprep.subr.mxu0 0.0
    %1403 = vmatpush1.msra.mxu0 0.0
    %1404 = vmatprep.subr.mxu0 0.0
    %1405 = vmatpush1.msra.mxu0 0.0
    %1406 = vmatprep.subr.mxu0 0.0
    %1407 = vmatpush1.msra.mxu0 0.0
    %1408 = vmatprep.subr.mxu0 0.0
    %1409 = vmatpush1.msra.mxu0 0.0
    %1410 = vmatprep.subr.mxu0 0.0
    %1411 = vmatpush1.msra.mxu0 0.0
    %1412 = vmatprep.subr.mxu0 0.0
    %1413 = vmatpush1.msra.mxu0 0.0
    %1414 = vmatprep.subr.mxu0 0.0
    %1415 = vmatpush1.msra.mxu0 0.0
    %1416 = vmatprep.subr.mxu0 0.0
    %1417 = vmatpush1.msra.mxu0 0.0
    %1418 = vmatprep.subr.mxu0 0.0
    %1419 = vmatpush1.msra.mxu0 0.0
    %1420 = vmatprep.subr.mxu0 0.0
    %1421 = vmatpush1.msra.mxu0 0.0
    %1422 = vmatprep.subr.mxu0 0.0
    %1423 = vmatpush1.msra.mxu0 0.0
    %1424 = vmatprep.subr.mxu0 0.0
    %1425 = vmatpush1.msra.mxu0 0.0
    %1426 = vmatprep.mubr.f32.mxu0 0.0
    %1427 = vmatmul.mubr.f32.gmra.mrb[0].mxu0 %v1357
    %v1428 = vpop.f32.mrb[0].mxu0
    %v1429 = vadd.f32 %v1349, %v1428
    %v1430 = vpop.f32.mrb[0].mxu0
    %v1431 = vadd.f32 %v1353, %v1430
    %1432 = vmatprep.mubr.f32.mxu0 0.0
    %1433 = vmatmul.mubr.f32.gmra.mrb[0].mxu0 %v1360
    %v1434 = vpop.f32.mrb[0].mxu0
    %v1435 = vadd.f32 %v1349, %v1434
    %v1436 = vpop.f32.mrb[0].mxu0
    %v1437 = vadd.f32 %v1353, %v1436
    %1438 = vdwg.mxu0
    %1439 = vst [vmem:[#allocation5] sm:$0xff] %v1429
    %1440 = vst [vmem:[#allocation5 + $0x8] sm:$0xff] %v1431
    %1441 = vst [vmem:[#allocation5 + $0x10] sm:$0xff] %v1435
    %1442 = vst [vmem:[#allocation5 + $0x18] sm:$0xff] %v1437
    %v1443 = vld [vmem:[%s2 + $0x60] sm:$0xff]
    %v1444 = vld [vmem:[%s2 + $0x70] sm:$0xff]
    %v1445 = vld [vmem:[%s2 + $0x80] sm:$0xff]
    %v1446 = vld [vmem:[%s2 + $0x90] sm:$0xff]
    %v1447 = vld [vmem:[%s2 + $0x68] sm:$0xff]
    %v1448 = vld [vmem:[%s2 + $0x78] sm:$0xff]
    %v1449 = vld [vmem:[%s2 + $0x88] sm:$0xff]
    %v1450 = vld [vmem:[%s2 + $0x98] sm:$0xff]
    %v1451 = vld [vmem:[%s2 + $0xb6] ss:$0 sm:$0xff]
    %v1452 = vld [vmem:[%s2 + $0xb6] ss:$0 sm:$0xff]
    %v1453 = vld [vmem:[%s2 + $0xbe] ss:$0 sm:$0xff]
    %v1454 = vld [vmem:[#allocation5] sm:$0x3]
    %v1455 = vld [vmem:[#allocation5 + $0x10] sm:$0xc0]
    %v1456 = vld [vmem:[#allocation5 + $0x18] sm:$0xc0]
    %v1457 = vadd.f32 %v1454, %v1451
    %v1458 = vxor.u32 %v1457, 2147483648
    %v1459 = vmul.f32 %v1458, 1.442695
    %v1460 = vpow.pop %v1459
    %v1461 = vadd.f32 %v1460, 1.0
    %v1462 = vrcp.pop %v1461
    %v1463 = vmul.f32 1.0, %v1462
    %1465 = vrot.lane.b32.xlu0 %v1451, 64
    %v1466 = vpop.permute.xlu0 %1465
    %v1468 = vmul.f32 %v1463, %v1466
    %1470 = vrot.lane.b32.xlu0 %v1468, 64
    %v1471 = vpop.permute.xlu0 %1470
    %v1473 = vadd.f32 %v1454, %v1471
    %v1474 = vtanh.pop %v1473
    %v1475 = vsub.f32 1.0, %v1463
    %1477 = vrot.lane.b32.xlu0 %v1474, 96
    %v1478 = vpop.permute.xlu0 %1477
    %v1480 = vmul.f32 %v1475, %v1478
    %v1481 = vmul.f32 %v1463, 0.0
    %v1482 = vadd.f32 %v1480, %v1481
    %v1483 = vadd.f32 %v1455, %v1452
    %v1484 = vxor.u32 %v1483, 2147483648
    %v1485 = vmul.f32 %v1484, 1.442695
    %v1486 = vpow.pop %v1485
    %v1487 = vadd.f32 %v1486, 1.0
    %v1488 = vrcp.pop %v1487
    %v1489 = vmul.f32 1.0, %v1488
    %v1490 = vadd.f32 %v1456, %v1453
    %v1491 = vxor.u32 %v1490, 2147483648
    %v1492 = vmul.f32 %v1491, 1.442695
    %v1493 = vpow.pop %v1492
    %v1494 = vadd.f32 %v1493, 1.0
    %v1495 = vrcp.pop %v1494
    %v1496 = vmul.f32 1.0, %v1495
    %1498 = vrot.lane.b32.xlu0 %v1453, 64
    %v1499 = vpop.permute.xlu0 %1498
    %v1501 = vmul.f32 %v1489, %v1499
    %1503 = vrot.lane.b32.xlu0 %v1501, 64
    %v1504 = vpop.permute.xlu0 %1503
    %v1506 = vadd.f32 %v1456, %v1504
    %v1507 = vtanh.pop %v1506
    %v1508 = vsub.f32 1.0, %v1496
    %1510 = vrot.lane.b32.xlu0 %v1507, 96
    %v1511 = vpop.permute.xlu0 %1510
    %v1513 = vmul.f32 %v1508, %v1511
    %v1514 = vmul.f32 %v1496, 0.0
    %v1515 = vadd.f32 %v1513, %v1514
    %1517 = vrot.lane.b32.xlu0 %v1482, 96
    %v1518 = vpop.permute.xlu0 %1517
    %v1519 = vsel %vm802, %v1518, 0
    %1521 = vmatprep.subr.mxu0 0.0
    %1522 = vmatpush1.msra.mxu0 %v1443
    %1523 = vmatprep.subr.mxu0 0.0
    %1524 = vmatpush1.msra.mxu0 %v1444
    %1525 = vmatprep.subr.mxu0 0.0
    %1526 = vmatpush1.msra.mxu0 %v1445
    %1527 = vmatprep.subr.mxu0 0.0
    %1528 = vmatpush1.msra.mxu0 %v1446
    %1529 = vmatprep.subr.mxu0 0.0
    %1530 = vmatpush1.msra.mxu0 0.0
    %1531 = vmatprep.subr.mxu0 0.0
    %1532 = vmatpush1.msra.mxu0 0.0
    %1533 = vmatprep.subr.mxu0 0.0
    %1534 = vmatpush1.msra.mxu0 0.0
    %1535 = vmatprep.subr.mxu0 0.0
    %1536 = vmatpush1.msra.mxu0 0.0
    %1537 = vmatprep.subr.mxu0 0.0
    %1538 = vmatpush1.msra.mxu0 0.0
    %1539 = vmatprep.subr.mxu0 0.0
    %1540 = vmatpush1.msra.mxu0 0.0
    %1541 = vmatprep.subr.mxu0 0.0
    %1542 = vmatpush1.msra.mxu0 0.0
    %1543 = vmatprep.subr.mxu0 0.0
    %1544 = vmatpush1.msra.mxu0 0.0
    %1545 = vmatprep.subr.mxu0 0.0
    %1546 = vmatpush1.msra.mxu0 0.0
    %1547 = vmatprep.subr.mxu0 0.0
    %1548 = vmatpush1.msra.mxu0 0.0
    %1549 = vmatprep.subr.mxu0 0.0
    %1550 = vmatpush1.msra.mxu0 0.0
    %1551 = vmatprep.subr.mxu0 0.0
    %1552 = vmatpush1.msra.mxu0 0.0
    %1553 = vmatprep.subr.mxu0 0.0
    %1554 = vmatpush1.msra.mxu0 0.0
    %1555 = vmatprep.subr.mxu0 0.0
    %1556 = vmatpush1.msra.mxu0 0.0
    %1557 = vmatprep.subr.mxu0 0.0
    %1558 = vmatpush1.msra.mxu0 0.0
    %1559 = vmatprep.subr.mxu0 0.0
    %1560 = vmatpush1.msra.mxu0 0.0
    %1561 = vmatprep.subr.mxu0 0.0
    %1562 = vmatpush1.msra.mxu0 0.0
    %1563 = vmatprep.subr.mxu0 0.0
    %1564 = vmatpush1.msra.mxu0 0.0
    %1565 = vmatprep.subr.mxu0 0.0
    %1566 = vmatpush1.msra.mxu0 0.0
    %1567 = vmatprep.subr.mxu0 0.0
    %1568 = vmatpush1.msra.mxu0 0.0
    %1569 = vmatprep.subr.mxu0 0.0
    %1570 = vmatpush1.msra.mxu0 0.0
    %1571 = vmatprep.subr.mxu0 0.0
    %1572 = vmatpush1.msra.mxu0 0.0
    %1573 = vmatprep.subr.mxu0 0.0
    %1574 = vmatpush1.msra.mxu0 0.0
    %1575 = vmatprep.subr.mxu0 0.0
    %1576 = vmatpush1.msra.mxu0 0.0
    %1577 = vmatprep.subr.mxu0 0.0
    %1578 = vmatpush1.msra.mxu0 0.0
    %1579 = vmatprep.subr.mxu0 0.0
    %1580 = vmatpush1.msra.mxu0 0.0
    %1581 = vmatprep.subr.mxu0 0.0
    %1582 = vmatpush1.msra.mxu0 0.0
    %1583 = vmatprep.subr.mxu0 0.0
    %1584 = vmatpush1.msra.mxu0 0.0
    %1585 = vmatprep.mubr.f32.mxu0 0.0
    %1586 = vmatmul.mubr.f32.gmra.mrb[0].mxu0 %v1519
    %v1587 = vpop.f32.mrb[0].mxu0
    %v1588 = vadd.f32 %v1451, %v1587
    %v1589 = vpop.f32.mrb[0].mxu0
    %1590 = vdwg.mxu0
    %v1592 = vrot.slane %v1515, 6
    %1601 = vrot.lane.b32.xlu0 %v1443, 32
    %v1602 = vpop.permute.xlu0 %1601
    %1603 = vrot.lane.b32.xlu0 %v1447, 32
    %v1604 = vpop.permute.xlu0 %1603
    %1605 = vrot.lane.b32.xlu0 %v1444, 32
    %v1606 = vpop.permute.xlu0 %1605
    %1607 = vrot.lane.b32.xlu0 %v1448, 32
    %v1608 = vpop.permute.xlu0 %1607
    %1609 = vrot.lane.b32.xlu0 %v1445, 32
    %v1610 = vpop.permute.xlu0 %1609
    %1611 = vrot.lane.b32.xlu0 %v1449, 32
    %v1612 = vpop.permute.xlu0 %1611
    %1613 = vrot.lane.b32.xlu0 %v1446, 32
    %v1614 = vpop.permute.xlu0 %1613
    %1615 = vrot.lane.b32.xlu0 %v1450, 32
    %v1616 = vpop.permute.xlu0 %1615
    %v1617 = vsel %vm802, %v1602, %v1604
    %v1618 = vsel %vm802, %v1606, %v1608
    %v1619 = vsel %vm802, %v1610, %v1612
    %v1620 = vsel %vm802, %v1614, %v1616
    %1626 = vrot.lane.b32.xlu0 %v1452, 32
    %v1627 = vpop.permute.xlu0 %1626
    %1628 = vrot.lane.b32.xlu0 %v1453, 32
    %v1629 = vpop.permute.xlu0 %1628
    %v1630 = vsel %vm802, %v1627, %v1629
    %v1632 = vsel %vm802, %v1592, 0
    %1634 = vmatprep.subr.mxu0 0.0
    %1635 = vmatpush1.msra.mxu0 %v1617
    %1636 = vmatprep.subr.mxu0 0.0
    %1637 = vmatpush1.msra.mxu0 %v1618
    %1638 = vmatprep.subr.mxu0 0.0
    %1639 = vmatpush1.msra.mxu0 %v1619
    %1640 = vmatprep.subr.mxu0 0.0
    %1641 = vmatpush1.msra.mxu0 %v1620
    %1642 = vmatprep.subr.mxu0 0.0
    %1643 = vmatpush1.msra.mxu0 0.0
    %1644 = vmatprep.subr.mxu0 0.0
    %1645 = vmatpush1.msra.mxu0 0.0
    %1646 = vmatprep.subr.mxu0 0.0
    %1647 = vmatpush1.msra.mxu0 0.0
    %1648 = vmatprep.subr.mxu0 0.0
    %1649 = vmatpush1.msra.mxu0 0.0
    %1650 = vmatprep.subr.mxu0 0.0
    %1651 = vmatpush1.msra.mxu0 0.0
    %1652 = vmatprep.subr.mxu0 0.0
    %1653 = vmatpush1.msra.mxu0 0.0
    %1654 = vmatprep.subr.mxu0 0.0
    %1655 = vmatpush1.msra.mxu0 0.0
    %1656 = vmatprep.subr.mxu0 0.0
    %1657 = vmatpush1.msra.mxu0 0.0
    %1658 = vmatprep.subr.mxu0 0.0
    %1659 = vmatpush1.msra.mxu0 0.0
    %1660 = vmatprep.subr.mxu0 0.0
    %1661 = vmatpush1.msra.mxu0 0.0
    %1662 = vmatprep.subr.mxu0 0.0
    %1663 = vmatpush1.msra.mxu0 0.0
    %1664 = vmatprep.subr.mxu0 0.0
    %1665 = vmatpush1.msra.mxu0 0.0
    %1666 = vmatprep.subr.mxu0 0.0
    %1667 = vmatpush1.msra.mxu0 0.0
    %1668 = vmatprep.subr.mxu0 0.0
    %1669 = vmatpush1.msra.mxu0 0.0
    %1670 = vmatprep.subr.mxu0 0.0
    %1671 = vmatpush1.msra.mxu0 0.0
    %1672 = vmatprep.subr.mxu0 0.0
    %1673 = vmatpush1.msra.mxu0 0.0
    %1674 = vmatprep.subr.mxu0 0.0
    %1675 = vmatpush1.msra.mxu0 0.0
    %1676 = vmatprep.subr.mxu0 0.0
    %1677 = vmatpush1.msra.mxu0 0.0
    %1678 = vmatprep.subr.mxu0 0.0
    %1679 = vmatpush1.msra.mxu0 0.0
    %1680 = vmatprep.subr.mxu0 0.0
    %1681 = vmatpush1.msra.mxu0 0.0
    %1682 = vmatprep.subr.mxu0 0.0
    %1683 = vmatpush1.msra.mxu0 0.0
    %1684 = vmatprep.subr.mxu0 0.0
    %1685 = vmatpush1.msra.mxu0 0.0
    %1686 = vmatprep.subr.mxu0 0.0
    %1687 = vmatpush1.msra.mxu0 0.0
    %1688 = vmatprep.subr.mxu0 0.0
    %1689 = vmatpush1.msra.mxu0 0.0
    %1690 = vmatprep.subr.mxu0 0.0
    %1691 = vmatpush1.msra.mxu0 0.0
    %1692 = vmatprep.subr.mxu0 0.0
    %1693 = vmatpush1.msra.mxu0 0.0
    %1694 = vmatprep.subr.mxu0 0.0
    %1695 = vmatpush1.msra.mxu0 0.0
    %1696 = vmatprep.subr.mxu0 0.0
    %1697 = vmatpush1.msra.mxu0 0.0
    %1698 = vmatprep.mubr.f32.mxu0 0.0
    %1699 = vmatmul.mubr.f32.gmra.mrb[0].mxu0 %v1632
    %v1700 = vpop.f32.mrb[0].mxu0
    %v1701 = vadd.f32 %v1630, %v1700
    %v1702 = vpop.f32.mrb[0].mxu0
    %1703 = vdwg.mxu0
    %v1704 = vld [vmem:[#allocation5] sm:$0xc]
    %v1705 = vld [vmem:[#allocation5 + $0x10] sm:$0x30]
    %v1706 = vld [vmem:[#allocation5 + $0x18] sm:$0x30]
    %v1708 = vrot.slane %v1588, 6
    %v1710 = vadd.f32 %v1704, %v1708
    %v1711 = vxor.u32 %v1710, 2147483648
    %v1712 = vmul.f32 %v1711, 1.442695
    %v1713 = vpow.pop %v1712
    %v1714 = vadd.f32 %v1713, 1.0
    %v1715 = vrcp.pop %v1714
    %v1716 = vmul.f32 1.0, %v1715
    %1717 = vrot.lane.b32.xlu0 %v1708, 64
    %v1718 = vpop.permute.xlu0 %1717
    %v1720 = vmul.f32 %v1716, %v1718
    %1722 = vrot.lane.b32.xlu0 %v1720, 64
    %v1723 = vpop.permute.xlu0 %1722
    %v1725 = vadd.f32 %v1704, %v1723
    %v1726 = vtanh.pop %v1725
    %v1727 = vsub.f32 1.0, %v1716
    %1729 = vrot.lane.b32.xlu0 %v1726, 96
    %v1730 = vpop.permute.xlu0 %1729
    %v1732 = vmul.f32 %v1727, %v1730
    %v1733 = vrot.slane %v1482, 6
    %v1735 = vmul.f32 %v1716, %v1733
    %v1736 = vadd.f32 %v1732, %v1735
    %v1738 = vrot.slane %v1701, 4
    %1739 = vrot.lane.b32.xlu0 %v1738, 96
    %v1740 = vpop.permute.xlu0 %1739
    %v1742 = vadd.f32 %v1705, %v1740
    %v1743 = vxor.u32 %v1742, 2147483648
    %v1744 = vmul.f32 %v1743, 1.442695
    %v1745 = vpow.pop %v1744
    %v1746 = vadd.f32 %v1745, 1.0
    %v1747 = vrcp.pop %v1746
    %v1748 = vmul.f32 1.0, %v1747
    %v1749 = vadd.f32 %v1706, %v1740
    %v1750 = vxor.u32 %v1749, 2147483648
    %v1751 = vmul.f32 %v1750, 1.442695
    %v1752 = vpow.pop %v1751
    %v1753 = vadd.f32 %v1752, 1.0
    %v1754 = vrcp.pop %v1753
    %v1755 = vmul.f32 1.0, %v1754
    %1756 = vrot.lane.b32.xlu0 %v1738, 32
    %v1757 = vpop.permute.xlu0 %1756
    %v1759 = vmul.f32 %v1748, %v1757
    %1761 = vrot.lane.b32.xlu0 %v1759, 64
    %v1762 = vpop.permute.xlu0 %1761
    %v1764 = vadd.f32 %v1706, %v1762
    %v1765 = vtanh.pop %v1764
    %v1766 = vsub.f32 1.0, %v1755
    %1768 = vrot.lane.b32.xlu0 %v1765, 96
    %v1769 = vpop.permute.xlu0 %1768
    %v1771 = vmul.f32 %v1766, %v1769
    %v1772 = vrot.slane %v1515, 2
    %v1774 = vmul.f32 %v1755, %v1772
    %v1775 = vadd.f32 %v1771, %v1774
    %v1777 = vrot.slane %v1736, 2
    %1778 = vrot.lane.b32.xlu0 %v1777, 96
    %v1779 = vpop.permute.xlu0 %1778
    %v1780 = vsel %vm802, %v1779, 0
    %1782 = vmatprep.subr.mxu0 0.0
    %1783 = vmatpush1.msra.mxu0 %v1443
    %1784 = vmatprep.subr.mxu0 0.0
    %1785 = vmatpush1.msra.mxu0 %v1444
    %1786 = vmatprep.subr.mxu0 0.0
    %1787 = vmatpush1.msra.mxu0 %v1445
    %1788 = vmatprep.subr.mxu0 0.0
    %1789 = vmatpush1.msra.mxu0 %v1446
    %1790 = vmatprep.subr.mxu0 0.0
    %1791 = vmatpush1.msra.mxu0 0.0
    %1792 = vmatprep.subr.mxu0 0.0
    %1793 = vmatpush1.msra.mxu0 0.0
    %1794 = vmatprep.subr.mxu0 0.0
    %1795 = vmatpush1.msra.mxu0 0.0
    %1796 = vmatprep.subr.mxu0 0.0
    %1797 = vmatpush1.msra.mxu0 0.0
    %1798 = vmatprep.subr.mxu0 0.0
    %1799 = vmatpush1.msra.mxu0 0.0
    %1800 = vmatprep.subr.mxu0 0.0
    %1801 = vmatpush1.msra.mxu0 0.0
    %1802 = vmatprep.subr.mxu0 0.0
    %1803 = vmatpush1.msra.mxu0 0.0
    %1804 = vmatprep.subr.mxu0 0.0
    %1805 = vmatpush1.msra.mxu0 0.0
    %1806 = vmatprep.subr.mxu0 0.0
    %1807 = vmatpush1.msra.mxu0 0.0
    %1808 = vmatprep.subr.mxu0 0.0
    %1809 = vmatpush1.msra.mxu0 0.0
    %1810 = vmatprep.subr.mxu0 0.0
    %1811 = vmatpush1.msra.mxu0 0.0
    %1812 = vmatprep.subr.mxu0 0.0
    %1813 = vmatpush1.msra.mxu0 0.0
    %1814 = vmatprep.subr.mxu0 0.0
    %1815 = vmatpush1.msra.mxu0 0.0
    %1816 = vmatprep.subr.mxu0 0.0
    %1817 = vmatpush1.msra.mxu0 0.0
    %1818 = vmatprep.subr.mxu0 0.0
    %1819 = vmatpush1.msra.mxu0 0.0
    %1820 = vmatprep.subr.mxu0 0.0
    %1821 = vmatpush1.msra.mxu0 0.0
    %1822 = vmatprep.subr.mxu0 0.0
    %1823 = vmatpush1.msra.mxu0 0.0
    %1824 = vmatprep.subr.mxu0 0.0
    %1825 = vmatpush1.msra.mxu0 0.0
    %1826 = vmatprep.subr.mxu0 0.0
    %1827 = vmatpush1.msra.mxu0 0.0
    %1828 = vmatprep.subr.mxu0 0.0
    %1829 = vmatpush1.msra.mxu0 0.0
    %1830 = vmatprep.subr.mxu0 0.0
    %1831 = vmatpush1.msra.mxu0 0.0
    %1832 = vmatprep.subr.mxu0 0.0
    %1833 = vmatpush1.msra.mxu0 0.0
    %1834 = vmatprep.subr.mxu0 0.0
    %1835 = vmatpush1.msra.mxu0 0.0
    %1836 = vmatprep.subr.mxu0 0.0
    %1837 = vmatpush1.msra.mxu0 0.0
    %1838 = vmatprep.subr.mxu0 0.0
    %1839 = vmatpush1.msra.mxu0 0.0
    %1840 = vmatprep.subr.mxu0 0.0
    %1841 = vmatpush1.msra.mxu0 0.0
    %1842 = vmatprep.subr.mxu0 0.0
    %1843 = vmatpush1.msra.mxu0 0.0
    %1844 = vmatprep.subr.mxu0 0.0
    %1845 = vmatpush1.msra.mxu0 0.0
    %1846 = vmatprep.mubr.f32.mxu0 0.0
    %1847 = vmatmul.mubr.f32.gmra.mrb[0].mxu0 %v1780
    %v1848 = vpop.f32.mrb[0].mxu0
    %v1849 = vadd.f32 %v1451, %v1848
    %v1850 = vpop.f32.mrb[0].mxu0
    %1851 = vdwg.mxu0
    %v1853 = vrot.slane %v1775, 4
    %v1854 = vsel %vm802, %v1853, 0
    %1856 = vmatprep.subr.mxu0 0.0
    %1857 = vmatpush1.msra.mxu0 %v1617
    %1858 = vmatprep.subr.mxu0 0.0
    %1859 = vmatpush1.msra.mxu0 %v1618
    %1860 = vmatprep.subr.mxu0 0.0
    %1861 = vmatpush1.msra.mxu0 %v1619
    %1862 = vmatprep.subr.mxu0 0.0
    %1863 = vmatpush1.msra.mxu0 %v1620
    %1864 = vmatprep.subr.mxu0 0.0
    %1865 = vmatpush1.msra.mxu0 0.0
    %1866 = vmatprep.subr.mxu0 0.0
    %1867 = vmatpush1.msra.mxu0 0.0
    %1868 = vmatprep.subr.mxu0 0.0
    %1869 = vmatpush1.msra.mxu0 0.0
    %1870 = vmatprep.subr.mxu0 0.0
    %1871 = vmatpush1.msra.mxu0 0.0
    %1872 = vmatprep.subr.mxu0 0.0
    %1873 = vmatpush1.msra.mxu0 0.0
    %1874 = vmatprep.subr.mxu0 0.0
    %1875 = vmatpush1.msra.mxu0 0.0
    %1876 = vmatprep.subr.mxu0 0.0
    %1877 = vmatpush1.msra.mxu0 0.0
    %1878 = vmatprep.subr.mxu0 0.0
    %1879 = vmatpush1.msra.mxu0 0.0
    %1880 = vmatprep.subr.mxu0 0.0
    %1881 = vmatpush1.msra.mxu0 0.0
    %1882 = vmatprep.subr.mxu0 0.0
    %1883 = vmatpush1.msra.mxu0 0.0
    %1884 = vmatprep.subr.mxu0 0.0
    %1885 = vmatpush1.msra.mxu0 0.0
    %1886 = vmatprep.subr.mxu0 0.0
    %1887 = vmatpush1.msra.mxu0 0.0
    %1888 = vmatprep.subr.mxu0 0.0
    %1889 = vmatpush1.msra.mxu0 0.0
    %1890 = vmatprep.subr.mxu0 0.0
    %1891 = vmatpush1.msra.mxu0 0.0
    %1892 = vmatprep.subr.mxu0 0.0
    %1893 = vmatpush1.msra.mxu0 0.0
    %1894 = vmatprep.subr.mxu0 0.0
    %1895 = vmatpush1.msra.mxu0 0.0
    %1896 = vmatprep.subr.mxu0 0.0
    %1897 = vmatpush1.msra.mxu0 0.0
    %1898 = vmatprep.subr.mxu0 0.0
    %1899 = vmatpush1.msra.mxu0 0.0
    %1900 = vmatprep.subr.mxu0 0.0
    %1901 = vmatpush1.msra.mxu0 0.0
    %1902 = vmatprep.subr.mxu0 0.0
    %1903 = vmatpush1.msra.mxu0 0.0
    %1904 = vmatprep.subr.mxu0 0.0
    %1905 = vmatpush1.msra.mxu0 0.0
    %1906 = vmatprep.subr.mxu0 0.0
    %1907 = vmatpush1.msra.mxu0 0.0
    %1908 = vmatprep.subr.mxu0 0.0
    %1909 = vmatpush1.msra.mxu0 0.0
    %1910 = vmatprep.subr.mxu0 0.0
    %1911 = vmatpush1.msra.mxu0 0.0
    %1912 = vmatprep.subr.mxu0 0.0
    %1913 = vmatpush1.msra.mxu0 0.0
    %1914 = vmatprep.subr.mxu0 0.0
    %1915 = vmatpush1.msra.mxu0 0.0
    %1916 = vmatprep.subr.mxu0 0.0
    %1917 = vmatpush1.msra.mxu0 0.0
    %1918 = vmatprep.subr.mxu0 0.0
    %1919 = vmatpush1.msra.mxu0 0.0
    %1920 = vmatprep.mubr.f32.mxu0 0.0
    %1921 = vmatmul.mubr.f32.gmra.mrb[0].mxu0 %v1854
    %v1922 = vpop.f32.mrb[0].mxu0
    %v1923 = vadd.f32 %v1630, %v1922
    %v1924 = vpop.f32.mrb[0].mxu0
    %1925 = vdwg.mxu0
    %v1926 = vld [vmem:[#allocation5] sm:$0x30]
    %v1927 = vld [vmem:[#allocation5 + $0x10] sm:$0xc]
    %v1928 = vld [vmem:[#allocation5 + $0x18] sm:$0xc]
    %v1930 = vrot.slane %v1849, 4
    %v1932 = vadd.f32 %v1926, %v1930
    %v1933 = vxor.u32 %v1932, 2147483648
    %v1934 = vmul.f32 %v1933, 1.442695
    %v1935 = vpow.pop %v1934
    %v1936 = vadd.f32 %v1935, 1.0
    %v1937 = vrcp.pop %v1936
    %v1938 = vmul.f32 1.0, %v1937
    %1939 = vrot.lane.b32.xlu0 %v1930, 64
    %v1940 = vpop.permute.xlu0 %1939
    %v1942 = vmul.f32 %v1938, %v1940
    %1944 = vrot.lane.b32.xlu0 %v1942, 64
    %v1945 = vpop.permute.xlu0 %1944
    %v1947 = vadd.f32 %v1926, %v1945
    %v1948 = vtanh.pop %v1947
    %v1949 = vsub.f32 1.0, %v1938
    %1951 = vrot.lane.b32.xlu0 %v1948, 96
    %v1952 = vpop.permute.xlu0 %1951
    %v1954 = vmul.f32 %v1949, %v1952
    %v1955 = vrot.slane %v1736, 6
    %v1957 = vmul.f32 %v1938, %v1955
    %v1958 = vadd.f32 %v1954, %v1957
    %v1960 = vrot.slane %v1923, 6
    %1961 = vrot.lane.b32.xlu0 %v1960, 96
    %v1962 = vpop.permute.xlu0 %1961
    %v1964 = vadd.f32 %v1927, %v1962
    %v1965 = vxor.u32 %v1964, 2147483648
    %v1966 = vmul.f32 %v1965, 1.442695
    %v1967 = vpow.pop %v1966
    %v1968 = vadd.f32 %v1967, 1.0
    %v1969 = vrcp.pop %v1968
    %v1970 = vmul.f32 1.0, %v1969
    %v1971 = vadd.f32 %v1928, %v1962
    %v1972 = vxor.u32 %v1971, 2147483648
    %v1973 = vmul.f32 %v1972, 1.442695
    %v1974 = vpow.pop %v1973
    %v1975 = vadd.f32 %v1974, 1.0
    %v1976 = vrcp.pop %v1975
    %v1977 = vmul.f32 1.0, %v1976
    %1978 = vrot.lane.b32.xlu0 %v1960, 32
    %v1979 = vpop.permute.xlu0 %1978
    %v1981 = vmul.f32 %v1970, %v1979
    %1983 = vrot.lane.b32.xlu0 %v1981, 64
    %v1984 = vpop.permute.xlu0 %1983
    %v1986 = vadd.f32 %v1928, %v1984
    %v1987 = vtanh.pop %v1986
    %v1988 = vsub.f32 1.0, %v1977
    %1990 = vrot.lane.b32.xlu0 %v1987, 96
    %v1991 = vpop.permute.xlu0 %1990
    %v1993 = vmul.f32 %v1988, %v1991
    %v1994 = vrot.slane %v1775, 2
    %v1996 = vmul.f32 %v1977, %v1994
    %v1997 = vadd.f32 %v1993, %v1996
    %v1999 = vrot.slane %v1958, 4
    %2000 = vrot.lane.b32.xlu0 %v1999, 96
    %v2001 = vpop.permute.xlu0 %2000
    %v2002 = vsel %vm802, %v2001, 0
    %2004 = vmatprep.subr.mxu0 0.0
    %2005 = vmatpush1.msra.mxu0 %v1443
    %2006 = vmatprep.subr.mxu0 0.0
    %2007 = vmatpush1.msra.mxu0 %v1444
    %2008 = vmatprep.subr.mxu0 0.0
    %2009 = vmatpush1.msra.mxu0 %v1445
    %2010 = vmatprep.subr.mxu0 0.0
    %2011 = vmatpush1.msra.mxu0 %v1446
    %2012 = vmatprep.subr.mxu0 0.0
    %2013 = vmatpush1.msra.mxu0 0.0
    %2014 = vmatprep.subr.mxu0 0.0
    %2015 = vmatpush1.msra.mxu0 0.0
    %2016 = vmatprep.subr.mxu0 0.0
    %2017 = vmatpush1.msra.mxu0 0.0
    %2018 = vmatprep.subr.mxu0 0.0
    %2019 = vmatpush1.msra.mxu0 0.0
    %2020 = vmatprep.subr.mxu0 0.0
    %2021 = vmatpush1.msra.mxu0 0.0
    %2022 = vmatprep.subr.mxu0 0.0
    %2023 = vmatpush1.msra.mxu0 0.0
    %2024 = vmatprep.subr.mxu0 0.0
    %2025 = vmatpush1.msra.mxu0 0.0
    %2026 = vmatprep.subr.mxu0 0.0
    %2027 = vmatpush1.msra.mxu0 0.0
    %2028 = vmatprep.subr.mxu0 0.0
    %2029 = vmatpush1.msra.mxu0 0.0
    %2030 = vmatprep.subr.mxu0 0.0
    %2031 = vmatpush1.msra.mxu0 0.0
    %2032 = vmatprep.subr.mxu0 0.0
    %2033 = vmatpush1.msra.mxu0 0.0
    %2034 = vmatprep.subr.mxu0 0.0
    %2035 = vmatpush1.msra.mxu0 0.0
    %2036 = vmatprep.subr.mxu0 0.0
    %2037 = vmatpush1.msra.mxu0 0.0
    %2038 = vmatprep.subr.mxu0 0.0
    %2039 = vmatpush1.msra.mxu0 0.0
    %2040 = vmatprep.subr.mxu0 0.0
    %2041 = vmatpush1.msra.mxu0 0.0
    %2042 = vmatprep.subr.mxu0 0.0
    %2043 = vmatpush1.msra.mxu0 0.0
    %2044 = vmatprep.subr.mxu0 0.0
    %2045 = vmatpush1.msra.mxu0 0.0
    %2046 = vmatprep.subr.mxu0 0.0
    %2047 = vmatpush1.msra.mxu0 0.0
    %2048 = vmatprep.subr.mxu0 0.0
    %2049 = vmatpush1.msra.mxu0 0.0
    %2050 = vmatprep.subr.mxu0 0.0
    %2051 = vmatpush1.msra.mxu0 0.0
    %2052 = vmatprep.subr.mxu0 0.0
    %2053 = vmatpush1.msra.mxu0 0.0
    %2054 = vmatprep.subr.mxu0 0.0
    %2055 = vmatpush1.msra.mxu0 0.0
    %2056 = vmatprep.subr.mxu0 0.0
    %2057 = vmatpush1.msra.mxu0 0.0
    %2058 = vmatprep.subr.mxu0 0.0
    %2059 = vmatpush1.msra.mxu0 0.0
    %2060 = vmatprep.subr.mxu0 0.0
    %2061 = vmatpush1.msra.mxu0 0.0
    %2062 = vmatprep.subr.mxu0 0.0
    %2063 = vmatpush1.msra.mxu0 0.0
    %2064 = vmatprep.subr.mxu0 0.0
    %2065 = vmatpush1.msra.mxu0 0.0
    %2066 = vmatprep.subr.mxu0 0.0
    %2067 = vmatpush1.msra.mxu0 0.0
    %2068 = vmatprep.mubr.f32.mxu0 0.0
    %2069 = vmatmul.mubr.f32.gmra.mrb[0].mxu0 %v2002
    %v2070 = vpop.f32.mrb[0].mxu0
    %v2071 = vadd.f32 %v1451, %v2070
    %v2072 = vpop.f32.mrb[0].mxu0
    %2073 = vdwg.mxu0
    %v2075 = vrot.slane %v1997, 2
    %v2076 = vsel %vm802, %v2075, 0
    %2078 = vmatprep.subr.mxu0 0.0
    %2079 = vmatpush1.msra.mxu0 %v1617
    %2080 = vmatprep.subr.mxu0 0.0
    %2081 = vmatpush1.msra.mxu0 %v1618
    %2082 = vmatprep.subr.mxu0 0.0
    %2083 = vmatpush1.msra.mxu0 %v1619
    %2084 = vmatprep.subr.mxu0 0.0
    %2085 = vmatpush1.msra.mxu0 %v1620
    %2086 = vmatprep.subr.mxu0 0.0
    %2087 = vmatpush1.msra.mxu0 0.0
    %2088 = vmatprep.subr.mxu0 0.0
    %2089 = vmatpush1.msra.mxu0 0.0
    %2090 = vmatprep.subr.mxu0 0.0
    %2091 = vmatpush1.msra.mxu0 0.0
    %2092 = vmatprep.subr.mxu0 0.0
    %2093 = vmatpush1.msra.mxu0 0.0
    %2094 = vmatprep.subr.mxu0 0.0
    %2095 = vmatpush1.msra.mxu0 0.0
    %2096 = vmatprep.subr.mxu0 0.0
    %2097 = vmatpush1.msra.mxu0 0.0
    %2098 = vmatprep.subr.mxu0 0.0
    %2099 = vmatpush1.msra.mxu0 0.0
    %2100 = vmatprep.subr.mxu0 0.0
    %2101 = vmatpush1.msra.mxu0 0.0
    %2102 = vmatprep.subr.mxu0 0.0
    %2103 = vmatpush1.msra.mxu0 0.0
    %2104 = vmatprep.subr.mxu0 0.0
    %2105 = vmatpush1.msra.mxu0 0.0
    %2106 = vmatprep.subr.mxu0 0.0
    %2107 = vmatpush1.msra.mxu0 0.0
    %2108 = vmatprep.subr.mxu0 0.0
    %2109 = vmatpush1.msra.mxu0 0.0
    %2110 = vmatprep.subr.mxu0 0.0
    %2111 = vmatpush1.msra.mxu0 0.0
    %2112 = vmatprep.subr.mxu0 0.0
    %2113 = vmatpush1.msra.mxu0 0.0
    %2114 = vmatprep.subr.mxu0 0.0
    %2115 = vmatpush1.msra.mxu0 0.0
    %2116 = vmatprep.subr.mxu0 0.0
    %2117 = vmatpush1.msra.mxu0 0.0
    %2118 = vmatprep.subr.mxu0 0.0
    %2119 = vmatpush1.msra.mxu0 0.0
    %2120 = vmatprep.subr.mxu0 0.0
    %2121 = vmatpush1.msra.mxu0 0.0
    %2122 = vmatprep.subr.mxu0 0.0
    %2123 = vmatpush1.msra.mxu0 0.0
    %2124 = vmatprep.subr.mxu0 0.0
    %2125 = vmatpush1.msra.mxu0 0.0
    %2126 = vmatprep.subr.mxu0 0.0
    %2127 = vmatpush1.msra.mxu0 0.0
    %2128 = vmatprep.subr.mxu0 0.0
    %2129 = vmatpush1.msra.mxu0 0.0
    %2130 = vmatprep.subr.mxu0 0.0
    %2131 = vmatpush1.msra.mxu0 0.0
    %2132 = vmatprep.subr.mxu0 0.0
    %2133 = vmatpush1.msra.mxu0 0.0
    %2134 = vmatprep.subr.mxu0 0.0
    %2135 = vmatpush1.msra.mxu0 0.0
    %2136 = vmatprep.subr.mxu0 0.0
    %2137 = vmatpush1.msra.mxu0 0.0
    %2138 = vmatprep.subr.mxu0 0.0
    %2139 = vmatpush1.msra.mxu0 0.0
    %2140 = vmatprep.subr.mxu0 0.0
    %2141 = vmatpush1.msra.mxu0 0.0
    %2142 = vmatprep.mubr.f32.mxu0 0.0
    %2143 = vmatmul.mubr.f32.gmra.mrb[0].mxu0 %v2076
    %v2144 = vpop.f32.mrb[0].mxu0
    %v2145 = vadd.f32 %v1630, %v2144
    %v2146 = vpop.f32.mrb[0].mxu0
    %2147 = vdwg.mxu0
    %v2148 = vld [vmem:[#allocation5] sm:$0xc0]
    %v2149 = vld [vmem:[#allocation5 + $0x10] sm:$0x3]
    %v2150 = vld [vmem:[#allocation5 + $0x18] sm:$0x3]
    %v2152 = vrot.slane %v2071, 2
    %v2154 = vadd.f32 %v2148, %v2152
    %v2155 = vxor.u32 %v2154, 2147483648
    %v2156 = vmul.f32 %v2155, 1.442695
    %v2157 = vpow.pop %v2156
    %v2158 = vadd.f32 %v2157, 1.0
    %v2159 = vrcp.pop %v2158
    %v2160 = vmul.f32 1.0, %v2159
    %2161 = vrot.lane.b32.xlu0 %v2152, 64
    %v2162 = vpop.permute.xlu0 %2161
    %v2164 = vmul.f32 %v2160, %v2162
    %2166 = vrot.lane.b32.xlu0 %v2164, 64
    %v2167 = vpop.permute.xlu0 %2166
    %v2169 = vadd.f32 %v2148, %v2167
    %v2170 = vtanh.pop %v2169
    %v2171 = vsub.f32 1.0, %v2160
    %2173 = vrot.lane.b32.xlu0 %v2170, 96
    %v2174 = vpop.permute.xlu0 %2173
    %v2176 = vmul.f32 %v2171, %v2174
    %v2177 = vrot.slane %v1958, 6
    %v2179 = vmul.f32 %v2160, %v2177
    %v2180 = vadd.f32 %v2176, %v2179
    %2182 = vrot.lane.b32.xlu0 %v2145, 96
    %v2183 = vpop.permute.xlu0 %2182
    %v2185 = vadd.f32 %v2149, %v2183
    %v2186 = vxor.u32 %v2185, 2147483648
    %v2187 = vmul.f32 %v2186, 1.442695
    %v2188 = vpow.pop %v2187
    %v2189 = vadd.f32 %v2188, 1.0
    %v2190 = vrcp.pop %v2189
    %v2191 = vmul.f32 1.0, %v2190
    %v2192 = vadd.f32 %v2150, %v2183
    %v2193 = vxor.u32 %v2192, 2147483648
    %v2194 = vmul.f32 %v2193, 1.442695
    %v2195 = vpow.pop %v2194
    %v2196 = vadd.f32 %v2195, 1.0
    %v2197 = vrcp.pop %v2196
    %v2198 = vmul.f32 1.0, %v2197
    %2199 = vrot.lane.b32.xlu0 %v2145, 32
    %v2200 = vpop.permute.xlu0 %2199
    %v2202 = vmul.f32 %v2191, %v2200
    %2204 = vrot.lane.b32.xlu0 %v2202, 64
    %v2205 = vpop.permute.xlu0 %2204
    %v2207 = vadd.f32 %v2150, %v2205
    %v2208 = vtanh.pop %v2207
    %v2209 = vsub.f32 1.0, %v2198
    %2211 = vrot.lane.b32.xlu0 %v2208, 96
    %v2212 = vpop.permute.xlu0 %2211
    %v2214 = vmul.f32 %v2209, %v2212
    %v2216 = vmul.f32 %v2198, %v2075
    %v2217 = vadd.f32 %v2214, %v2216
    %v2219 = vrot.slane %v2180, 6
    %2220 = vrot.lane.b32.xlu0 %v2219, 96
    %v2221 = vpop.permute.xlu0 %2220
    %v2222 = vsel %vm802, %v2221, 0
    %2224 = vmatprep.subr.mxu0 0.0
    %2225 = vmatpush1.msra.mxu0 %v1443
    %2226 = vmatprep.subr.mxu0 0.0
    %2227 = vmatpush1.msra.mxu0 %v1444
    %2228 = vmatprep.subr.mxu0 0.0
    %2229 = vmatpush1.msra.mxu0 %v1445
    %2230 = vmatprep.subr.mxu0 0.0
    %2231 = vmatpush1.msra.mxu0 %v1446
    %2232 = vmatprep.subr.mxu0 0.0
    %2233 = vmatpush1.msra.mxu0 0.0
    %2234 = vmatprep.subr.mxu0 0.0
    %2235 = vmatpush1.msra.mxu0 0.0
    %2236 = vmatprep.subr.mxu0 0.0
    %2237 = vmatpush1.msra.mxu0 0.0
    %2238 = vmatprep.subr.mxu0 0.0
    %2239 = vmatpush1.msra.mxu0 0.0
    %2240 = vmatprep.subr.mxu0 0.0
    %2241 = vmatpush1.msra.mxu0 0.0
    %2242 = vmatprep.subr.mxu0 0.0
    %2243 = vmatpush1.msra.mxu0 0.0
    %2244 = vmatprep.subr.mxu0 0.0
    %2245 = vmatpush1.msra.mxu0 0.0
    %2246 = vmatprep.subr.mxu0 0.0
    %2247 = vmatpush1.msra.mxu0 0.0
    %2248 = vmatprep.subr.mxu0 0.0
    %2249 = vmatpush1.msra.mxu0 0.0
    %2250 = vmatprep.subr.mxu0 0.0
    %2251 = vmatpush1.msra.mxu0 0.0
    %2252 = vmatprep.subr.mxu0 0.0
    %2253 = vmatpush1.msra.mxu0 0.0
    %2254 = vmatprep.subr.mxu0 0.0
    %2255 = vmatpush1.msra.mxu0 0.0
    %2256 = vmatprep.subr.mxu0 0.0
    %2257 = vmatpush1.msra.mxu0 0.0
    %2258 = vmatprep.subr.mxu0 0.0
    %2259 = vmatpush1.msra.mxu0 0.0
    %2260 = vmatprep.subr.mxu0 0.0
    %2261 = vmatpush1.msra.mxu0 0.0
    %2262 = vmatprep.subr.mxu0 0.0
    %2263 = vmatpush1.msra.mxu0 0.0
    %2264 = vmatprep.subr.mxu0 0.0
    %2265 = vmatpush1.msra.mxu0 0.0
    %2266 = vmatprep.subr.mxu0 0.0
    %2267 = vmatpush1.msra.mxu0 0.0
    %2268 = vmatprep.subr.mxu0 0.0
    %2269 = vmatpush1.msra.mxu0 0.0
    %2270 = vmatprep.subr.mxu0 0.0
    %2271 = vmatpush1.msra.mxu0 0.0
    %2272 = vmatprep.subr.mxu0 0.0
    %2273 = vmatpush1.msra.mxu0 0.0
    %2274 = vmatprep.subr.mxu0 0.0
    %2275 = vmatpush1.msra.mxu0 0.0
    %2276 = vmatprep.subr.mxu0 0.0
    %2277 = vmatpush1.msra.mxu0 0.0
    %2278 = vmatprep.subr.mxu0 0.0
    %2279 = vmatpush1.msra.mxu0 0.0
    %2280 = vmatprep.subr.mxu0 0.0
    %2281 = vmatpush1.msra.mxu0 0.0
    %2282 = vmatprep.subr.mxu0 0.0
    %2283 = vmatpush1.msra.mxu0 0.0
    %2284 = vmatprep.subr.mxu0 0.0
    %2285 = vmatpush1.msra.mxu0 0.0
    %2286 = vmatprep.subr.mxu0 0.0
    %2287 = vmatpush1.msra.mxu0 0.0
    %2288 = vmatprep.mubr.f32.mxu0 0.0
    %2289 = vmatmul.mubr.f32.gmra.mrb[0].mxu0 %v2222
    %v2290 = vpop.f32.mrb[0].mxu0
    %v2291 = vadd.f32 %v1451, %v2290
    %v2292 = vpop.f32.mrb[0].mxu0
    %2293 = vdwg.mxu0
    %v2295 = vsel %vm802, %v2217, 0
    %2297 = vmatprep.subr.mxu0 0.0
    %2298 = vmatpush1.msra.mxu0 %v1617
    %2299 = vmatprep.subr.mxu0 0.0
    %2300 = vmatpush1.msra.mxu0 %v1618
    %2301 = vmatprep.subr.mxu0 0.0
    %2302 = vmatpush1.msra.mxu0 %v1619
    %2303 = vmatprep.subr.mxu0 0.0
    %2304 = vmatpush1.msra.mxu0 %v1620
    %2305 = vmatprep.subr.mxu0 0.0
    %2306 = vmatpush1.msra.mxu0 0.0
    %2307 = vmatprep.subr.mxu0 0.0
    %2308 = vmatpush1.msra.mxu0 0.0
    %2309 = vmatprep.subr.mxu0 0.0
    %2310 = vmatpush1.msra.mxu0 0.0
    %2311 = vmatprep.subr.mxu0 0.0
    %2312 = vmatpush1.msra.mxu0 0.0
    %2313 = vmatprep.subr.mxu0 0.0
    %2314 = vmatpush1.msra.mxu0 0.0
    %2315 = vmatprep.subr.mxu0 0.0
    %2316 = vmatpush1.msra.mxu0 0.0
    %2317 = vmatprep.subr.mxu0 0.0
    %2318 = vmatpush1.msra.mxu0 0.0
    %2319 = vmatprep.subr.mxu0 0.0
    %2320 = vmatpush1.msra.mxu0 0.0
    %2321 = vmatprep.subr.mxu0 0.0
    %2322 = vmatpush1.msra.mxu0 0.0
    %2323 = vmatprep.subr.mxu0 0.0
    %2324 = vmatpush1.msra.mxu0 0.0
    %2325 = vmatprep.subr.mxu0 0.0
    %2326 = vmatpush1.msra.mxu0 0.0
    %2327 = vmatprep.subr.mxu0 0.0
    %2328 = vmatpush1.msra.mxu0 0.0
    %2329 = vmatprep.subr.mxu0 0.0
    %2330 = vmatpush1.msra.mxu0 0.0
    %2331 = vmatprep.subr.mxu0 0.0
    %2332 = vmatpush1.msra.mxu0 0.0
    %2333 = vmatprep.subr.mxu0 0.0
    %2334 = vmatpush1.msra.mxu0 0.0
    %2335 = vmatprep.subr.mxu0 0.0
    %2336 = vmatpush1.msra.mxu0 0.0
    %2337 = vmatprep.subr.mxu0 0.0
    %2338 = vmatpush1.msra.mxu0 0.0
    %2339 = vmatprep.subr.mxu0 0.0
    %2340 = vmatpush1.msra.mxu0 0.0
    %2341 = vmatprep.subr.mxu0 0.0
    %2342 = vmatpush1.msra.mxu0 0.0
    %2343 = vmatprep.subr.mxu0 0.0
    %2344 = vmatpush1.msra.mxu0 0.0
    %2345 = vmatprep.subr.mxu0 0.0
    %2346 = vmatpush1.msra.mxu0 0.0
    %2347 = vmatprep.subr.mxu0 0.0
    %2348 = vmatpush1.msra.mxu0 0.0
    %2349 = vmatprep.subr.mxu0 0.0
    %2350 = vmatpush1.msra.mxu0 0.0
    %2351 = vmatprep.subr.mxu0 0.0
    %2352 = vmatpush1.msra.mxu0 0.0
    %2353 = vmatprep.subr.mxu0 0.0
    %2354 = vmatpush1.msra.mxu0 0.0
    %2355 = vmatprep.subr.mxu0 0.0
    %2356 = vmatpush1.msra.mxu0 0.0
    %2357 = vmatprep.subr.mxu0 0.0
    %2358 = vmatpush1.msra.mxu0 0.0
    %2359 = vmatprep.subr.mxu0 0.0
    %2360 = vmatpush1.msra.mxu0 0.0
    %2361 = vmatprep.mubr.f32.mxu0 0.0
    %2362 = vmatmul.mubr.f32.gmra.mrb[0].mxu0 %v2295
    %v2363 = vpop.f32.mrb[0].mxu0
    %v2364 = vadd.f32 %v1630, %v2363
    %v2365 = vpop.f32.mrb[0].mxu0
    %2366 = vdwg.mxu0
    %v2367 = vld [vmem:[#allocation5 + $0x10] sm:$0x3]
    %v2368 = vld [vmem:[#allocation5] sm:$0xc0]
    %v2369 = vld [vmem:[#allocation5 + $0x8] sm:$0xc0]
    %v2370 = vadd.f32 %v2367, %v2291
    %v2371 = vxor.u32 %v2370, 2147483648
    %v2372 = vmul.f32 %v2371, 1.442695
    %v2373 = vpow.pop %v2372
    %v2374 = vadd.f32 %v2373, 1.0
    %v2375 = vrcp.pop %v2374
    %v2376 = vmul.f32 1.0, %v2375
    %2378 = vrot.lane.b32.xlu0 %v2291, 64
    %v2379 = vpop.permute.xlu0 %2378
    %v2381 = vmul.f32 %v2376, %v2379
    %2383 = vrot.lane.b32.xlu0 %v2381, 64
    %v2384 = vpop.permute.xlu0 %2383
    %v2386 = vadd.f32 %v2367, %v2384
    %v2387 = vtanh.pop %v2386
    %v2388 = vsub.f32 1.0, %v2376
    %2390 = vrot.lane.b32.xlu0 %v2387, 96
    %v2391 = vpop.permute.xlu0 %2390
    %v2393 = vmul.f32 %v2388, %v2391
    %v2395 = vmul.f32 %v2376, %v2219
    %v2396 = vadd.f32 %v2393, %v2395
    %v2398 = vrot.slane %v2364, 2
    %2399 = vrot.lane.b32.xlu0 %v2398, 96
    %v2400 = vpop.permute.xlu0 %2399
    %v2402 = vadd.f32 %v2368, %v2400
    %v2403 = vxor.u32 %v2402, 2147483648
    %v2404 = vmul.f32 %v2403, 1.442695
    %v2405 = vpow.pop %v2404
    %v2406 = vadd.f32 %v2405, 1.0
    %v2407 = vrcp.pop %v2406
    %v2408 = vmul.f32 1.0, %v2407
    %v2409 = vadd.f32 %v2369, %v2400
    %v2410 = vxor.u32 %v2409, 2147483648
    %v2411 = vmul.f32 %v2410, 1.442695
    %v2412 = vpow.pop %v2411
    %v2413 = vadd.f32 %v2412, 1.0
    %v2414 = vrcp.pop %v2413
    %v2415 = vmul.f32 1.0, %v2414
    %2416 = vrot.lane.b32.xlu0 %v2398, 32
    %v2417 = vpop.permute.xlu0 %2416
    %v2419 = vmul.f32 %v2408, %v2417
    %2421 = vrot.lane.b32.xlu0 %v2419, 64
    %v2422 = vpop.permute.xlu0 %2421
    %v2424 = vadd.f32 %v2369, %v2422
    %v2425 = vtanh.pop %v2424
    %v2426 = vsub.f32 1.0, %v2415
    %2428 = vrot.lane.b32.xlu0 %v2425, 96
    %v2429 = vpop.permute.xlu0 %2428
    %v2431 = vmul.f32 %v2426, %v2429
    %v2432 = vrot.slane %v2217, 2
    %v2434 = vmul.f32 %v2415, %v2432
    %v2435 = vadd.f32 %v2431, %v2434
    %2437 = vrot.lane.b32.xlu0 %v2396, 96
    %v2438 = vpop.permute.xlu0 %2437
    %v2439 = vsel %vm802, %v2438, 0
    %2441 = vmatprep.subr.mxu0 0.0
    %2442 = vmatpush1.msra.mxu0 %v1443
    %2443 = vmatprep.subr.mxu0 0.0
    %2444 = vmatpush1.msra.mxu0 %v1444
    %2445 = vmatprep.subr.mxu0 0.0
    %2446 = vmatpush1.msra.mxu0 %v1445
    %2447 = vmatprep.subr.mxu0 0.0
    %2448 = vmatpush1.msra.mxu0 %v1446
    %2449 = vmatprep.subr.mxu0 0.0
    %2450 = vmatpush1.msra.mxu0 0.0
    %2451 = vmatprep.subr.mxu0 0.0
    %2452 = vmatpush1.msra.mxu0 0.0
    %2453 = vmatprep.subr.mxu0 0.0
    %2454 = vmatpush1.msra.mxu0 0.0
    %2455 = vmatprep.subr.mxu0 0.0
    %2456 = vmatpush1.msra.mxu0 0.0
    %2457 = vmatprep.subr.mxu0 0.0
    %2458 = vmatpush1.msra.mxu0 0.0
    %2459 = vmatprep.subr.mxu0 0.0
    %2460 = vmatpush1.msra.mxu0 0.0
    %2461 = vmatprep.subr.mxu0 0.0
    %2462 = vmatpush1.msra.mxu0 0.0
    %2463 = vmatprep.subr.mxu0 0.0
    %2464 = vmatpush1.msra.mxu0 0.0
    %2465 = vmatprep.subr.mxu0 0.0
    %2466 = vmatpush1.msra.mxu0 0.0
    %2467 = vmatprep.subr.mxu0 0.0
    %2468 = vmatpush1.msra.mxu0 0.0
    %2469 = vmatprep.subr.mxu0 0.0
    %2470 = vmatpush1.msra.mxu0 0.0
    %2471 = vmatprep.subr.mxu0 0.0
    %2472 = vmatpush1.msra.mxu0 0.0
    %2473 = vmatprep.subr.mxu0 0.0
    %2474 = vmatpush1.msra.mxu0 0.0
    %2475 = vmatprep.subr.mxu0 0.0
    %2476 = vmatpush1.msra.mxu0 0.0
    %2477 = vmatprep.subr.mxu0 0.0
    %2478 = vmatpush1.msra.mxu0 0.0
    %2479 = vmatprep.subr.mxu0 0.0
    %2480 = vmatpush1.msra.mxu0 0.0
    %2481 = vmatprep.subr.mxu0 0.0
    %2482 = vmatpush1.msra.mxu0 0.0
    %2483 = vmatprep.subr.mxu0 0.0
    %2484 = vmatpush1.msra.mxu0 0.0
    %2485 = vmatprep.subr.mxu0 0.0
    %2486 = vmatpush1.msra.mxu0 0.0
    %2487 = vmatprep.subr.mxu0 0.0
    %2488 = vmatpush1.msra.mxu0 0.0
    %2489 = vmatprep.subr.mxu0 0.0
    %2490 = vmatpush1.msra.mxu0 0.0
    %2491 = vmatprep.subr.mxu0 0.0
    %2492 = vmatpush1.msra.mxu0 0.0
    %2493 = vmatprep.subr.mxu0 0.0
    %2494 = vmatpush1.msra.mxu0 0.0
    %2495 = vmatprep.subr.mxu0 0.0
    %2496 = vmatpush1.msra.mxu0 0.0
    %2497 = vmatprep.subr.mxu0 0.0
    %2498 = vmatpush1.msra.mxu0 0.0
    %2499 = vmatprep.subr.mxu0 0.0
    %2500 = vmatpush1.msra.mxu0 0.0
    %2501 = vmatprep.subr.mxu0 0.0
    %2502 = vmatpush1.msra.mxu0 0.0
    %2503 = vmatprep.subr.mxu0 0.0
    %2504 = vmatpush1.msra.mxu0 0.0
    %2505 = vmatprep.mubr.f32.mxu0 0.0
    %2506 = vmatmul.mubr.f32.gmra.mrb[0].mxu0 %v2439
    %v2507 = vpop.f32.mrb[0].mxu0
    %v2508 = vadd.f32 %v1451, %v2507
    %v2509 = vpop.f32.mrb[0].mxu0
    %2510 = vdwg.mxu0
    %v2512 = vrot.slane %v2435, 6
    %v2513 = vsel %vm802, %v2512, 0
    %2515 = vmatprep.subr.mxu0 0.0
    %2516 = vmatpush1.msra.mxu0 %v1617
    %2517 = vmatprep.subr.mxu0 0.0
    %2518 = vmatpush1.msra.mxu0 %v1618
    %2519 = vmatprep.subr.mxu0 0.0
    %2520 = vmatpush1.msra.mxu0 %v1619
    %2521 = vmatprep.subr.mxu0 0.0
    %2522 = vmatpush1.msra.mxu0 %v1620
    %2523 = vmatprep.subr.mxu0 0.0
    %2524 = vmatpush1.msra.mxu0 0.0
    %2525 = vmatprep.subr.mxu0 0.0
    %2526 = vmatpush1.msra.mxu0 0.0
    %2527 = vmatprep.subr.mxu0 0.0
    %2528 = vmatpush1.msra.mxu0 0.0
    %2529 = vmatprep.subr.mxu0 0.0
    %2530 = vmatpush1.msra.mxu0 0.0
    %2531 = vmatprep.subr.mxu0 0.0
    %2532 = vmatpush1.msra.mxu0 0.0
    %2533 = vmatprep.subr.mxu0 0.0
    %2534 = vmatpush1.msra.mxu0 0.0
    %2535 = vmatprep.subr.mxu0 0.0
    %2536 = vmatpush1.msra.mxu0 0.0
    %2537 = vmatprep.subr.mxu0 0.0
    %2538 = vmatpush1.msra.mxu0 0.0
    %2539 = vmatprep.subr.mxu0 0.0
    %2540 = vmatpush1.msra.mxu0 0.0
    %2541 = vmatprep.subr.mxu0 0.0
    %2542 = vmatpush1.msra.mxu0 0.0
    %2543 = vmatprep.subr.mxu0 0.0
    %2544 = vmatpush1.msra.mxu0 0.0
    %2545 = vmatprep.subr.mxu0 0.0
    %2546 = vmatpush1.msra.mxu0 0.0
    %2547 = vmatprep.subr.mxu0 0.0
    %2548 = vmatpush1.msra.mxu0 0.0
    %2549 = vmatprep.subr.mxu0 0.0
    %2550 = vmatpush1.msra.mxu0 0.0
    %2551 = vmatprep.subr.mxu0 0.0
    %2552 = vmatpush1.msra.mxu0 0.0
    %2553 = vmatprep.subr.mxu0 0.0
    %2554 = vmatpush1.msra.mxu0 0.0
    %2555 = vmatprep.subr.mxu0 0.0
    %2556 = vmatpush1.msra.mxu0 0.0
    %2557 = vmatprep.subr.mxu0 0.0
    %2558 = vmatpush1.msra.mxu0 0.0
    %2559 = vmatprep.subr.mxu0 0.0
    %2560 = vmatpush1.msra.mxu0 0.0
    %2561 = vmatprep.subr.mxu0 0.0
    %2562 = vmatpush1.msra.mxu0 0.0
    %2563 = vmatprep.subr.mxu0 0.0
    %2564 = vmatpush1.msra.mxu0 0.0
    %2565 = vmatprep.subr.mxu0 0.0
    %2566 = vmatpush1.msra.mxu0 0.0
    %2567 = vmatprep.subr.mxu0 0.0
    %2568 = vmatpush1.msra.mxu0 0.0
    %2569 = vmatprep.subr.mxu0 0.0
    %2570 = vmatpush1.msra.mxu0 0.0
    %2571 = vmatprep.subr.mxu0 0.0
    %2572 = vmatpush1.msra.mxu0 0.0
    %2573 = vmatprep.subr.mxu0 0.0
    %2574 = vmatpush1.msra.mxu0 0.0
    %2575 = vmatprep.subr.mxu0 0.0
    %2576 = vmatpush1.msra.mxu0 0.0
    %2577 = vmatprep.subr.mxu0 0.0
    %2578 = vmatpush1.msra.mxu0 0.0
    %2579 = vmatprep.mubr.f32.mxu0 0.0
    %2580 = vmatmul.mubr.f32.gmra.mrb[0].mxu0 %v2513
    %v2581 = vpop.f32.mrb[0].mxu0
    %v2582 = vadd.f32 %v1630, %v2581
    %v2583 = vpop.f32.mrb[0].mxu0
    %2584 = vdwg.mxu0
    %v2585 = vld [vmem:[#allocation5 + $0x10] sm:$0xc]
    %v2586 = vld [vmem:[#allocation5] sm:$0x30]
    %v2587 = vld [vmem:[#allocation5 + $0x8] sm:$0x30]
    %v2589 = vrot.slane %v2508, 6
    %v2591 = vadd.f32 %v2585, %v2589
    %v2592 = vxor.u32 %v2591, 2147483648
    %v2593 = vmul.f32 %v2592, 1.442695
    %v2594 = vpow.pop %v2593
    %v2595 = vadd.f32 %v2594, 1.0
    %v2596 = vrcp.pop %v2595
    %v2597 = vmul.f32 1.0, %v2596
    %2598 = vrot.lane.b32.xlu0 %v2589, 64
    %v2599 = vpop.permute.xlu0 %2598
    %v2601 = vmul.f32 %v2597, %v2599
    %2603 = vrot.lane.b32.xlu0 %v2601, 64
    %v2604 = vpop.permute.xlu0 %2603
    %v2606 = vadd.f32 %v2585, %v2604
    %v2607 = vtanh.pop %v2606
    %v2608 = vsub.f32 1.0, %v2597
    %2610 = vrot.lane.b32.xlu0 %v2607, 96
    %v2611 = vpop.permute.xlu0 %2610
    %v2613 = vmul.f32 %v2608, %v2611
    %v2614 = vrot.slane %v2396, 6
    %v2616 = vmul.f32 %v2597, %v2614
    %v2617 = vadd.f32 %v2613, %v2616
    %v2619 = vrot.slane %v2582, 4
    %2620 = vrot.lane.b32.xlu0 %v2619, 96
    %v2621 = vpop.permute.xlu0 %2620
    %v2623 = vadd.f32 %v2586, %v2621
    %v2624 = vxor.u32 %v2623, 2147483648
    %v2625 = vmul.f32 %v2624, 1.442695
    %v2626 = vpow.pop %v2625
    %v2627 = vadd.f32 %v2626, 1.0
    %v2628 = vrcp.pop %v2627
    %v2629 = vmul.f32 1.0, %v2628
    %v2630 = vadd.f32 %v2587, %v2621
    %v2631 = vxor.u32 %v2630, 2147483648
    %v2632 = vmul.f32 %v2631, 1.442695
    %v2633 = vpow.pop %v2632
    %v2634 = vadd.f32 %v2633, 1.0
    %v2635 = vrcp.pop %v2634
    %v2636 = vmul.f32 1.0, %v2635
    %2637 = vrot.lane.b32.xlu0 %v2619, 32
    %v2638 = vpop.permute.xlu0 %2637
    %v2640 = vmul.f32 %v2629, %v2638
    %2642 = vrot.lane.b32.xlu0 %v2640, 64
    %v2643 = vpop.permute.xlu0 %2642
    %v2645 = vadd.f32 %v2587, %v2643
    %v2646 = vtanh.pop %v2645
    %v2647 = vsub.f32 1.0, %v2636
    %2649 = vrot.lane.b32.xlu0 %v2646, 96
    %v2650 = vpop.permute.xlu0 %2649
    %v2652 = vmul.f32 %v2647, %v2650
    %v2653 = vrot.slane %v2435, 2
    %v2655 = vmul.f32 %v2636, %v2653
    %v2656 = vadd.f32 %v2652, %v2655
    %v2658 = vrot.slane %v2617, 2
    %2659 = vrot.lane.b32.xlu0 %v2658, 96
    %v2660 = vpop.permute.xlu0 %2659
    %v2661 = vsel %vm802, %v2660, 0
    %2663 = vmatprep.subr.mxu0 0.0
    %2664 = vmatpush1.msra.mxu0 %v1443
    %2665 = vmatprep.subr.mxu0 0.0
    %2666 = vmatpush1.msra.mxu0 %v1444
    %2667 = vmatprep.subr.mxu0 0.0
    %2668 = vmatpush1.msra.mxu0 %v1445
    %2669 = vmatprep.subr.mxu0 0.0
    %2670 = vmatpush1.msra.mxu0 %v1446
    %2671 = vmatprep.subr.mxu0 0.0
    %2672 = vmatpush1.msra.mxu0 0.0
    %2673 = vmatprep.subr.mxu0 0.0
    %2674 = vmatpush1.msra.mxu0 0.0
    %2675 = vmatprep.subr.mxu0 0.0
    %2676 = vmatpush1.msra.mxu0 0.0
    %2677 = vmatprep.subr.mxu0 0.0
    %2678 = vmatpush1.msra.mxu0 0.0
    %2679 = vmatprep.subr.mxu0 0.0
    %2680 = vmatpush1.msra.mxu0 0.0
    %2681 = vmatprep.subr.mxu0 0.0
    %2682 = vmatpush1.msra.mxu0 0.0
    %2683 = vmatprep.subr.mxu0 0.0
    %2684 = vmatpush1.msra.mxu0 0.0
    %2685 = vmatprep.subr.mxu0 0.0
    %2686 = vmatpush1.msra.mxu0 0.0
    %2687 = vmatprep.subr.mxu0 0.0
    %2688 = vmatpush1.msra.mxu0 0.0
    %2689 = vmatprep.subr.mxu0 0.0
    %2690 = vmatpush1.msra.mxu0 0.0
    %2691 = vmatprep.subr.mxu0 0.0
    %2692 = vmatpush1.msra.mxu0 0.0
    %2693 = vmatprep.subr.mxu0 0.0
    %2694 = vmatpush1.msra.mxu0 0.0
    %2695 = vmatprep.subr.mxu0 0.0
    %2696 = vmatpush1.msra.mxu0 0.0
    %2697 = vmatprep.subr.mxu0 0.0
    %2698 = vmatpush1.msra.mxu0 0.0
    %2699 = vmatprep.subr.mxu0 0.0
    %2700 = vmatpush1.msra.mxu0 0.0
    %2701 = vmatprep.subr.mxu0 0.0
    %2702 = vmatpush1.msra.mxu0 0.0
    %2703 = vmatprep.subr.mxu0 0.0
    %2704 = vmatpush1.msra.mxu0 0.0
    %2705 = vmatprep.subr.mxu0 0.0
    %2706 = vmatpush1.msra.mxu0 0.0
    %2707 = vmatprep.subr.mxu0 0.0
    %2708 = vmatpush1.msra.mxu0 0.0
    %2709 = vmatprep.subr.mxu0 0.0
    %2710 = vmatpush1.msra.mxu0 0.0
    %2711 = vmatprep.subr.mxu0 0.0
    %2712 = vmatpush1.msra.mxu0 0.0
    %2713 = vmatprep.subr.mxu0 0.0
    %2714 = vmatpush1.msra.mxu0 0.0
    %2715 = vmatprep.subr.mxu0 0.0
    %2716 = vmatpush1.msra.mxu0 0.0
    %2717 = vmatprep.subr.mxu0 0.0
    %2718 = vmatpush1.msra.mxu0 0.0
    %2719 = vmatprep.subr.mxu0 0.0
    %2720 = vmatpush1.msra.mxu0 0.0
    %2721 = vmatprep.subr.mxu0 0.0
    %2722 = vmatpush1.msra.mxu0 0.0
    %2723 = vmatprep.subr.mxu0 0.0
    %2724 = vmatpush1.msra.mxu0 0.0
    %2725 = vmatprep.subr.mxu0 0.0
    %2726 = vmatpush1.msra.mxu0 0.0
    %2727 = vmatprep.mubr.f32.mxu0 0.0
    %2728 = vmatmul.mubr.f32.gmra.mrb[0].mxu0 %v2661
    %v2729 = vpop.f32.mrb[0].mxu0
    %v2730 = vadd.f32 %v1451, %v2729
    %v2731 = vpop.f32.mrb[0].mxu0
    %2732 = vdwg.mxu0
    %v2734 = vrot.slane %v2656, 4
    %v2735 = vsel %vm802, %v2734, 0
    %2737 = vmatprep.subr.mxu0 0.0
    %2738 = vmatpush1.msra.mxu0 %v1617
    %2739 = vmatprep.subr.mxu0 0.0
    %2740 = vmatpush1.msra.mxu0 %v1618
    %2741 = vmatprep.subr.mxu0 0.0
    %2742 = vmatpush1.msra.mxu0 %v1619
    %2743 = vmatprep.subr.mxu0 0.0
    %2744 = vmatpush1.msra.mxu0 %v1620
    %2745 = vmatprep.subr.mxu0 0.0
    %2746 = vmatpush1.msra.mxu0 0.0
    %2747 = vmatprep.subr.mxu0 0.0
    %2748 = vmatpush1.msra.mxu0 0.0
    %2749 = vmatprep.subr.mxu0 0.0
    %2750 = vmatpush1.msra.mxu0 0.0
    %2751 = vmatprep.subr.mxu0 0.0
    %2752 = vmatpush1.msra.mxu0 0.0
    %2753 = vmatprep.subr.mxu0 0.0
    %2754 = vmatpush1.msra.mxu0 0.0
    %2755 = vmatprep.subr.mxu0 0.0
    %2756 = vmatpush1.msra.mxu0 0.0
    %2757 = vmatprep.subr.mxu0 0.0
    %2758 = vmatpush1.msra.mxu0 0.0
    %2759 = vmatprep.subr.mxu0 0.0
    %2760 = vmatpush1.msra.mxu0 0.0
    %2761 = vmatprep.subr.mxu0 0.0
    %2762 = vmatpush1.msra.mxu0 0.0
    %2763 = vmatprep.subr.mxu0 0.0
    %2764 = vmatpush1.msra.mxu0 0.0
    %2765 = vmatprep.subr.mxu0 0.0
    %2766 = vmatpush1.msra.mxu0 0.0
    %2767 = vmatprep.subr.mxu0 0.0
    %2768 = vmatpush1.msra.mxu0 0.0
    %2769 = vmatprep.subr.mxu0 0.0
    %2770 = vmatpush1.msra.mxu0 0.0
    %2771 = vmatprep.subr.mxu0 0.0
    %2772 = vmatpush1.msra.mxu0 0.0
    %2773 = vmatprep.subr.mxu0 0.0
    %2774 = vmatpush1.msra.mxu0 0.0
    %2775 = vmatprep.subr.mxu0 0.0
    %2776 = vmatpush1.msra.mxu0 0.0
    %2777 = vmatprep.subr.mxu0 0.0
    %2778 = vmatpush1.msra.mxu0 0.0
    %2779 = vmatprep.subr.mxu0 0.0
    %2780 = vmatpush1.msra.mxu0 0.0
    %2781 = vmatprep.subr.mxu0 0.0
    %2782 = vmatpush1.msra.mxu0 0.0
    %2783 = vmatprep.subr.mxu0 0.0
    %2784 = vmatpush1.msra.mxu0 0.0
    %2785 = vmatprep.subr.mxu0 0.0
    %2786 = vmatpush1.msra.mxu0 0.0
    %2787 = vmatprep.subr.mxu0 0.0
    %2788 = vmatpush1.msra.mxu0 0.0
    %2789 = vmatprep.subr.mxu0 0.0
    %2790 = vmatpush1.msra.mxu0 0.0
    %2791 = vmatprep.subr.mxu0 0.0
    %2792 = vmatpush1.msra.mxu0 0.0
    %2793 = vmatprep.subr.mxu0 0.0
    %2794 = vmatpush1.msra.mxu0 0.0
    %2795 = vmatprep.subr.mxu0 0.0
    %2796 = vmatpush1.msra.mxu0 0.0
    %2797 = vmatprep.subr.mxu0 0.0
    %2798 = vmatpush1.msra.mxu0 0.0
    %2799 = vmatprep.subr.mxu0 0.0
    %2800 = vmatpush1.msra.mxu0 0.0
    %2801 = vmatprep.mubr.f32.mxu0 0.0
    %2802 = vmatmul.mubr.f32.gmra.mrb[0].mxu0 %v2735
    %v2803 = vpop.f32.mrb[0].mxu0
    %v2804 = vadd.f32 %v1630, %v2803
    %v2805 = vpop.f32.mrb[0].mxu0
    %2806 = vdwg.mxu0
    %v2807 = vld [vmem:[#allocation5 + $0x10] sm:$0x30]
    %v2808 = vld [vmem:[#allocation5] sm:$0xc]
    %v2809 = vld [vmem:[#allocation5 + $0x8] sm:$0xc]
    %v2811 = vrot.slane %v2730, 4
    %v2813 = vadd.f32 %v2807, %v2811
    %v2814 = vxor.u32 %v2813, 2147483648
    %v2815 = vmul.f32 %v2814, 1.442695
    %v2816 = vpow.pop %v2815
    %v2817 = vadd.f32 %v2816, 1.0
    %v2818 = vrcp.pop %v2817
    %v2819 = vmul.f32 1.0, %v2818
    %2820 = vrot.lane.b32.xlu0 %v2811, 64
    %v2821 = vpop.permute.xlu0 %2820
    %v2823 = vmul.f32 %v2819, %v2821
    %2825 = vrot.lane.b32.xlu0 %v2823, 64
    %v2826 = vpop.permute.xlu0 %2825
    %v2828 = vadd.f32 %v2807, %v2826
    %v2829 = vtanh.pop %v2828
    %v2830 = vsub.f32 1.0, %v2819
    %2832 = vrot.lane.b32.xlu0 %v2829, 96
    %v2833 = vpop.permute.xlu0 %2832
    %v2835 = vmul.f32 %v2830, %v2833
    %v2836 = vrot.slane %v2617, 6
    %v2838 = vmul.f32 %v2819, %v2836
    %v2839 = vadd.f32 %v2835, %v2838
    %v2841 = vrot.slane %v2804, 6
    %2842 = vrot.lane.b32.xlu0 %v2841, 96
    %v2843 = vpop.permute.xlu0 %2842
    %v2845 = vadd.f32 %v2808, %v2843
    %v2846 = vxor.u32 %v2845, 2147483648
    %v2847 = vmul.f32 %v2846, 1.442695
    %v2848 = vpow.pop %v2847
    %v2849 = vadd.f32 %v2848, 1.0
    %v2850 = vrcp.pop %v2849
    %v2851 = vmul.f32 1.0, %v2850
    %v2852 = vadd.f32 %v2809, %v2843
    %v2853 = vxor.u32 %v2852, 2147483648
    %v2854 = vmul.f32 %v2853, 1.442695
    %v2855 = vpow.pop %v2854
    %v2856 = vadd.f32 %v2855, 1.0
    %v2857 = vrcp.pop %v2856
    %v2858 = vmul.f32 1.0, %v2857
    %2859 = vrot.lane.b32.xlu0 %v2841, 32
    %v2860 = vpop.permute.xlu0 %2859
    %v2862 = vmul.f32 %v2851, %v2860
    %2864 = vrot.lane.b32.xlu0 %v2862, 64
    %v2865 = vpop.permute.xlu0 %2864
    %v2867 = vadd.f32 %v2809, %v2865
    %v2868 = vtanh.pop %v2867
    %v2869 = vsub.f32 1.0, %v2858
    %2871 = vrot.lane.b32.xlu0 %v2868, 96
    %v2872 = vpop.permute.xlu0 %2871
    %v2874 = vmul.f32 %v2869, %v2872
    %v2875 = vrot.slane %v2656, 2
    %v2877 = vmul.f32 %v2858, %v2875
    %v2878 = vadd.f32 %v2874, %v2877
    %v2880 = vrot.slane %v2839, 4
    %2881 = vrot.lane.b32.xlu0 %v2880, 96
    %v2882 = vpop.permute.xlu0 %2881
    %v2883 = vsel %vm802, %v2882, 0
    %2885 = vmatprep.subr.mxu0 0.0
    %2886 = vmatpush1.msra.mxu0 %v1443
    %2887 = vmatprep.subr.mxu0 0.0
    %2888 = vmatpush1.msra.mxu0 %v1444
    %2889 = vmatprep.subr.mxu0 0.0
    %2890 = vmatpush1.msra.mxu0 %v1445
    %2891 = vmatprep.subr.mxu0 0.0
    %2892 = vmatpush1.msra.mxu0 %v1446
    %2893 = vmatprep.subr.mxu0 0.0
    %2894 = vmatpush1.msra.mxu0 0.0
    %2895 = vmatprep.subr.mxu0 0.0
    %2896 = vmatpush1.msra.mxu0 0.0
    %2897 = vmatprep.subr.mxu0 0.0
    %2898 = vmatpush1.msra.mxu0 0.0
    %2899 = vmatprep.subr.mxu0 0.0
    %2900 = vmatpush1.msra.mxu0 0.0
    %2901 = vmatprep.subr.mxu0 0.0
    %2902 = vmatpush1.msra.mxu0 0.0
    %2903 = vmatprep.subr.mxu0 0.0
    %2904 = vmatpush1.msra.mxu0 0.0
    %2905 = vmatprep.subr.mxu0 0.0
    %2906 = vmatpush1.msra.mxu0 0.0
    %2907 = vmatprep.subr.mxu0 0.0
    %2908 = vmatpush1.msra.mxu0 0.0
    %2909 = vmatprep.subr.mxu0 0.0
    %2910 = vmatpush1.msra.mxu0 0.0
    %2911 = vmatprep.subr.mxu0 0.0
    %2912 = vmatpush1.msra.mxu0 0.0
    %2913 = vmatprep.subr.mxu0 0.0
    %2914 = vmatpush1.msra.mxu0 0.0
    %2915 = vmatprep.subr.mxu0 0.0
    %2916 = vmatpush1.msra.mxu0 0.0
    %2917 = vmatprep.subr.mxu0 0.0
    %2918 = vmatpush1.msra.mxu0 0.0
    %2919 = vmatprep.subr.mxu0 0.0
    %2920 = vmatpush1.msra.mxu0 0.0
    %2921 = vmatprep.subr.mxu0 0.0
    %2922 = vmatpush1.msra.mxu0 0.0
    %2923 = vmatprep.subr.mxu0 0.0
    %2924 = vmatpush1.msra.mxu0 0.0
    %2925 = vmatprep.subr.mxu0 0.0
    %2926 = vmatpush1.msra.mxu0 0.0
    %2927 = vmatprep.subr.mxu0 0.0
    %2928 = vmatpush1.msra.mxu0 0.0
    %2929 = vmatprep.subr.mxu0 0.0
    %2930 = vmatpush1.msra.mxu0 0.0
    %2931 = vmatprep.subr.mxu0 0.0
    %2932 = vmatpush1.msra.mxu0 0.0
    %2933 = vmatprep.subr.mxu0 0.0
    %2934 = vmatpush1.msra.mxu0 0.0
    %2935 = vmatprep.subr.mxu0 0.0
    %2936 = vmatpush1.msra.mxu0 0.0
    %2937 = vmatprep.subr.mxu0 0.0
    %2938 = vmatpush1.msra.mxu0 0.0
    %2939 = vmatprep.subr.mxu0 0.0
    %2940 = vmatpush1.msra.mxu0 0.0
    %2941 = vmatprep.subr.mxu0 0.0
    %2942 = vmatpush1.msra.mxu0 0.0
    %2943 = vmatprep.subr.mxu0 0.0
    %2944 = vmatpush1.msra.mxu0 0.0
    %2945 = vmatprep.subr.mxu0 0.0
    %2946 = vmatpush1.msra.mxu0 0.0
    %2947 = vmatprep.subr.mxu0 0.0
    %2948 = vmatpush1.msra.mxu0 0.0
    %2949 = vmatprep.mubr.f32.mxu0 0.0
    %2950 = vmatmul.mubr.f32.gmra.mrb[0].mxu0 %v2883
    %v2951 = vpop.f32.mrb[0].mxu0
    %v2952 = vadd.f32 %v1451, %v2951
    %v2953 = vpop.f32.mrb[0].mxu0
    %2954 = vdwg.mxu0
    %v2956 = vrot.slane %v2878, 2
    %v2957 = vsel %vm802, %v2956, 0
    %2959 = vmatprep.subr.mxu0 0.0
    %2960 = vmatpush1.msra.mxu0 %v1617
    %2961 = vmatprep.subr.mxu0 0.0
    %2962 = vmatpush1.msra.mxu0 %v1618
    %2963 = vmatprep.subr.mxu0 0.0
    %2964 = vmatpush1.msra.mxu0 %v1619
    %2965 = vmatprep.subr.mxu0 0.0
    %2966 = vmatpush1.msra.mxu0 %v1620
    %2967 = vmatprep.subr.mxu0 0.0
    %2968 = vmatpush1.msra.mxu0 0.0
    %2969 = vmatprep.subr.mxu0 0.0
    %2970 = vmatpush1.msra.mxu0 0.0
    %2971 = vmatprep.subr.mxu0 0.0
    %2972 = vmatpush1.msra.mxu0 0.0
    %2973 = vmatprep.subr.mxu0 0.0
    %2974 = vmatpush1.msra.mxu0 0.0
    %2975 = vmatprep.subr.mxu0 0.0
    %2976 = vmatpush1.msra.mxu0 0.0
    %2977 = vmatprep.subr.mxu0 0.0
    %2978 = vmatpush1.msra.mxu0 0.0
    %2979 = vmatprep.subr.mxu0 0.0
    %2980 = vmatpush1.msra.mxu0 0.0
    %2981 = vmatprep.subr.mxu0 0.0
    %2982 = vmatpush1.msra.mxu0 0.0
    %2983 = vmatprep.subr.mxu0 0.0
    %2984 = vmatpush1.msra.mxu0 0.0
    %2985 = vmatprep.subr.mxu0 0.0
    %2986 = vmatpush1.msra.mxu0 0.0
    %2987 = vmatprep.subr.mxu0 0.0
    %2988 = vmatpush1.msra.mxu0 0.0
    %2989 = vmatprep.subr.mxu0 0.0
    %2990 = vmatpush1.msra.mxu0 0.0
    %2991 = vmatprep.subr.mxu0 0.0
    %2992 = vmatpush1.msra.mxu0 0.0
    %2993 = vmatprep.subr.mxu0 0.0
    %2994 = vmatpush1.msra.mxu0 0.0
    %2995 = vmatprep.subr.mxu0 0.0
    %2996 = vmatpush1.msra.mxu0 0.0
    %2997 = vmatprep.subr.mxu0 0.0
    %2998 = vmatpush1.msra.mxu0 0.0
    %2999 = vmatprep.subr.mxu0 0.0
    %3000 = vmatpush1.msra.mxu0 0.0
    %3001 = vmatprep.subr.mxu0 0.0
    %3002 = vmatpush1.msra.mxu0 0.0
    %3003 = vmatprep.subr.mxu0 0.0
    %3004 = vmatpush1.msra.mxu0 0.0
    %3005 = vmatprep.subr.mxu0 0.0
    %3006 = vmatpush1.msra.mxu0 0.0
    %3007 = vmatprep.subr.mxu0 0.0
    %3008 = vmatpush1.msra.mxu0 0.0
    %3009 = vmatprep.subr.mxu0 0.0
    %3010 = vmatpush1.msra.mxu0 0.0
    %3011 = vmatprep.subr.mxu0 0.0
    %3012 = vmatpush1.msra.mxu0 0.0
    %3013 = vmatprep.subr.mxu0 0.0
    %3014 = vmatpush1.msra.mxu0 0.0
    %3015 = vmatprep.subr.mxu0 0.0
    %3016 = vmatpush1.msra.mxu0 0.0
    %3017 = vmatprep.subr.mxu0 0.0
    %3018 = vmatpush1.msra.mxu0 0.0
    %3019 = vmatprep.subr.mxu0 0.0
    %3020 = vmatpush1.msra.mxu0 0.0
    %3021 = vmatprep.subr.mxu0 0.0
    %3022 = vmatpush1.msra.mxu0 0.0
    %3023 = vmatprep.mubr.f32.mxu0 0.0
    %3024 = vmatmul.mubr.f32.gmra.mrb[0].mxu0 %v2957
    %v3025 = vpop.f32.mrb[0].mxu0
    %v3026 = vadd.f32 %v1630, %v3025
    %v3027 = vpop.f32.mrb[0].mxu0
    %3028 = vdwg.mxu0
    %v3029 = vld [vmem:[#allocation5 + $0x10] sm:$0xc0]
    %v3030 = vld [vmem:[#allocation5] sm:$0x3]
    %v3031 = vld [vmem:[#allocation5 + $0x8] sm:$0x3]
    %v3033 = vrot.slane %v2952, 2
    %v3035 = vadd.f32 %v3029, %v3033
    %v3036 = vxor.u32 %v3035, 2147483648
    %v3037 = vmul.f32 %v3036, 1.442695
    %v3038 = vpow.pop %v3037
    %v3039 = vadd.f32 %v3038, 1.0
    %v3040 = vrcp.pop %v3039
    %v3041 = vmul.f32 1.0, %v3040
    %3042 = vrot.lane.b32.xlu0 %v3033, 64
    %v3043 = vpop.permute.xlu0 %3042
    %v3045 = vmul.f32 %v3041, %v3043
    %3047 = vrot.lane.b32.xlu0 %v3045, 64
    %v3048 = vpop.permute.xlu0 %3047
    %v3050 = vadd.f32 %v3029, %v3048
    %v3051 = vtanh.pop %v3050
    %v3052 = vsub.f32 1.0, %v3041
    %3054 = vrot.lane.b32.xlu0 %v3051, 96
    %v3055 = vpop.permute.xlu0 %3054
    %v3057 = vmul.f32 %v3052, %v3055
    %v3058 = vrot.slane %v2839, 6
    %v3060 = vmul.f32 %v3041, %v3058
    %v3061 = vadd.f32 %v3057, %v3060
    %3063 = vrot.lane.b32.xlu0 %v3026, 96
    %v3064 = vpop.permute.xlu0 %3063
    %v3066 = vadd.f32 %v3030, %v3064
    %v3067 = vxor.u32 %v3066, 2147483648
    %v3068 = vmul.f32 %v3067, 1.442695
    %v3069 = vpow.pop %v3068
    %v3070 = vadd.f32 %v3069, 1.0
    %v3071 = vrcp.pop %v3070
    %v3072 = vmul.f32 1.0, %v3071
    %v3073 = vadd.f32 %v3031, %v3064
    %v3074 = vxor.u32 %v3073, 2147483648
    %v3075 = vmul.f32 %v3074, 1.442695
    %v3076 = vpow.pop %v3075
    %v3077 = vadd.f32 %v3076, 1.0
    %v3078 = vrcp.pop %v3077
    %v3079 = vmul.f32 1.0, %v3078
    %3080 = vrot.lane.b32.xlu0 %v3026, 32
    %v3081 = vpop.permute.xlu0 %3080
    %v3083 = vmul.f32 %v3072, %v3081
    %3085 = vrot.lane.b32.xlu0 %v3083, 64
    %v3086 = vpop.permute.xlu0 %3085
    %v3088 = vadd.f32 %v3031, %v3086
    %v3089 = vtanh.pop %v3088
    %v3090 = vsub.f32 1.0, %v3079
    %3092 = vrot.lane.b32.xlu0 %v3089, 96
    %v3093 = vpop.permute.xlu0 %3092
    %v3095 = vmul.f32 %v3090, %v3093
    %v3097 = vmul.f32 %v3079, %v2956
    %v3098 = vadd.f32 %v3095, %v3097
    %3101 = vrot.lane.b32.xlu0 %v3098, 32
    %v3102 = vpop.permute.xlu0 %3101
    %v3104 = vsel %vm802, %v1518, %v3102
    %3105 = vst.msk [vmem:[#allocation6] sm:$0x3] %vm30, %v3104
    %3106 = vrot.lane.b32.xlu0 %v1736, 96
    %v3107 = vpop.permute.xlu0 %3106
    %3109 = vrot.lane.b32.xlu0 %v2878, 32
    %v3110 = vpop.permute.xlu0 %3109
    %v3112 = vsel %vm802, %v3107, %v3110
    %vm3113 = vcmask 519170
    %3114 = vst.msk [vmem:[#allocation6] sm:$0xc] %vm3113, %v3112
    %3115 = vrot.lane.b32.xlu0 %v1958, 96
    %v3116 = vpop.permute.xlu0 %3115
    %3118 = vrot.lane.b32.xlu0 %v2656, 32
    %v3119 = vpop.permute.xlu0 %3118
    %v3121 = vsel %vm802, %v3116, %v3119
    %vm3122 = vcmask 521220
    %3123 = vst.msk [vmem:[#allocation6] sm:$0x30] %vm3122, %v3121
    %3124 = vrot.lane.b32.xlu0 %v2180, 96
    %v3125 = vpop.permute.xlu0 %3124
    %3127 = vrot.lane.b32.xlu0 %v2435, 32
    %v3128 = vpop.permute.xlu0 %3127
    %v3130 = vsel %vm802, %v3125, %v3128
    %vm3131 = vcmask 523270
    %3132 = vst.msk [vmem:[#allocation6] sm:$0xc0] %vm3131, %v3130
    %3134 = vrot.lane.b32.xlu0 %v2217, 32
    %v3135 = vpop.permute.xlu0 %3134
    %v3137 = vsel %vm802, %v2438, %v3135
    %3138 = vst.msk [vmem:[#allocation6 + $0x8] sm:$0x3] %vm30, %v3137
    %3139 = vrot.lane.b32.xlu0 %v2617, 96
    %v3140 = vpop.permute.xlu0 %3139
    %3142 = vrot.lane.b32.xlu0 %v1997, 32
    %v3143 = vpop.permute.xlu0 %3142
    %v3145 = vsel %vm802, %v3140, %v3143
    %3146 = vst.msk [vmem:[#allocation6 + $0x8] sm:$0xc] %vm3113, %v3145
    %3147 = vrot.lane.b32.xlu0 %v2839, 96
    %v3148 = vpop.permute.xlu0 %3147
    %3150 = vrot.lane.b32.xlu0 %v1775, 32
    %v3151 = vpop.permute.xlu0 %3150
    %v3153 = vsel %vm802, %v3148, %v3151
    %3154 = vst.msk [vmem:[#allocation6 + $0x8] sm:$0x30] %vm3122, %v3153
    %3156 = vrot.lane.b32.xlu0 %v3061, 96
    %v3157 = vpop.permute.xlu0 %3156
    %3159 = vrot.lane.b32.xlu0 %v1515, 32
    %v3160 = vpop.permute.xlu0 %3159
    %v3162 = vsel %vm802, %v3157, %v3160
    %3163 = vst.msk [vmem:[#allocation6 + $0x8] sm:$0xc0] %vm3131, %v3162
    %v3164 = vld [vmem:[#allocation5 + $0x8] sm:$0xff]
    %v3165 = vld [vmem:[#allocation5 + $0x18] sm:$0xff]
    %v3166 = vld [vmem:[#allocation6] sm:$0xff]
    %v3167 = vld [vmem:[#allocation6 + $0x8] sm:$0xff]
    %3170 = vrot.lane.b32.xlu0 %v3164, 64
    %v3171 = vpop.permute.xlu0 %3170
    %3172 = vrot.lane.b32.xlu0 %v3165, 64
    %v3173 = vpop.permute.xlu0 %3172
    %v3176 = vadd.f32 %v3166, %v3171
    %v3177 = vadd.f32 %v3167, %v3173
    %v3178 = vld [vmem:[#allocation7 + $0x2c0] sm:$0xff]
    %v3179 = vld [vmem:[#allocation7 + $0x2c8] sm:$0xff]
    %v3180 = vld [vmem:[#allocation7 + $0x2d0] sm:$0xff]
    %v3181 = vld [vmem:[#allocation7 + $0x2d8] sm:$0xff]
    %v3182 = vld [vmem:[#allocation7 + $0x2e0] sm:$0xff]
    %v3183 = vld [vmem:[#allocation7 + $0x2e8] sm:$0xff]
    %v3184 = vld [vmem:[#allocation7 + $0x2f0] sm:$0xff]
    %v3185 = vld [vmem:[#allocation7 + $0x2f8] sm:$0xff]
    %v3186 = vld [vmem:[%s2 + $0xb7] ss:$0 sm:$0xff]
    %v3188 = vsel %vm484, %v3176, 0
    %v3191 = vsel %vm484, %v3177, 0
    %3193 = vmatprep.subr.mxu0 0.0
    %3194 = vmatpush1.msra.mxu0 %v3178
    %3195 = vmatprep.subr.mxu0 0.0
    %3196 = vmatpush1.msra.mxu0 %v3179
    %3197 = vmatprep.subr.mxu0 0.0
    %3198 = vmatpush1.msra.mxu0 %v3180
    %3199 = vmatprep.subr.mxu0 0.0
    %3200 = vmatpush1.msra.mxu0 %v3181
    %3201 = vmatprep.subr.mxu0 0.0
    %3202 = vmatpush1.msra.mxu0 %v3182
    %3203 = vmatprep.subr.mxu0 0.0
    %3204 = vmatpush1.msra.mxu0 %v3183
    %3205 = vmatprep.subr.mxu0 0.0
    %3206 = vmatpush1.msra.mxu0 %v3184
    %3207 = vmatprep.subr.mxu0 0.0
    %3208 = vmatpush1.msra.mxu0 %v3185
    %3209 = vmatprep.subr.mxu0 0.0
    %3210 = vmatpush1.msra.mxu0 0.0
    %3211 = vmatprep.subr.mxu0 0.0
    %3212 = vmatpush1.msra.mxu0 0.0
    %3213 = vmatprep.subr.mxu0 0.0
    %3214 = vmatpush1.msra.mxu0 0.0
    %3215 = vmatprep.subr.mxu0 0.0
    %3216 = vmatpush1.msra.mxu0 0.0
    %3217 = vmatprep.subr.mxu0 0.0
    %3218 = vmatpush1.msra.mxu0 0.0
    %3219 = vmatprep.subr.mxu0 0.0
    %3220 = vmatpush1.msra.mxu0 0.0
    %3221 = vmatprep.subr.mxu0 0.0
    %3222 = vmatpush1.msra.mxu0 0.0
    %3223 = vmatprep.subr.mxu0 0.0
    %3224 = vmatpush1.msra.mxu0 0.0
    %3225 = vmatprep.subr.mxu0 0.0
    %3226 = vmatpush1.msra.mxu0 0.0
    %3227 = vmatprep.subr.mxu0 0.0
    %3228 = vmatpush1.msra.mxu0 0.0
    %3229 = vmatprep.subr.mxu0 0.0
    %3230 = vmatpush1.msra.mxu0 0.0
    %3231 = vmatprep.subr.mxu0 0.0
    %3232 = vmatpush1.msra.mxu0 0.0
    %3233 = vmatprep.subr.mxu0 0.0
    %3234 = vmatpush1.msra.mxu0 0.0
    %3235 = vmatprep.subr.mxu0 0.0
    %3236 = vmatpush1.msra.mxu0 0.0
    %3237 = vmatprep.subr.mxu0 0.0
    %3238 = vmatpush1.msra.mxu0 0.0
    %3239 = vmatprep.subr.mxu0 0.0
    %3240 = vmatpush1.msra.mxu0 0.0
    %3241 = vmatprep.subr.mxu0 0.0
    %3242 = vmatpush1.msra.mxu0 0.0
    %3243 = vmatprep.subr.mxu0 0.0
    %3244 = vmatpush1.msra.mxu0 0.0
    %3245 = vmatprep.subr.mxu0 0.0
    %3246 = vmatpush1.msra.mxu0 0.0
    %3247 = vmatprep.subr.mxu0 0.0
    %3248 = vmatpush1.msra.mxu0 0.0
    %3249 = vmatprep.subr.mxu0 0.0
    %3250 = vmatpush1.msra.mxu0 0.0
    %3251 = vmatprep.subr.mxu0 0.0
    %3252 = vmatpush1.msra.mxu0 0.0
    %3253 = vmatprep.subr.mxu0 0.0
    %3254 = vmatpush1.msra.mxu0 0.0
    %3255 = vmatprep.subr.mxu0 0.0
    %3256 = vmatpush1.msra.mxu0 0.0
    %3257 = vmatprep.mubr.f32.mxu0 0.0
    %3258 = vmatmul.mubr.f32.gmra.mrb[0].mxu0 %v3188
    %v3259 = vpop.f32.mrb[0].mxu0
    %v3260 = vadd.f32 %v3186, %v3259
    %v3261 = vpop.f32.mrb[0].mxu0
    %3262 = vmatprep.mubr.f32.mxu0 0.0
    %3263 = vmatmul.mubr.f32.gmra.mrb[0].mxu0 %v3191
    %v3264 = vpop.f32.mrb[0].mxu0
    %v3265 = vadd.f32 %v3186, %v3264
    %v3266 = vpop.f32.mrb[0].mxu0
    %3267 = vdwg.mxu0
    %vm3268 = vcmask 64512
    %3269 = vst.msk [vmem:[%s3] sm:$0xff] %vm3268, %v3260
    %3270 = vst.msk [vmem:[%s3 + $0x8] sm:$0xff] %vm3268, %v3265
    // Predicated region
    $region18: #{post_processor_forward.1} parent=1 // pred_check
      _
    $region19: #{post_processor_forward.1} parent=1 // pred_check_branch
      %3272 = sbr.rel (0) target = $region21
    $region20: #{post_processor_forward.1} parent=1 // pred_region
      _
    $region21: #{post_processor_forward.1} parent=1 // pred_fallthru
      _
    // Predicated region
    $region22: #{post_processor_forward.1} parent=1 // pred_check
      _
    $region23: #{post_processor_forward.1} parent=1 // pred_check_branch
      %3274 = sbr.rel (0) target = $region25
    $region24: #{post_processor_forward.1} parent=1 // pred_region
      _
    $region25: #{post_processor_forward.1} parent=1 // pred_fallthru
      _
    %3275 = vsyncpa [#allocation8], 1

</llo_original>
